<compile_context>
chip_gen: v7x
topology: tpu7x:2x2x1
jax: 0.10.0
libtpu: 0.0.40
codegen_flags: <defaults>
</compile_context>

<pallas_src>
import functools

import jax
import jax.numpy as jnp
from jax.experimental import pallas as pl
from jax.experimental.pallas import tpu as pltpu

LANE = 128   # TPU lane width
SUB = 8      # TPU sublane count (f32)


# ----------------------------- Pallas kernel -------------------------------

def _npi_kernel(
    # inputs
    x_ref, h0_ref,
    wih0_ref, whh0_ref, bx0_ref, bhn0_ref,
    wih1_ref, whh1_ref, bx1_ref, bhn1_ref,
    wt_ref, bt_ref,
    wa0_ref, ba0_ref,
    wa1_ref, ba1_ref,
    wk1_ref, bk1_ref, wk2_ref, bk2_ref, pkT_ref,
    # outputs
    hn_ref, ter_ref, prog_ref, arg0_ref, arg1_ref,
):
    """Fused NPI forward on (8, *) padded tiles. All operands live in VMEM.

    x_ref   : (Bp, in_dim)          concat(state_encoding, program_embedding)
    h0_ref  : (2, Bp, H)            initial hidden states (zeros if not initial)
    wih*_ref: (in, 3H), whh*: (H, 3H)   transposed GRU weights, gates r|z|n
    bx*_ref : (1, 3H)               [b_ih_r+b_hh_r | b_ih_z+b_hh_z | b_ih_n]
    bhn*_ref: (1, H)                b_hh_n (must stay inside r * (...))
    decoder weights are transposed and zero-padded to 128 output lanes.
    """
    H = h0_ref.shape[2]

    def gru_cell(x, h, wih_ref, whh_ref, bx_ref, bhn_ref):
        gi = jnp.dot(x, wih_ref[...], preferred_element_type=jnp.float32) + bx_ref[...]
        gh = jnp.dot(h, whh_ref[...], preferred_element_type=jnp.float32)
        # H is a multiple of 128 -> all gate slices are lane aligned.
        r = jax.nn.sigmoid(gi[:, 0:H] + gh[:, 0:H])
        z = jax.nn.sigmoid(gi[:, H:2 * H] + gh[:, H:2 * H])
        n = jnp.tanh(gi[:, 2 * H:3 * H] + r * (gh[:, 2 * H:3 * H] + bhn_ref[...]))
        return (1.0 - z) * n + z * h

    # --- NPI_Core: 2-layer GRU, seq_len == 1 (layer-1 input = layer-0 output).
    x = x_ref[...]
    h_l0 = gru_cell(x, h0_ref[0, :, :], wih0_ref, whh0_ref, bx0_ref, bhn0_ref)
    h_l1 = gru_cell(h_l0, h0_ref[1, :, :], wih1_ref, whh1_ref, bx1_ref, bhn1_ref)
    hn_ref[0, :, :] = h_l0
    hn_ref[1, :, :] = h_l1
    out = h_l1  # GRU "out" for seq_len==1 is the last layer's hidden state.

    # --- terminate_decoder: Linear(H, 2) (padded to 128 lanes).
    ter_ref[...] = (
        jnp.dot(out, wt_ref[...], preferred_element_type=jnp.float32) + bt_ref[...]
    )

    # --- Arg_Net: two Linear(H, arg_dim) + ReLU heads (padded to 128 lanes).
    arg0_ref[...] = jnp.maximum(
        jnp.dot(out, wa0_ref[...], preferred_element_type=jnp.float32) + ba0_ref[...], 0.0)
    arg1_ref[...] = jnp.maximum(
        jnp.dot(out, wa1_ref[...], preferred_element_type=jnp.float32) + ba1_ref[...], 0.0)

    # --- Key_Net: Linear -> ReLU -> Linear, then similarity with program_key.
    key = jnp.maximum(
        jnp.dot(out, wk1_ref[...], preferred_element_type=jnp.float32) + bk1_ref[...], 0.0)
    key = jnp.dot(key, wk2_ref[...], preferred_element_type=jnp.float32) + bk2_ref[...]
    prog_ref[...] = jnp.dot(key, pkT_ref[...], preferred_element_type=jnp.float32)


# ------------------------------- wrapper ------------------------------------

def _round_up(n, m):
    return ((n + m - 1) // m) * m


@functools.partial(jax.jit, static_argnames=("initial", "arg_dim", "num_prog"))
def npi_forward(kp, state_encoding, program_embedding, h0, *, initial,
                arg_dim, num_prog):
    """Mirror of NPI.forward downstream of self.core.

    state_encoding    : (B, state_dim)
    program_embedding : (1, B, program_dim)
    h0                : (2, B, H)
    Returns ((ter, prog, (arg0, arg1)), hn) with PyTorch shapes
      ter (1,B,2), prog (B,num_prog)  [== (1,num_prog) for B=1, as in PyTorch],
      arg* (1,B,arg_dim), hn (2,B,H).
    """
    B = state_encoding.shape[0]
    L, _, H = h0.shape
    assert L == 2, "kernel is specialized for npi_core_layer == 2"

    # state_encoding.unsqueeze(0) + cat(dim=2), done once at the boundary.
    x = jnp.concatenate([state_encoding, program_embedding[0]], axis=1)
    x = x.astype(jnp.float32)

    # nn.GRU default hidden state is zeros when h0 is not passed.
    if not initial:
        h0 = jnp.zeros_like(h0)
    h0 = h0.astype(jnp.float32)

    # Pad batch to full sublanes (8).
    Bp = max(SUB, _round_up(B, SUB))
    x_p = jnp.pad(x, ((0, Bp - B), (0, 0)))
    h0_p = jnp.pad(h0, ((0, 0), (0, Bp - B), (0, 0)))

    vmem = pl.BlockSpec(memory_space=pltpu.MemorySpace.VMEM)
    inputs = (
        x_p, h0_p,
        kp["wih0"], kp["whh0"], kp["bx0"], kp["bhn0"],
        kp["wih1"], kp["whh1"], kp["bx1"], kp["bhn1"],
        kp["wt"], kp["bt"],
        kp["wa0"], kp["ba0"],
        kp["wa1"], kp["ba1"],
        kp["wk1"], kp["bk1"], kp["wk2"], kp["bk2"], kp["pkT"],
    )
    out_shape = (
        jax.ShapeDtypeStruct((L, Bp, H), jnp.float32),      # hn
        jax.ShapeDtypeStruct((Bp, LANE), jnp.float32),      # ter (padded lanes)
        jax.ShapeDtypeStruct((Bp, LANE), jnp.float32),      # prog
        jax.ShapeDtypeStruct((Bp, LANE), jnp.float32),      # arg0
        jax.ShapeDtypeStruct((Bp, LANE), jnp.float32),      # arg1
    )

    hn_p, ter_p, prog_p, arg0_p, arg1_p = pl.pallas_call(
        _npi_kernel,
        out_shape=out_shape,
        in_specs=[vmem] * len(inputs),
        out_specs=tuple([vmem] * len(out_shape)),
    )(*inputs)

    hn = hn_p[:, :B, :]                       # (2, B, H)
    ter = ter_p[:B, :2][None]                 # (1, B, 2)
    prog = prog_p[:B, :num_prog]              # (B, num_prog); PyTorch requires B==1
    arg0 = arg0_p[:B, :arg_dim][None]         # (1, B, arg_dim)
    arg1 = arg1_p[:B, :arg_dim][None]
    return (ter, prog, (arg0, arg1)), hn


# ------------------------ parameters (PyTorch layout) ------------------------

def init_canonical_params(key, input_size, hidden_size, num_layers,
                          arg_dim, key_dim, num_prog):
    """PyTorch-layout parameters, uniform(-1/sqrt(fan), 1/sqrt(fan)) init."""
    def unif(k, shape, bound):
        return jax.random.uniform(k, shape, jnp.float32, -bound, bound)

    params = {"gru": []}
    gb = 1.0 / (hidden_size ** 0.5)
    for layer in range(num_layers):
        layer_in = input_size if layer == 0 else hidden_size
        key, k1, k2, k3, k4 = jax.random.split(key, 5)
        params["gru"].append((
            unif(k1, (3 * hidden_size, layer_in), gb),     # weight_ih_l{l}
            unif(k2, (3 * hidden_size, hidden_size), gb),  # weight_hh_l{l}
            unif(k3, (3 * hidden_size,), gb),              # bias_ih_l{l}
            unif(k4, (3 * hidden_size,), gb),              # bias_hh_l{l}
        ))
    lb = 1.0 / (hidden_size ** 0.5)
    kb = 1.0 / (key_dim ** 0.5)
    key, kt1, kt2, ka1, ka2, ka3, ka4, kk1, kk2, kk3, kk4 = jax.random.split(key, 11)
    params["wt"] = unif(kt1, (2, hidden_size), lb);        params["bt"] = unif(kt2, (2,), lb)
    params["wa0"] = unif(ka1, (arg_dim, hidden_size), lb); params["ba0"] = unif(ka2, (arg_dim,), lb)
    params["wa1"] = unif(ka3, (arg_dim, hidden_size), lb); params["ba1"] = unif(ka4, (arg_dim,), lb)
    params["wk1"] = unif(kk1, (key_dim, hidden_size), lb); params["bk1"] = unif(kk2, (key_dim,), lb)
    params["wk2"] = unif(kk3, (key_dim, key_dim), kb);     params["bk2"] = unif(kk4, (key_dim,), kb)
    return params


def prepare_kernel_params(canon, program_key):
    """Transpose, fold biases, and zero-pad decoder heads to 128 output lanes."""
    kp = {}
    for layer, (w_ih, w_hh, b_ih, b_hh) in enumerate(canon["gru"]):
        H = w_hh.shape[1]
        kp[f"wih{layer}"] = w_ih.T                         # (in, 3H)
        kp[f"whh{layer}"] = w_hh.T                         # (H, 3H)
        kp[f"bx{layer}"] = jnp.concatenate(
            [b_ih[:H] + b_hh[:H],                          # r: b_ih_r + b_hh_r
             b_ih[H:2 * H] + b_hh[H:2 * H],                # z: b_ih_z + b_hh_z
             b_ih[2 * H:]])[None, :]                       # n: b_ih_n only
        kp[f"bhn{layer}"] = b_hh[2 * H:][None, :]          # (1, H)

    def pad_linear(W, b):  # W: (out, in) torch layout -> (in, 128) transposed/padded
        out_dim, in_dim = W.shape
        Wp = jnp.zeros((in_dim, LANE), jnp.float32).at[:, :out_dim].set(W.T)
        bp = jnp.zeros((1, LANE), jnp.float32).at[0, :out_dim].set(b)
        return Wp, bp

    kp["wt"], kp["bt"] = pad_linear(canon["wt"], canon["bt"])
    kp["wa0"], kp["ba0"] = pad_linear(canon["wa0"], canon["ba0"])
    kp["wa1"], kp["ba1"] = pad_linear(canon["wa1"], canon["ba1"])
    kp["wk1"], kp["bk1"] = pad_linear(canon["wk1"], canon["bk1"])

    kd = canon["wk2"].shape[0]
    kp["wk2"] = jnp.zeros((LANE, LANE), jnp.float32).at[:kd, :kd].set(canon["wk2"].T)
    kp["bk2"] = jnp.zeros((1, LANE), jnp.float32).at[0, :kd].set(canon["bk2"])

    num_prog, key_dim = program_key.shape
    kp["pkT"] = jnp.zeros((LANE, LANE), jnp.float32).at[:key_dim, :num_prog].set(program_key.T)
    return kp


# --------------------------- pure-JAX reference ------------------------------

def npi_reference(canon, program_key, state_encoding, program_embedding, h0, initial):
    P = jax.lax.Precision.HIGHEST
    x = jnp.concatenate([state_encoding[None, :, :], program_embedding], axis=2)
    h = h0 if initial else jnp.zeros_like(h0)
    H = h.shape[2]
    layer_in = x[0]
    hs = []
    for layer, (w_ih, w_hh, b_ih, b_hh) in enumerate(canon["gru"]):
        gi = jnp.dot(layer_in, w_ih.T, precision=P) + b_ih
        gh = jnp.dot(h[layer], w_hh.T, precision=P) + b_hh
        r = jax.nn.sigmoid(gi[:, :H] + gh[:, :H])
        z = jax.nn.sigmoid(gi[:, H:2 * H] + gh[:, H:2 * H])
        n = jnp.tanh(gi[:, 2 * H:] + r * gh[:, 2 * H:])
        h_new = (1.0 - z) * n + z * h[layer]
        hs.append(h_new)
        layer_in = h_new
    hn = jnp.stack(hs, axis=0)
    out = layer_in[None]                                              # (1, B, H)
    ter = jnp.dot(out, canon["wt"].T, precision=P) + canon["bt"]
    arg0 = jax.nn.relu(jnp.dot(out, canon["wa0"].T, precision=P) + canon["ba0"])
    arg1 = jax.nn.relu(jnp.dot(out, canon["wa1"].T, precision=P) + canon["ba1"])
    hid = out[0]
    k1 = jax.nn.relu(jnp.dot(hid, canon["wk1"].T, precision=P) + canon["bk1"])
    key = jnp.dot(k1, canon["wk2"].T, precision=P) + canon["bk2"]
    prog = jnp.dot(key, program_key.T, precision=P)   # == PyTorch Key_Net for B == 1
    return (ter, prog, (arg0, arg1)), hn


# ----------------------------------- demo ------------------------------------

if __name__ == "__main__":
    # Small shapes consistent with the module. batch=1 because Key_Net's
    # repeat/broadcast in the PyTorch reference only type-checks for batch 1.
    batch = 1
    state_dim = 16
    program_dim = 16
    npi_core_dim = 256     # module default -> gates naturally 128-lane aligned
    npi_core_layer = 2
    arg_dim = 15           # ARGUMENT_DEPTH
    key_dim = 5            # PROGRAM_KEY_SIZE
    num_prog = 6           # PROGRAM_NUM

    root = jax.random.PRNGKey(0)
    k_par, k_pk, k_se, k_pe, k_h0 = jax.random.split(root, 5)

    canon = init_canonical_params(k_par, state_dim + program_dim, npi_core_dim,
                                  npi_core_layer, arg_dim, key_dim, num_prog)
    program_key = jax.random.normal(k_pk, (num_prog, key_dim), jnp.float32)
    kp = prepare_kernel_params(canon, program_key)

    state_encoding = jax.random.normal(k_se, (batch, state_dim), jnp.float32)
    program_embedding = jax.random.normal(k_pe, (1, batch, program_dim), jnp.float32)
    h0 = jax.random.normal(k_h0, (npi_core_layer, batch, npi_core_dim), jnp.float32)

    def close(a, b):
        return bool(jnp.allclose(a, b, atol=2e-3, rtol=2e-3))

    for initial in (True, False):
        (ter, prog, (arg0, arg1)), hn = npi_forward(
            kp, state_encoding, program_embedding, h0,
            initial=initial, arg_dim=arg_dim, num_prog=num_prog)
        jax.block_until_ready((ter, prog, arg0, arg1, hn))

        (ter_r, prog_r, (arg0_r, arg1_r)), hn_r = npi_reference(
            canon, program_key, state_encoding, program_embedding, h0, initial)

        assert ter.shape == (1, batch, 2)
        assert prog.shape == (batch, num_prog)
        assert arg0.shape == (1, batch, arg_dim) and arg1.shape == (1, batch, arg_dim)
        assert hn.shape == (npi_core_layer, batch, npi_core_dim)
        assert close(hn, hn_r), "hn mismatch vs reference"
        assert close(ter, ter_r), "ter mismatch vs reference"
        assert close(prog, prog_r), "prog mismatch vs reference"
        assert close(arg0, arg0_r), "arg0 mismatch vs reference"
        assert close(arg1, arg1_r), "arg1 mismatch vs reference"

    print("KERNEL_OK")
</pallas_src>

<mosaic_0001>
module attributes {stable_mosaic.version = 11 : i64} {
  func.func @_npi_kernel(%arg0: memref<8x32xf32, #tpu.memory_space<vmem>>, %arg1: memref<2x8x256xf32, #tpu.memory_space<vmem>>, %arg2: memref<32x768xf32, #tpu.memory_space<vmem>>, %arg3: memref<256x768xf32, #tpu.memory_space<vmem>>, %arg4: memref<1x768xf32, #tpu.memory_space<vmem>>, %arg5: memref<1x256xf32, #tpu.memory_space<vmem>>, %arg6: memref<256x768xf32, #tpu.memory_space<vmem>>, %arg7: memref<256x768xf32, #tpu.memory_space<vmem>>, %arg8: memref<1x768xf32, #tpu.memory_space<vmem>>, %arg9: memref<1x256xf32, #tpu.memory_space<vmem>>, %arg10: memref<256x128xf32, #tpu.memory_space<vmem>>, %arg11: memref<1x128xf32, #tpu.memory_space<vmem>>, %arg12: memref<256x128xf32, #tpu.memory_space<vmem>>, %arg13: memref<1x128xf32, #tpu.memory_space<vmem>>, %arg14: memref<256x128xf32, #tpu.memory_space<vmem>>, %arg15: memref<1x128xf32, #tpu.memory_space<vmem>>, %arg16: memref<256x128xf32, #tpu.memory_space<vmem>>, %arg17: memref<1x128xf32, #tpu.memory_space<vmem>>, %arg18: memref<128x128xf32, #tpu.memory_space<vmem>>, %arg19: memref<1x128xf32, #tpu.memory_space<vmem>>, %arg20: memref<128x128xf32, #tpu.memory_space<vmem>>, %arg21: memref<2x8x256xf32, #tpu.memory_space<vmem>>, %arg22: memref<8x128xf32, #tpu.memory_space<vmem>>, %arg23: memref<8x128xf32, #tpu.memory_space<vmem>>, %arg24: memref<8x128xf32, #tpu.memory_space<vmem>>, %arg25: memref<8x128xf32, #tpu.memory_space<vmem>>) attributes {dimension_semantics = [], scalar_prefetch = 0 : i64, scratch_operands = 0 : i64, tpu.core_type = #tpu.core_type<tc>} {
    %c0 = arith.constant 0 : index
    %c0_0 = arith.constant 0 : index
    %0 = vector.load %arg0[%c0, %c0_0] : memref<8x32xf32, #tpu.memory_space<vmem>>, vector<8x32xf32>
    %c0_1 = arith.constant 0 : index
    %c0_2 = arith.constant 0 : index
    %c0_3 = arith.constant 0 : index
    %1 = vector.load %arg1[%c0_1, %c0_2, %c0_3] : memref<2x8x256xf32, #tpu.memory_space<vmem>>, vector<1x8x256xf32>
    %2 = vector.shape_cast %1 : vector<1x8x256xf32> to vector<8x256xf32>
    %c0_4 = arith.constant 0 : index
    %c0_5 = arith.constant 0 : index
    %3 = vector.load %arg2[%c0_4, %c0_5] : memref<32x768xf32, #tpu.memory_space<vmem>>, vector<32x768xf32>
    %cst = arith.constant dense<0.000000e+00> : vector<8x768xf32>
    %4 = tpu.matmul %0, %3, %cst {dimension_numbers = #tpu.dot_dimension_numbers<[1], [0], [0], [1], [0, 0, 1, 1], [], []>} : vector<8x32xf32>, vector<32x768xf32>, vector<8x768xf32> -> vector<8x768xf32>
    %c0_6 = arith.constant 0 : index
    %c0_7 = arith.constant 0 : index
    %5 = vector.load %arg4[%c0_6, %c0_7] : memref<1x768xf32, #tpu.memory_space<vmem>>, vector<1x768xf32>
    %6 = vector.broadcast %5 : vector<1x768xf32> to vector<8x768xf32>
    %7 = arith.addf %4, %6 : vector<8x768xf32>
    %c0_8 = arith.constant 0 : index
    %c0_9 = arith.constant 0 : index
    %8 = vector.load %arg3[%c0_8, %c0_9] : memref<256x768xf32, #tpu.memory_space<vmem>>, vector<256x768xf32>
    %cst_10 = arith.constant dense<0.000000e+00> : vector<8x768xf32>
    %9 = tpu.matmul %2, %8, %cst_10 {dimension_numbers = #tpu.dot_dimension_numbers<[1], [0], [0], [1], [0, 0, 1, 1], [], []>} : vector<8x256xf32>, vector<256x768xf32>, vector<8x768xf32> -> vector<8x768xf32>
    %10 = vector.extract_strided_slice %7 {offsets = [0, 0], sizes = [8, 256], strides = [1, 1]} : vector<8x768xf32> to vector<8x256xf32>
    %11 = vector.extract_strided_slice %9 {offsets = [0, 0], sizes = [8, 256], strides = [1, 1]} : vector<8x768xf32> to vector<8x256xf32>
    %12 = arith.addf %10, %11 : vector<8x256xf32>
    %13 = arith.negf %12 : vector<8x256xf32>
    %14 = math.exp %13 : vector<8x256xf32>
    %cst_11 = arith.constant 1.000000e+00 : f32
    %15 = vector.broadcast %cst_11 : f32 to vector<8x256xf32>
    %16 = arith.addf %15, %14 : vector<8x256xf32>
    %17 = arith.divf %15, %16 : vector<8x256xf32>
    %18 = vector.extract_strided_slice %7 {offsets = [0, 256], sizes = [8, 256], strides = [1, 1]} : vector<8x768xf32> to vector<8x256xf32>
    %19 = vector.extract_strided_slice %9 {offsets = [0, 256], sizes = [8, 256], strides = [1, 1]} : vector<8x768xf32> to vector<8x256xf32>
    %20 = arith.addf %18, %19 : vector<8x256xf32>
    %21 = arith.negf %20 : vector<8x256xf32>
    %22 = math.exp %21 : vector<8x256xf32>
    %cst_12 = arith.constant 1.000000e+00 : f32
    %23 = vector.broadcast %cst_12 : f32 to vector<8x256xf32>
    %24 = arith.addf %23, %22 : vector<8x256xf32>
    %25 = arith.divf %23, %24 : vector<8x256xf32>
    %26 = vector.extract_strided_slice %7 {offsets = [0, 512], sizes = [8, 256], strides = [1, 1]} : vector<8x768xf32> to vector<8x256xf32>
    %27 = vector.extract_strided_slice %9 {offsets = [0, 512], sizes = [8, 256], strides = [1, 1]} : vector<8x768xf32> to vector<8x256xf32>
    %c0_13 = arith.constant 0 : index
    %c0_14 = arith.constant 0 : index
    %28 = vector.load %arg5[%c0_13, %c0_14] : memref<1x256xf32, #tpu.memory_space<vmem>>, vector<1x256xf32>
    %29 = vector.broadcast %28 : vector<1x256xf32> to vector<8x256xf32>
    %30 = arith.addf %27, %29 : vector<8x256xf32>
    %31 = arith.mulf %17, %30 : vector<8x256xf32>
    %32 = arith.addf %26, %31 : vector<8x256xf32>
    %33 = math.tanh %32 : vector<8x256xf32>
    %cst_15 = arith.constant 1.000000e+00 : f32
    %34 = vector.broadcast %cst_15 : f32 to vector<8x256xf32>
    %35 = arith.subf %34, %25 : vector<8x256xf32>
    %36 = arith.mulf %35, %33 : vector<8x256xf32>
    %37 = arith.mulf %25, %2 : vector<8x256xf32>
    %38 = arith.addf %36, %37 : vector<8x256xf32>
    %c1 = arith.constant 1 : index
    %c0_16 = arith.constant 0 : index
    %c0_17 = arith.constant 0 : index
    %39 = vector.load %arg1[%c1, %c0_16, %c0_17] : memref<2x8x256xf32, #tpu.memory_space<vmem>>, vector<1x8x256xf32>
    %40 = vector.shape_cast %39 : vector<1x8x256xf32> to vector<8x256xf32>
    %c0_18 = arith.constant 0 : index
    %c0_19 = arith.constant 0 : index
    %41 = vector.load %arg6[%c0_18, %c0_19] : memref<256x768xf32, #tpu.memory_space<vmem>>, vector<256x768xf32>
    %cst_20 = arith.constant dense<0.000000e+00> : vector<8x768xf32>
    %42 = tpu.matmul %38, %41, %cst_20 {dimension_numbers = #tpu.dot_dimension_numbers<[1], [0], [0], [1], [0, 0, 1, 1], [], []>} : vector<8x256xf32>, vector<256x768xf32>, vector<8x768xf32> -> vector<8x768xf32>
    %c0_21 = arith.constant 0 : index
    %c0_22 = arith.constant 0 : index
    %43 = vector.load %arg8[%c0_21, %c0_22] : memref<1x768xf32, #tpu.memory_space<vmem>>, vector<1x768xf32>
    %44 = vector.broadcast %43 : vector<1x768xf32> to vector<8x768xf32>
    %45 = arith.addf %42, %44 : vector<8x768xf32>
    %c0_23 = arith.constant 0 : index
    %c0_24 = arith.constant 0 : index
    %46 = vector.load %arg7[%c0_23, %c0_24] : memref<256x768xf32, #tpu.memory_space<vmem>>, vector<256x768xf32>
    %cst_25 = arith.constant dense<0.000000e+00> : vector<8x768xf32>
    %47 = tpu.matmul %40, %46, %cst_25 {dimension_numbers = #tpu.dot_dimension_numbers<[1], [0], [0], [1], [0, 0, 1, 1], [], []>} : vector<8x256xf32>, vector<256x768xf32>, vector<8x768xf32> -> vector<8x768xf32>
    %48 = vector.extract_strided_slice %45 {offsets = [0, 0], sizes = [8, 256], strides = [1, 1]} : vector<8x768xf32> to vector<8x256xf32>
    %49 = vector.extract_strided_slice %47 {offsets = [0, 0], sizes = [8, 256], strides = [1, 1]} : vector<8x768xf32> to vector<8x256xf32>
    %50 = arith.addf %48, %49 : vector<8x256xf32>
    %51 = arith.negf %50 : vector<8x256xf32>
    %52 = math.exp %51 : vector<8x256xf32>
    %cst_26 = arith.constant 1.000000e+00 : f32
    %53 = vector.broadcast %cst_26 : f32 to vector<8x256xf32>
    %54 = arith.addf %53, %52 : vector<8x256xf32>
    %55 = arith.divf %53, %54 : vector<8x256xf32>
    %56 = vector.extract_strided_slice %45 {offsets = [0, 256], sizes = [8, 256], strides = [1, 1]} : vector<8x768xf32> to vector<8x256xf32>
    %57 = vector.extract_strided_slice %47 {offsets = [0, 256], sizes = [8, 256], strides = [1, 1]} : vector<8x768xf32> to vector<8x256xf32>
    %58 = arith.addf %56, %57 : vector<8x256xf32>
    %59 = arith.negf %58 : vector<8x256xf32>
    %60 = math.exp %59 : vector<8x256xf32>
    %cst_27 = arith.constant 1.000000e+00 : f32
    %61 = vector.broadcast %cst_27 : f32 to vector<8x256xf32>
    %62 = arith.addf %61, %60 : vector<8x256xf32>
    %63 = arith.divf %61, %62 : vector<8x256xf32>
    %64 = vector.extract_strided_slice %45 {offsets = [0, 512], sizes = [8, 256], strides = [1, 1]} : vector<8x768xf32> to vector<8x256xf32>
    %65 = vector.extract_strided_slice %47 {offsets = [0, 512], sizes = [8, 256], strides = [1, 1]} : vector<8x768xf32> to vector<8x256xf32>
    %c0_28 = arith.constant 0 : index
    %c0_29 = arith.constant 0 : index
    %66 = vector.load %arg9[%c0_28, %c0_29] : memref<1x256xf32, #tpu.memory_space<vmem>>, vector<1x256xf32>
    %67 = vector.broadcast %66 : vector<1x256xf32> to vector<8x256xf32>
    %68 = arith.addf %65, %67 : vector<8x256xf32>
    %69 = arith.mulf %55, %68 : vector<8x256xf32>
    %70 = arith.addf %64, %69 : vector<8x256xf32>
    %71 = math.tanh %70 : vector<8x256xf32>
    %cst_30 = arith.constant 1.000000e+00 : f32
    %72 = vector.broadcast %cst_30 : f32 to vector<8x256xf32>
    %73 = arith.subf %72, %63 : vector<8x256xf32>
    %74 = arith.mulf %73, %71 : vector<8x256xf32>
    %75 = arith.mulf %63, %40 : vector<8x256xf32>
    %76 = arith.addf %74, %75 : vector<8x256xf32>
    %c0_31 = arith.constant 0 : index
    %c0_32 = arith.constant 0 : index
    %c0_33 = arith.constant 0 : index
    %77 = vector.load %arg21[%c0_31, %c0_32, %c0_33] : memref<2x8x256xf32, #tpu.memory_space<vmem>>, vector<1x8x256xf32>
    %78 = vector.shape_cast %77 : vector<1x8x256xf32> to vector<8x256xf32>
    %79 = vector.shape_cast %38 : vector<8x256xf32> to vector<1x8x256xf32>
    tpu.vector_store %arg21[%c0_31, %c0_32, %c0_33], %79 {strides = array<i32>} : memref<2x8x256xf32, #tpu.memory_space<vmem>>, vector<1x8x256xf32>,
    %c1_34 = arith.constant 1 : index
    %c0_35 = arith.constant 0 : index
    %c0_36 = arith.constant 0 : index
    %80 = vector.load %arg21[%c1_34, %c0_35, %c0_36] : memref<2x8x256xf32, #tpu.memory_space<vmem>>, vector<1x8x256xf32>
    %81 = vector.shape_cast %80 : vector<1x8x256xf32> to vector<8x256xf32>
    %82 = vector.shape_cast %76 : vector<8x256xf32> to vector<1x8x256xf32>
    tpu.vector_store %arg21[%c1_34, %c0_35, %c0_36], %82 {strides = array<i32>} : memref<2x8x256xf32, #tpu.memory_space<vmem>>, vector<1x8x256xf32>,
    %c0_37 = arith.constant 0 : index
    %c0_38 = arith.constant 0 : index
    %83 = vector.load %arg10[%c0_37, %c0_38] : memref<256x128xf32, #tpu.memory_space<vmem>>, vector<256x128xf32>
    %cst_39 = arith.constant dense<0.000000e+00> : vector<8x128xf32>
    %84 = tpu.matmul %76, %83, %cst_39 {dimension_numbers = #tpu.dot_dimension_numbers<[1], [0], [0], [1], [0, 0, 1, 1], [], []>} : vector<8x256xf32>, vector<256x128xf32>, vector<8x128xf32> -> vector<8x128xf32>
    %c0_40 = arith.constant 0 : index
    %c0_41 = arith.constant 0 : index
    %85 = vector.load %arg11[%c0_40, %c0_41] : memref<1x128xf32, #tpu.memory_space<vmem>>, vector<1x128xf32>
    %86 = vector.broadcast %85 : vector<1x128xf32> to vector<8x128xf32>
    %87 = arith.addf %84, %86 : vector<8x128xf32>
    %c0_42 = arith.constant 0 : index
    %c0_43 = arith.constant 0 : index
    %88 = vector.load %arg22[%c0_42, %c0_43] : memref<8x128xf32, #tpu.memory_space<vmem>>, vector<8x128xf32>
    tpu.vector_store %arg22[%c0_42, %c0_43], %87 {strides = array<i32>} : memref<8x128xf32, #tpu.memory_space<vmem>>, vector<8x128xf32>,
    %c0_44 = arith.constant 0 : index
    %c0_45 = arith.constant 0 : index
    %89 = vector.load %arg12[%c0_44, %c0_45] : memref<256x128xf32, #tpu.memory_space<vmem>>, vector<256x128xf32>
    %cst_46 = arith.constant dense<0.000000e+00> : vector<8x128xf32>
    %90 = tpu.matmul %76, %89, %cst_46 {dimension_numbers = #tpu.dot_dimension_numbers<[1], [0], [0], [1], [0, 0, 1, 1], [], []>} : vector<8x256xf32>, vector<256x128xf32>, vector<8x128xf32> -> vector<8x128xf32>
    %c0_47 = arith.constant 0 : index
    %c0_48 = arith.constant 0 : index
    %91 = vector.load %arg13[%c0_47, %c0_48] : memref<1x128xf32, #tpu.memory_space<vmem>>, vector<1x128xf32>
    %92 = vector.broadcast %91 : vector<1x128xf32> to vector<8x128xf32>
    %93 = arith.addf %90, %92 : vector<8x128xf32>
    %cst_49 = arith.constant 0.000000e+00 : f32
    %94 = vector.broadcast %cst_49 : f32 to vector<8x128xf32>
    %95 = arith.maximumf %93, %94 : vector<8x128xf32>
    %c0_50 = arith.constant 0 : index
    %c0_51 = arith.constant 0 : index
    %96 = vector.load %arg24[%c0_50, %c0_51] : memref<8x128xf32, #tpu.memory_space<vmem>>, vector<8x128xf32>
    tpu.vector_store %arg24[%c0_50, %c0_51], %95 {strides = array<i32>} : memref<8x128xf32, #tpu.memory_space<vmem>>, vector<8x128xf32>,
    %c0_52 = arith.constant 0 : index
    %c0_53 = arith.constant 0 : index
    %97 = vector.load %arg14[%c0_52, %c0_53] : memref<256x128xf32, #tpu.memory_space<vmem>>, vector<256x128xf32>
    %cst_54 = arith.constant dense<0.000000e+00> : vector<8x128xf32>
    %98 = tpu.matmul %76, %97, %cst_54 {dimension_numbers = #tpu.dot_dimension_numbers<[1], [0], [0], [1], [0, 0, 1, 1], [], []>} : vector<8x256xf32>, vector<256x128xf32>, vector<8x128xf32> -> vector<8x128xf32>
    %c0_55 = arith.constant 0 : index
    %c0_56 = arith.constant 0 : index
    %99 = vector.load %arg15[%c0_55, %c0_56] : memref<1x128xf32, #tpu.memory_space<vmem>>, vector<1x128xf32>
    %100 = vector.broadcast %99 : vector<1x128xf32> to vector<8x128xf32>
    %101 = arith.addf %98, %100 : vector<8x128xf32>
    %cst_57 = arith.constant 0.000000e+00 : f32
    %102 = vector.broadcast %cst_57 : f32 to vector<8x128xf32>
    %103 = arith.maximumf %101, %102 : vector<8x128xf32>
    %c0_58 = arith.constant 0 : index
    %c0_59 = arith.constant 0 : index
    %104 = vector.load %arg25[%c0_58, %c0_59] : memref<8x128xf32, #tpu.memory_space<vmem>>, vector<8x128xf32>
    tpu.vector_store %arg25[%c0_58, %c0_59], %103 {strides = array<i32>} : memref<8x128xf32, #tpu.memory_space<vmem>>, vector<8x128xf32>,
    %c0_60 = arith.constant 0 : index
    %c0_61 = arith.constant 0 : index
    %105 = vector.load %arg16[%c0_60, %c0_61] : memref<256x128xf32, #tpu.memory_space<vmem>>, vector<256x128xf32>
    %cst_62 = arith.constant dense<0.000000e+00> : vector<8x128xf32>
    %106 = tpu.matmul %76, %105, %cst_62 {dimension_numbers = #tpu.dot_dimension_numbers<[1], [0], [0], [1], [0, 0, 1, 1], [], []>} : vector<8x256xf32>, vector<256x128xf32>, vector<8x128xf32> -> vector<8x128xf32>
    %c0_63 = arith.constant 0 : index
    %c0_64 = arith.constant 0 : index
    %107 = vector.load %arg17[%c0_63, %c0_64] : memref<1x128xf32, #tpu.memory_space<vmem>>, vector<1x128xf32>
    %108 = vector.broadcast %107 : vector<1x128xf32> to vector<8x128xf32>
    %109 = arith.addf %106, %108 : vector<8x128xf32>
    %cst_65 = arith.constant 0.000000e+00 : f32
    %110 = vector.broadcast %cst_65 : f32 to vector<8x128xf32>
    %111 = arith.maximumf %109, %110 : vector<8x128xf32>
    %c0_66 = arith.constant 0 : index
    %c0_67 = arith.constant 0 : index
    %112 = vector.load %arg18[%c0_66, %c0_67] : memref<128x128xf32, #tpu.memory_space<vmem>>, vector<128x128xf32>
    %cst_68 = arith.constant dense<0.000000e+00> : vector<8x128xf32>
    %113 = tpu.matmul %111, %112, %cst_68 {dimension_numbers = #tpu.dot_dimension_numbers<[1], [0], [0], [1], [0, 0, 1, 1], [], []>} : vector<8x128xf32>, vector<128x128xf32>, vector<8x128xf32> -> vector<8x128xf32>
    %c0_69 = arith.constant 0 : index
    %c0_70 = arith.constant 0 : index
    %114 = vector.load %arg19[%c0_69, %c0_70] : memref<1x128xf32, #tpu.memory_space<vmem>>, vector<1x128xf32>
    %115 = vector.broadcast %114 : vector<1x128xf32> to vector<8x128xf32>
    %116 = arith.addf %113, %115 : vector<8x128xf32>
    %c0_71 = arith.constant 0 : index
    %c0_72 = arith.constant 0 : index
    %117 = vector.load %arg20[%c0_71, %c0_72] : memref<128x128xf32, #tpu.memory_space<vmem>>, vector<128x128xf32>
    %cst_73 = arith.constant dense<0.000000e+00> : vector<8x128xf32>
    %118 = tpu.matmul %116, %117, %cst_73 {dimension_numbers = #tpu.dot_dimension_numbers<[1], [0], [0], [1], [0, 0, 1, 1], [], []>} : vector<8x128xf32>, vector<128x128xf32>, vector<8x128xf32> -> vector<8x128xf32>
    %c0_74 = arith.constant 0 : index
    %c0_75 = arith.constant 0 : index
    %119 = vector.load %arg23[%c0_74, %c0_75] : memref<8x128xf32, #tpu.memory_space<vmem>>, vector<8x128xf32>
    tpu.vector_store %arg23[%c0_74, %c0_75], %118 {strides = array<i32>} : memref<8x128xf32, #tpu.memory_space<vmem>>, vector<8x128xf32>,
    return
  }
}

</mosaic_0001>

<llo_original>
// kernel: npi_forward.1
$region0: #{npi_forward.1}
  #allocation0 [shape = 'u32[]', space=smem, size = 0x4, offset = 0x4, fixed_abs, tag = 'smem constant byte address 0x4 - core index']
  #allocation1 [shape = 'u32[144,128]{1,0:T(1,128)}', space=vmem, size = 0x12000, scoped, tag = 'internal scratch']
  %s0 = inlined_call_operand.vmem [shape: f32[8,32], index: 0, kind: input, shape index: {}]
  %s1 = inlined_call_operand.vmem [shape: f32[2,8,256], index: 1, kind: input, shape index: {}]
  %s2 = inlined_call_operand.hbm [shape: f32[32,768], index: 2, kind: input, shape index: {}]
  %s3 = inlined_call_operand.hbm [shape: f32[256,768], index: 3, kind: input, shape index: {}]
  %s4 = inlined_call_operand.vmem [shape: f32[1,768], index: 4, kind: input, shape index: {}]
  %s5 = inlined_call_operand.vmem [shape: f32[1,256], index: 5, kind: input, shape index: {}]
  %s6 = inlined_call_operand.hbm [shape: f32[256,768], index: 6, kind: input, shape index: {}]
  %s7 = inlined_call_operand.hbm [shape: f32[256,768], index: 7, kind: input, shape index: {}]
  %s8 = inlined_call_operand.vmem [shape: f32[1,768], index: 8, kind: input, shape index: {}]
  %s9 = inlined_call_operand.vmem [shape: f32[1,256], index: 9, kind: input, shape index: {}]
  %s10 = inlined_call_operand.hbm [shape: f32[256,128], index: 10, kind: input, shape index: {}]
  %s11 = inlined_call_operand.vmem [shape: f32[1,128], index: 11, kind: input, shape index: {}]
  %s12 = inlined_call_operand.hbm [shape: f32[256,128], index: 12, kind: input, shape index: {}]
  %s13 = inlined_call_operand.vmem [shape: f32[1,128], index: 13, kind: input, shape index: {}]
  %s14 = inlined_call_operand.hbm [shape: f32[256,128], index: 14, kind: input, shape index: {}]
  %s15 = inlined_call_operand.vmem [shape: f32[1,128], index: 15, kind: input, shape index: {}]
  %s16 = inlined_call_operand.hbm [shape: f32[256,128], index: 16, kind: input, shape index: {}]
  %s17 = inlined_call_operand.vmem [shape: f32[1,128], index: 17, kind: input, shape index: {}]
  %s18 = inlined_call_operand.hbm [shape: f32[128,128], index: 18, kind: input, shape index: {}]
  %s19 = inlined_call_operand.vmem [shape: f32[1,128], index: 19, kind: input, shape index: {}]
  %s20 = inlined_call_operand.hbm [shape: f32[128,128], index: 20, kind: input, shape index: {}]
  %s21 = inlined_call_operand.vmem [shape: f32[2,8,256], index: 21, kind: output, shape index: {0}]
  %s22 = inlined_call_operand.vmem [shape: f32[8,128], index: 22, kind: output, shape index: {1}]
  %s23 = inlined_call_operand.vmem [shape: f32[8,128], index: 23, kind: output, shape index: {2}]
  %s24 = inlined_call_operand.vmem [shape: f32[8,128], index: 24, kind: output, shape index: {3}]
  %s25 = inlined_call_operand.vmem [shape: f32[8,128], index: 25, kind: output, shape index: {4}]
  %26 = xla_tuple %s21, %s22, %s23, %s24, %s25
  %s27 = sld [smem:[#allocation0]]
  $region166: #{npi_forward.1} parent=0
    _
  %s29 = ssub.s32 1, %s27
  %s30 = scalar_select 0, %s29, %s27
  $region1: #{npi_forward.1} parent=0
    #allocation2 [shape = 'u8[98304]{0}', space=vmem, size = 0x18000, scoped, tag = 'input window, operand 2, single buffered']
    #allocation3 [shape = 's32[1]{0}', space=sflag, size = 0x4, scoped, tag = 'scoped memory for npi_forward.1']
    #allocation4 [shape = 'u8[786432]{0}', space=vmem, size = 0xc0000, scoped, tag = 'input window, operand 3, single buffered']
    #allocation5 [shape = 's32[1]{0}', space=sflag, size = 0x4, scoped, tag = 'scoped memory for npi_forward.1']
    #allocation6 [shape = 'u8[786432]{0}', space=vmem, size = 0xc0000, scoped, tag = 'input window, operand 6, single buffered']
    #allocation7 [shape = 'u8[786432]{0}', space=vmem, size = 0xc0000, scoped, tag = 'input window, operand 7, single buffered']
    #allocation8 [shape = 's32[1]{0}', space=sflag, size = 0x4, scoped, tag = 'scoped memory for npi_forward.1']
    #allocation9 [shape = 'u8[131072]{0}', space=vmem, size = 0x20000, scoped, tag = 'input window, operand 10, single buffered']
    #allocation10 [shape = 'u8[131072]{0}', space=vmem, size = 0x20000, scoped, tag = 'input window, operand 12, single buffered']
    #allocation11 [shape = 's32[1]{0}', space=sflag, size = 0x4, scoped, tag = 'scoped memory for npi_forward.1']
    #allocation12 [shape = 'u8[131072]{0}', space=vmem, size = 0x20000, scoped, tag = 'input window, operand 14, single buffered']
    #allocation13 [shape = 'u8[131072]{0}', space=vmem, size = 0x20000, scoped, tag = 'input window, operand 16, single buffered']
    #allocation14 [shape = 's32[1]{0}', space=sflag, size = 0x4, scoped, tag = 'scoped memory for npi_forward.1']
    #allocation15 [shape = 'u8[65536]{0}', space=vmem, size = 0x10000, scoped, tag = 'input window, operand 18, single buffered']
    #allocation16 [shape = 'u8[65536]{0}', space=vmem, size = 0x10000, scoped, tag = 'input window, operand 20, single buffered']
    #allocation17 [shape = 's32[1]{0}', space=sflag, size = 0x4, scoped, tag = 'scoped memory for npi_forward.1']
    %31 = vsyncpa [#allocation3], 0
    %32 = vsyncpa [#allocation5], 0
    %33 = vsyncpa [#allocation8], 0
    %34 = vsyncpa [#allocation11], 0
    %35 = vsyncpa [#allocation14], 0
    %36 = vsyncpa [#allocation17], 0
    // Predicated region
    $region2: #{npi_forward.1} parent=1 // pred_check
      _
    $region3: #{npi_forward.1} parent=1 // pred_check_branch
      %38 = sbr.rel (0) target = $region5
    $region4: #{npi_forward.1} parent=1 // pred_region
      _
    $region5: #{npi_forward.1} parent=1 // pred_fallthru
      _
    // Predicated region
    $region6: #{npi_forward.1} parent=1 // pred_check
      _
    $region7: #{npi_forward.1} parent=1 // pred_check_branch
      %40 = sbr.rel (0) target = $region9
    $region8: #{npi_forward.1} parent=1 // pred_region
      _
    $region9: #{npi_forward.1} parent=1 // pred_fallthru
      _
    // Predicated region
    $region10: #{npi_forward.1} parent=1 // pred_check
      _
    $region11: #{npi_forward.1} parent=1 // pred_check_branch
      %42 = sbr.rel (0) target = $region13
    $region12: #{npi_forward.1} parent=1 // pred_region
      %s44 = ssub.s32 3072, 3072
      %45 = vsyncadd [#allocation3], %s44
      %s46 = sshll.u32 [#allocation2], 4
      %s47 = int_to_ptr.vmem [resolvable:$true] %s46
      %52 = dma.hbm_to_vmem [thread:$0]  %s2, 3072, %s47, [#allocation3], 768, 768, 48
    $region13: #{npi_forward.1} parent=1 // pred_fallthru
      _
    // Predicated region
    $region14: #{npi_forward.1} parent=1 // pred_check
      _
    $region15: #{npi_forward.1} parent=1 // pred_check_branch
      %54 = sbr.rel (0) target = $region17
    $region16: #{npi_forward.1} parent=1 // pred_region
      %s56 = ssub.s32 24576, 24576
      %57 = vsyncadd [#allocation5], %s56
      %s58 = sshll.u32 [#allocation4], 4
      %s59 = int_to_ptr.vmem [resolvable:$true] %s58
      %64 = dma.hbm_to_vmem [thread:$0]  %s3, 24576, %s59, [#allocation5], 768, 768, 48
    $region17: #{npi_forward.1} parent=1 // pred_fallthru
      _
    // Predicated region
    $region18: #{npi_forward.1} parent=1 // pred_check
      _
    $region19: #{npi_forward.1} parent=1 // pred_check_branch
      %66 = sbr.rel (0) target = $region21
    $region20: #{npi_forward.1} parent=1 // pred_region
      _
    $region21: #{npi_forward.1} parent=1 // pred_fallthru
      _
    // Predicated region
    $region22: #{npi_forward.1} parent=1 // pred_check
      _
    $region23: #{npi_forward.1} parent=1 // pred_check_branch
      %68 = sbr.rel (0) target = $region25
    $region24: #{npi_forward.1} parent=1 // pred_region
      _
    $region25: #{npi_forward.1} parent=1 // pred_fallthru
      _
    // Predicated region
    $region26: #{npi_forward.1} parent=1 // pred_check
      _
    $region27: #{npi_forward.1} parent=1 // pred_check_branch
      %70 = sbr.rel (0) target = $region29
    $region28: #{npi_forward.1} parent=1 // pred_region
      %s72 = ssub.s32 24576, 24576
      %73 = vsyncadd [#allocation5], %s72
      %s74 = sshll.u32 [#allocation6], 4
      %s75 = int_to_ptr.vmem [resolvable:$true] %s74
      %80 = dma.hbm_to_vmem [thread:$0]  %s6, 24576, %s75, [#allocation5], 768, 768, 48
    $region29: #{npi_forward.1} parent=1 // pred_fallthru
      _
    // Predicated region
    $region30: #{npi_forward.1} parent=1 // pred_check
      _
    $region31: #{npi_forward.1} parent=1 // pred_check_branch
      %82 = sbr.rel (0) target = $region33
    $region32: #{npi_forward.1} parent=1 // pred_region
      %s84 = ssub.s32 24576, 24576
      %85 = vsyncadd [#allocation8], %s84
      %s86 = sshll.u32 [#allocation7], 4
      %s87 = int_to_ptr.vmem [resolvable:$true] %s86
      %92 = dma.hbm_to_vmem [thread:$0]  %s7, 24576, %s87, [#allocation8], 768, 768, 48
    $region33: #{npi_forward.1} parent=1 // pred_fallthru
      _
    // Predicated region
    $region34: #{npi_forward.1} parent=1 // pred_check
      _
    $region35: #{npi_forward.1} parent=1 // pred_check_branch
      %94 = sbr.rel (0) target = $region37
    $region36: #{npi_forward.1} parent=1 // pred_region
      _
    $region37: #{npi_forward.1} parent=1 // pred_fallthru
      _
    // Predicated region
    $region38: #{npi_forward.1} parent=1 // pred_check
      _
    $region39: #{npi_forward.1} parent=1 // pred_check_branch
      %96 = sbr.rel (0) target = $region41
    $region40: #{npi_forward.1} parent=1 // pred_region
      _
    $region41: #{npi_forward.1} parent=1 // pred_fallthru
      _
    // Predicated region
    $region42: #{npi_forward.1} parent=1 // pred_check
      _
    $region43: #{npi_forward.1} parent=1 // pred_check_branch
      %98 = sbr.rel (0) target = $region45
    $region44: #{npi_forward.1} parent=1 // pred_region
      %s100 = ssub.s32 4096, 4096
      %101 = vsyncadd [#allocation8], %s100
      %s102 = sshll.u32 [#allocation9], 4
      %s103 = int_to_ptr.vmem [resolvable:$true] %s102
      %108 = dma.hbm_to_vmem [thread:$0]  %s10, 4096, %s103, [#allocation8], 128, 128, 8
    $region45: #{npi_forward.1} parent=1 // pred_fallthru
      _
    // Predicated region
    $region46: #{npi_forward.1} parent=1 // pred_check
      _
    $region47: #{npi_forward.1} parent=1 // pred_check_branch
      %110 = sbr.rel (0) target = $region49
    $region48: #{npi_forward.1} parent=1 // pred_region
      _
    $region49: #{npi_forward.1} parent=1 // pred_fallthru
      _
    // Predicated region
    $region50: #{npi_forward.1} parent=1 // pred_check
      _
    $region51: #{npi_forward.1} parent=1 // pred_check_branch
      %112 = sbr.rel (0) target = $region53
    $region52: #{npi_forward.1} parent=1 // pred_region
      %s114 = ssub.s32 4096, 4096
      %115 = vsyncadd [#allocation11], %s114
      %s116 = sshll.u32 [#allocation10], 4
      %s117 = int_to_ptr.vmem [resolvable:$true] %s116
      %122 = dma.hbm_to_vmem [thread:$0]  %s12, 4096, %s117, [#allocation11], 128, 128, 8
    $region53: #{npi_forward.1} parent=1 // pred_fallthru
      _
    // Predicated region
    $region54: #{npi_forward.1} parent=1 // pred_check
      _
    $region55: #{npi_forward.1} parent=1 // pred_check_branch
      %124 = sbr.rel (0) target = $region57
    $region56: #{npi_forward.1} parent=1 // pred_region
      _
    $region57: #{npi_forward.1} parent=1 // pred_fallthru
      _
    // Predicated region
    $region58: #{npi_forward.1} parent=1 // pred_check
      _
    $region59: #{npi_forward.1} parent=1 // pred_check_branch
      %126 = sbr.rel (0) target = $region61
    $region60: #{npi_forward.1} parent=1 // pred_region
      %s128 = ssub.s32 4096, 4096
      %129 = vsyncadd [#allocation11], %s128
      %s130 = sshll.u32 [#allocation12], 4
      %s131 = int_to_ptr.vmem [resolvable:$true] %s130
      %136 = dma.hbm_to_vmem [thread:$0]  %s14, 4096, %s131, [#allocation11], 128, 128, 8
    $region61: #{npi_forward.1} parent=1 // pred_fallthru
      _
    // Predicated region
    $region62: #{npi_forward.1} parent=1 // pred_check
      _
    $region63: #{npi_forward.1} parent=1 // pred_check_branch
      %138 = sbr.rel (0) target = $region65
    $region64: #{npi_forward.1} parent=1 // pred_region
      _
    $region65: #{npi_forward.1} parent=1 // pred_fallthru
      _
    // Predicated region
    $region66: #{npi_forward.1} parent=1 // pred_check
      _
    $region67: #{npi_forward.1} parent=1 // pred_check_branch
      %140 = sbr.rel (0) target = $region69
    $region68: #{npi_forward.1} parent=1 // pred_region
      %s142 = ssub.s32 4096, 4096
      %143 = vsyncadd [#allocation14], %s142
      %s144 = sshll.u32 [#allocation13], 4
      %s145 = int_to_ptr.vmem [resolvable:$true] %s144
      %150 = dma.hbm_to_vmem [thread:$0]  %s16, 4096, %s145, [#allocation14], 128, 128, 8
    $region69: #{npi_forward.1} parent=1 // pred_fallthru
      _
    // Predicated region
    $region70: #{npi_forward.1} parent=1 // pred_check
      _
    $region71: #{npi_forward.1} parent=1 // pred_check_branch
      %152 = sbr.rel (0) target = $region73
    $region72: #{npi_forward.1} parent=1 // pred_region
      _
    $region73: #{npi_forward.1} parent=1 // pred_fallthru
      _
    // Predicated region
    $region74: #{npi_forward.1} parent=1 // pred_check
      _
    $region75: #{npi_forward.1} parent=1 // pred_check_branch
      %154 = sbr.rel (0) target = $region77
    $region76: #{npi_forward.1} parent=1 // pred_region
      %s156 = ssub.s32 2048, 2048
      %157 = vsyncadd [#allocation14], %s156
      %s158 = sshll.u32 [#allocation15], 4
      %s159 = int_to_ptr.vmem [resolvable:$true] %s158
      %164 = dma.hbm_to_vmem [thread:$0]  %s18, 2048, %s159, [#allocation14], 128, 128, 8
    $region77: #{npi_forward.1} parent=1 // pred_fallthru
      _
    // Predicated region
    $region78: #{npi_forward.1} parent=1 // pred_check
      _
    $region79: #{npi_forward.1} parent=1 // pred_check_branch
      %166 = sbr.rel (0) target = $region81
    $region80: #{npi_forward.1} parent=1 // pred_region
      _
    $region81: #{npi_forward.1} parent=1 // pred_fallthru
      _
    // Predicated region
    $region82: #{npi_forward.1} parent=1 // pred_check
      _
    $region83: #{npi_forward.1} parent=1 // pred_check_branch
      %168 = sbr.rel (0) target = $region85
    $region84: #{npi_forward.1} parent=1 // pred_region
      %s170 = ssub.s32 2048, 2048
      %171 = vsyncadd [#allocation17], %s170
      %s172 = sshll.u32 [#allocation16], 4
      %s173 = int_to_ptr.vmem [resolvable:$true] %s172
      %178 = dma.hbm_to_vmem [thread:$0]  %s20, 2048, %s173, [#allocation17], 128, 128, 8
    $region85: #{npi_forward.1} parent=1 // pred_fallthru
      _
    // Predicated region
    $region86: #{npi_forward.1} parent=1 // pred_check
      _
    $region87: #{npi_forward.1} parent=1 // pred_check_branch
      %180 = sbr.rel (0) target = $region89
    $region88: #{npi_forward.1} parent=1 // pred_region
      %181 = dma.done [#allocation3], 3072
    $region89: #{npi_forward.1} parent=1 // pred_fallthru
      _
    // Predicated region
    $region90: #{npi_forward.1} parent=1 // pred_check
      _
    $region91: #{npi_forward.1} parent=1 // pred_check_branch
      %183 = sbr.rel (0) target = $region93
    $region92: #{npi_forward.1} parent=1 // pred_region
      %184 = dma.done [#allocation5], 24576
    $region93: #{npi_forward.1} parent=1 // pred_fallthru
      _
    // Predicated region
    $region94: #{npi_forward.1} parent=1 // pred_check
      _
    $region95: #{npi_forward.1} parent=1 // pred_check_branch
      %186 = sbr.rel (0) target = $region97
    $region96: #{npi_forward.1} parent=1 // pred_region
      %187 = dma.done [#allocation5], 24576
    $region97: #{npi_forward.1} parent=1 // pred_fallthru
      _
    // Predicated region
    $region98: #{npi_forward.1} parent=1 // pred_check
      _
    $region99: #{npi_forward.1} parent=1 // pred_check_branch
      %189 = sbr.rel (0) target = $region101
    $region100: #{npi_forward.1} parent=1 // pred_region
      %190 = dma.done [#allocation8], 24576
    $region101: #{npi_forward.1} parent=1 // pred_fallthru
      _
    // Predicated region
    $region102: #{npi_forward.1} parent=1 // pred_check
      _
    $region103: #{npi_forward.1} parent=1 // pred_check_branch
      %192 = sbr.rel (0) target = $region105
    $region104: #{npi_forward.1} parent=1 // pred_region
      %193 = dma.done [#allocation8], 4096
    $region105: #{npi_forward.1} parent=1 // pred_fallthru
      _
    // Predicated region
    $region106: #{npi_forward.1} parent=1 // pred_check
      _
    $region107: #{npi_forward.1} parent=1 // pred_check_branch
      %195 = sbr.rel (0) target = $region109
    $region108: #{npi_forward.1} parent=1 // pred_region
      %196 = dma.done [#allocation11], 4096
    $region109: #{npi_forward.1} parent=1 // pred_fallthru
      _
    // Predicated region
    $region110: #{npi_forward.1} parent=1 // pred_check
      _
    $region111: #{npi_forward.1} parent=1 // pred_check_branch
      %198 = sbr.rel (0) target = $region113
    $region112: #{npi_forward.1} parent=1 // pred_region
      %199 = dma.done [#allocation11], 4096
    $region113: #{npi_forward.1} parent=1 // pred_fallthru
      _
    // Predicated region
    $region114: #{npi_forward.1} parent=1 // pred_check
      _
    $region115: #{npi_forward.1} parent=1 // pred_check_branch
      %201 = sbr.rel (0) target = $region117
    $region116: #{npi_forward.1} parent=1 // pred_region
      %202 = dma.done [#allocation14], 4096
    $region117: #{npi_forward.1} parent=1 // pred_fallthru
      _
    // Predicated region
    $region118: #{npi_forward.1} parent=1 // pred_check
      _
    $region119: #{npi_forward.1} parent=1 // pred_check_branch
      %204 = sbr.rel (0) target = $region121
    $region120: #{npi_forward.1} parent=1 // pred_region
      %205 = dma.done [#allocation14], 2048
    $region121: #{npi_forward.1} parent=1 // pred_fallthru
      _
    // Predicated region
    $region122: #{npi_forward.1} parent=1 // pred_check
      _
    $region123: #{npi_forward.1} parent=1 // pred_check_branch
      %207 = sbr.rel (0) target = $region125
    $region124: #{npi_forward.1} parent=1 // pred_region
      %208 = dma.done [#allocation17], 2048
    $region125: #{npi_forward.1} parent=1 // pred_fallthru
      _
    %v209 = vld [vmem:[%s0] sm:$0xff]
    %v210 = vld [vmem:[%s1] sm:$0xff]
    %v211 = vld [vmem:[%s1 + $0x8] sm:$0xff]
    %v212 = vld [vmem:[#allocation2] sm:$0xff]
    %v213 = vld [vmem:[#allocation2 + $0x8] sm:$0xff]
    %v214 = vld [vmem:[#allocation2 + $0x10] sm:$0xff]
    %v215 = vld [vmem:[#allocation2 + $0x18] sm:$0xff]
    %v216 = vld [vmem:[#allocation2 + $0x20] sm:$0xff]
    %v217 = vld [vmem:[#allocation2 + $0x28] sm:$0xff]
    %v218 = vld [vmem:[#allocation2 + $0x30] sm:$0xff]
    %v219 = vld [vmem:[#allocation2 + $0x38] sm:$0xff]
    %v220 = vld [vmem:[#allocation2 + $0x40] sm:$0xff]
    %v221 = vld [vmem:[#allocation2 + $0x48] sm:$0xff]
    %v222 = vld [vmem:[#allocation2 + $0x50] sm:$0xff]
    %v223 = vld [vmem:[#allocation2 + $0x58] sm:$0xff]
    %v224 = vld [vmem:[#allocation2 + $0x60] sm:$0xff]
    %v225 = vld [vmem:[#allocation2 + $0x68] sm:$0xff]
    %v226 = vld [vmem:[#allocation2 + $0x70] sm:$0xff]
    %v227 = vld [vmem:[#allocation2 + $0x78] sm:$0xff]
    %v228 = vld [vmem:[#allocation2 + $0x80] sm:$0xff]
    %v229 = vld [vmem:[#allocation2 + $0x88] sm:$0xff]
    %v230 = vld [vmem:[#allocation2 + $0x90] sm:$0xff]
    %v231 = vld [vmem:[#allocation2 + $0x98] sm:$0xff]
    %v232 = vld [vmem:[#allocation2 + $0xa0] sm:$0xff]
    %v233 = vld [vmem:[#allocation2 + $0xa8] sm:$0xff]
    %v234 = vld [vmem:[#allocation2 + $0xb0] sm:$0xff]
    %v235 = vld [vmem:[#allocation2 + $0xb8] sm:$0xff]
    %v236 = vld [vmem:[%s4] sm:$0x3f]
    %v238 = vlaneseq
    %v239 = vshrl.u32 %v238, 7
    %v240 = vsub.s32 0, %v239
    %v241 = vrot.slane %v236, %v240
    %v242 = vlaneseq
    %v243 = vshrl.u32 %v242, 7
    %v244 = vsub.s32 1, %v243
    %v245 = vrot.slane %v236, %v244
    %v246 = vlaneseq
    %v247 = vshrl.u32 %v246, 7
    %v248 = vsub.s32 2, %v247
    %v249 = vrot.slane %v236, %v248
    %v250 = vlaneseq
    %v251 = vshrl.u32 %v250, 7
    %v252 = vsub.s32 3, %v251
    %v253 = vrot.slane %v236, %v252
    %v254 = vlaneseq
    %v255 = vshrl.u32 %v254, 7
    %v256 = vsub.s32 4, %v255
    %v257 = vrot.slane %v236, %v256
    %v258 = vlaneseq
    %v259 = vshrl.u32 %v258, 7
    %v260 = vsub.s32 5, %v259
    %v261 = vrot.slane %v236, %v260
    %vm268 = vcmask 261120
    %v270 = vsel %vm268, %v209, 0
    %272 = vmatprep.subr.mxu0 %v213
    %273 = vmatpush1.msra.mxu0 %v212
    %274 = vmatprep.subr.mxu0 %v219
    %275 = vmatpush1.msra.mxu0 %v218
    %276 = vmatprep.subr.mxu0 %v225
    %277 = vmatpush1.msra.mxu0 %v224
    %278 = vmatprep.subr.mxu0 %v231
    %279 = vmatpush1.msra.mxu0 %v230
    %280 = vmatprep.subr.mxu0 0.0
    %281 = vmatpush1.msra.mxu0 0.0
    %282 = vmatprep.subr.mxu0 0.0
    %283 = vmatpush1.msra.mxu0 0.0
    %284 = vmatprep.subr.mxu0 0.0
    %285 = vmatpush1.msra.mxu0 0.0
    %286 = vmatprep.subr.mxu0 0.0
    %287 = vmatpush1.msra.mxu0 0.0
    %288 = vmatprep.subr.mxu0 0.0
    %289 = vmatpush1.msra.mxu0 0.0
    %290 = vmatprep.subr.mxu0 0.0
    %291 = vmatpush1.msra.mxu0 0.0
    %292 = vmatprep.subr.mxu0 0.0
    %293 = vmatpush1.msra.mxu0 0.0
    %294 = vmatprep.subr.mxu0 0.0
    %295 = vmatpush1.msra.mxu0 0.0
    %296 = vmatprep.subr.mxu0 0.0
    %297 = vmatpush1.msra.mxu0 0.0
    %298 = vmatprep.subr.mxu0 0.0
    %299 = vmatpush1.msra.mxu0 0.0
    %300 = vmatprep.subr.mxu0 0.0
    %301 = vmatpush1.msra.mxu0 0.0
    %302 = vmatprep.subr.mxu0 0.0
    %303 = vmatpush1.msra.mxu0 0.0
    %304 = vmatprep.subr.mxu0 0.0
    %305 = vmatpush1.msra.mxu0 0.0
    %306 = vmatprep.subr.mxu0 0.0
    %307 = vmatpush1.msra.mxu0 0.0
    %308 = vmatprep.subr.mxu0 0.0
    %309 = vmatpush1.msra.mxu0 0.0
    %310 = vmatprep.subr.mxu0 0.0
    %311 = vmatpush1.msra.mxu0 0.0
    %312 = vmatprep.subr.mxu0 0.0
    %313 = vmatpush1.msra.mxu0 0.0
    %314 = vmatprep.subr.mxu0 0.0
    %315 = vmatpush1.msra.mxu0 0.0
    %316 = vmatprep.subr.mxu0 0.0
    %317 = vmatpush1.msra.mxu0 0.0
    %318 = vmatprep.subr.mxu0 0.0
    %319 = vmatpush1.msra.mxu0 0.0
    %320 = vmatprep.subr.mxu0 0.0
    %321 = vmatpush1.msra.mxu0 0.0
    %322 = vmatprep.subr.mxu0 0.0
    %323 = vmatpush1.msra.mxu0 0.0
    %324 = vmatprep.subr.mxu0 0.0
    %325 = vmatpush1.msra.mxu0 0.0
    %326 = vmatprep.subr.mxu0 0.0
    %327 = vmatpush1.msra.mxu0 0.0
    %328 = vmatprep.subr.mxu0 0.0
    %329 = vmatpush1.msra.mxu0 0.0
    %330 = vmatprep.subr.mxu0 0.0
    %331 = vmatpush1.msra.mxu0 0.0
    %332 = vmatprep.subr.mxu0 0.0
    %333 = vmatpush1.msra.mxu0 0.0
    %334 = vmatprep.subr.mxu0 0.0
    %335 = vmatpush1.msra.mxu0 0.0
    %336 = vmatprep.mubr.f32.mxu0 0.0
    %337 = vmatmul.mubr.f32.gmra.mrb[0].mxu0 %v270
    %v338 = vpop.f32.mrb[0].mxu0
    %v339 = vadd.f32 %v241, %v338
    %v340 = vpop.f32.mrb[0].mxu0
    %v341 = vadd.f32 %v245, %v340
    %342 = vdwg.mxu0
    %343 = vmatprep.subr.mxu0 %v215
    %344 = vmatpush1.msra.mxu0 %v214
    %345 = vmatprep.subr.mxu0 %v221
    %346 = vmatpush1.msra.mxu0 %v220
    %347 = vmatprep.subr.mxu0 %v227
    %348 = vmatpush1.msra.mxu0 %v226
    %349 = vmatprep.subr.mxu0 %v233
    %350 = vmatpush1.msra.mxu0 %v232
    %351 = vmatprep.subr.mxu0 0.0
    %352 = vmatpush1.msra.mxu0 0.0
    %353 = vmatprep.subr.mxu0 0.0
    %354 = vmatpush1.msra.mxu0 0.0
    %355 = vmatprep.subr.mxu0 0.0
    %356 = vmatpush1.msra.mxu0 0.0
    %357 = vmatprep.subr.mxu0 0.0
    %358 = vmatpush1.msra.mxu0 0.0
    %359 = vmatprep.subr.mxu0 0.0
    %360 = vmatpush1.msra.mxu0 0.0
    %361 = vmatprep.subr.mxu0 0.0
    %362 = vmatpush1.msra.mxu0 0.0
    %363 = vmatprep.subr.mxu0 0.0
    %364 = vmatpush1.msra.mxu0 0.0
    %365 = vmatprep.subr.mxu0 0.0
    %366 = vmatpush1.msra.mxu0 0.0
    %367 = vmatprep.subr.mxu0 0.0
    %368 = vmatpush1.msra.mxu0 0.0
    %369 = vmatprep.subr.mxu0 0.0
    %370 = vmatpush1.msra.mxu0 0.0
    %371 = vmatprep.subr.mxu0 0.0
    %372 = vmatpush1.msra.mxu0 0.0
    %373 = vmatprep.subr.mxu0 0.0
    %374 = vmatpush1.msra.mxu0 0.0
    %375 = vmatprep.subr.mxu0 0.0
    %376 = vmatpush1.msra.mxu0 0.0
    %377 = vmatprep.subr.mxu0 0.0
    %378 = vmatpush1.msra.mxu0 0.0
    %379 = vmatprep.subr.mxu0 0.0
    %380 = vmatpush1.msra.mxu0 0.0
    %381 = vmatprep.subr.mxu0 0.0
    %382 = vmatpush1.msra.mxu0 0.0
    %383 = vmatprep.subr.mxu0 0.0
    %384 = vmatpush1.msra.mxu0 0.0
    %385 = vmatprep.subr.mxu0 0.0
    %386 = vmatpush1.msra.mxu0 0.0
    %387 = vmatprep.subr.mxu0 0.0
    %388 = vmatpush1.msra.mxu0 0.0
    %389 = vmatprep.subr.mxu0 0.0
    %390 = vmatpush1.msra.mxu0 0.0
    %391 = vmatprep.subr.mxu0 0.0
    %392 = vmatpush1.msra.mxu0 0.0
    %393 = vmatprep.subr.mxu0 0.0
    %394 = vmatpush1.msra.mxu0 0.0
    %395 = vmatprep.subr.mxu0 0.0
    %396 = vmatpush1.msra.mxu0 0.0
    %397 = vmatprep.subr.mxu0 0.0
    %398 = vmatpush1.msra.mxu0 0.0
    %399 = vmatprep.subr.mxu0 0.0
    %400 = vmatpush1.msra.mxu0 0.0
    %401 = vmatprep.subr.mxu0 0.0
    %402 = vmatpush1.msra.mxu0 0.0
    %403 = vmatprep.subr.mxu0 0.0
    %404 = vmatpush1.msra.mxu0 0.0
    %405 = vmatprep.subr.mxu0 0.0
    %406 = vmatpush1.msra.mxu0 0.0
    %407 = vmatprep.mubr.f32.mxu0 0.0
    %408 = vmatmul.mubr.f32.gmra.mrb[0].mxu0 %v270
    %v409 = vpop.f32.mrb[0].mxu0
    %v410 = vadd.f32 %v249, %v409
    %v411 = vpop.f32.mrb[0].mxu0
    %v412 = vadd.f32 %v253, %v411
    %413 = vdwg.mxu0
    %414 = vmatprep.subr.mxu0 %v217
    %415 = vmatpush1.msra.mxu0 %v216
    %416 = vmatprep.subr.mxu0 %v223
    %417 = vmatpush1.msra.mxu0 %v222
    %418 = vmatprep.subr.mxu0 %v229
    %419 = vmatpush1.msra.mxu0 %v228
    %420 = vmatprep.subr.mxu0 %v235
    %421 = vmatpush1.msra.mxu0 %v234
    %422 = vmatprep.subr.mxu0 0.0
    %423 = vmatpush1.msra.mxu0 0.0
    %424 = vmatprep.subr.mxu0 0.0
    %425 = vmatpush1.msra.mxu0 0.0
    %426 = vmatprep.subr.mxu0 0.0
    %427 = vmatpush1.msra.mxu0 0.0
    %428 = vmatprep.subr.mxu0 0.0
    %429 = vmatpush1.msra.mxu0 0.0
    %430 = vmatprep.subr.mxu0 0.0
    %431 = vmatpush1.msra.mxu0 0.0
    %432 = vmatprep.subr.mxu0 0.0
    %433 = vmatpush1.msra.mxu0 0.0
    %434 = vmatprep.subr.mxu0 0.0
    %435 = vmatpush1.msra.mxu0 0.0
    %436 = vmatprep.subr.mxu0 0.0
    %437 = vmatpush1.msra.mxu0 0.0
    %438 = vmatprep.subr.mxu0 0.0
    %439 = vmatpush1.msra.mxu0 0.0
    %440 = vmatprep.subr.mxu0 0.0
    %441 = vmatpush1.msra.mxu0 0.0
    %442 = vmatprep.subr.mxu0 0.0
    %443 = vmatpush1.msra.mxu0 0.0
    %444 = vmatprep.subr.mxu0 0.0
    %445 = vmatpush1.msra.mxu0 0.0
    %446 = vmatprep.subr.mxu0 0.0
    %447 = vmatpush1.msra.mxu0 0.0
    %448 = vmatprep.subr.mxu0 0.0
    %449 = vmatpush1.msra.mxu0 0.0
    %450 = vmatprep.subr.mxu0 0.0
    %451 = vmatpush1.msra.mxu0 0.0
    %452 = vmatprep.subr.mxu0 0.0
    %453 = vmatpush1.msra.mxu0 0.0
    %454 = vmatprep.subr.mxu0 0.0
    %455 = vmatpush1.msra.mxu0 0.0
    %456 = vmatprep.subr.mxu0 0.0
    %457 = vmatpush1.msra.mxu0 0.0
    %458 = vmatprep.subr.mxu0 0.0
    %459 = vmatpush1.msra.mxu0 0.0
    %460 = vmatprep.subr.mxu0 0.0
    %461 = vmatpush1.msra.mxu0 0.0
    %462 = vmatprep.subr.mxu0 0.0
    %463 = vmatpush1.msra.mxu0 0.0
    %464 = vmatprep.subr.mxu0 0.0
    %465 = vmatpush1.msra.mxu0 0.0
    %466 = vmatprep.subr.mxu0 0.0
    %467 = vmatpush1.msra.mxu0 0.0
    %468 = vmatprep.subr.mxu0 0.0
    %469 = vmatpush1.msra.mxu0 0.0
    %470 = vmatprep.subr.mxu0 0.0
    %471 = vmatpush1.msra.mxu0 0.0
    %472 = vmatprep.subr.mxu0 0.0
    %473 = vmatpush1.msra.mxu0 0.0
    %474 = vmatprep.subr.mxu0 0.0
    %475 = vmatpush1.msra.mxu0 0.0
    %476 = vmatprep.subr.mxu0 0.0
    %477 = vmatpush1.msra.mxu0 0.0
    %478 = vmatprep.mubr.f32.mxu0 0.0
    %479 = vmatmul.mubr.f32.gmra.mrb[0].mxu0 %v270
    %v480 = vpop.f32.mrb[0].mxu0
    %v481 = vadd.f32 %v257, %v480
    %v482 = vpop.f32.mrb[0].mxu0
    %v483 = vadd.f32 %v261, %v482
    %484 = vdwg.mxu0
    %v485 = vld [vmem:[#allocation4] sm:$0xff]
    %v486 = vld [vmem:[#allocation4 + $0x8] sm:$0xff]
    %v487 = vld [vmem:[#allocation4 + $0x10] sm:$0xff]
    %v488 = vld [vmem:[#allocation4 + $0x18] sm:$0xff]
    %v489 = vld [vmem:[#allocation4 + $0x20] sm:$0xff]
    %v490 = vld [vmem:[#allocation4 + $0x28] sm:$0xff]
    %v491 = vld [vmem:[#allocation4 + $0x30] sm:$0xff]
    %v492 = vld [vmem:[#allocation4 + $0x38] sm:$0xff]
    %v493 = vld [vmem:[#allocation4 + $0x40] sm:$0xff]
    %v494 = vld [vmem:[#allocation4 + $0x48] sm:$0xff]
    %v495 = vld [vmem:[#allocation4 + $0x50] sm:$0xff]
    %v496 = vld [vmem:[#allocation4 + $0x58] sm:$0xff]
    %v497 = vld [vmem:[#allocation4 + $0x60] sm:$0xff]
    %v498 = vld [vmem:[#allocation4 + $0x68] sm:$0xff]
    %v499 = vld [vmem:[#allocation4 + $0x70] sm:$0xff]
    %v500 = vld [vmem:[#allocation4 + $0x78] sm:$0xff]
    %v501 = vld [vmem:[#allocation4 + $0x80] sm:$0xff]
    %v502 = vld [vmem:[#allocation4 + $0x88] sm:$0xff]
    %v503 = vld [vmem:[#allocation4 + $0x90] sm:$0xff]
    %v504 = vld [vmem:[#allocation4 + $0x98] sm:$0xff]
    %v505 = vld [vmem:[#allocation4 + $0xa0] sm:$0xff]
    %v506 = vld [vmem:[#allocation4 + $0xa8] sm:$0xff]
    %v507 = vld [vmem:[#allocation4 + $0xb0] sm:$0xff]
    %v508 = vld [vmem:[#allocation4 + $0xb8] sm:$0xff]
    %v509 = vld [vmem:[#allocation4 + $0xc0] sm:$0xff]
    %v510 = vld [vmem:[#allocation4 + $0xc8] sm:$0xff]
    %v511 = vld [vmem:[#allocation4 + $0xd0] sm:$0xff]
    %v512 = vld [vmem:[#allocation4 + $0xd8] sm:$0xff]
    %v513 = vld [vmem:[#allocation4 + $0xe0] sm:$0xff]
    %v514 = vld [vmem:[#allocation4 + $0xe8] sm:$0xff]
    %v515 = vld [vmem:[#allocation4 + $0xf0] sm:$0xff]
    %v516 = vld [vmem:[#allocation4 + $0xf8] sm:$0xff]
    %v517 = vld [vmem:[#allocation4 + $0x100] sm:$0xff]
    %v518 = vld [vmem:[#allocation4 + $0x108] sm:$0xff]
    %v519 = vld [vmem:[#allocation4 + $0x110] sm:$0xff]
    %v520 = vld [vmem:[#allocation4 + $0x118] sm:$0xff]
    %v521 = vld [vmem:[#allocation4 + $0x120] sm:$0xff]
    %v522 = vld [vmem:[#allocation4 + $0x128] sm:$0xff]
    %v523 = vld [vmem:[#allocation4 + $0x130] sm:$0xff]
    %v524 = vld [vmem:[#allocation4 + $0x138] sm:$0xff]
    %v525 = vld [vmem:[#allocation4 + $0x140] sm:$0xff]
    %v526 = vld [vmem:[#allocation4 + $0x148] sm:$0xff]
    %v527 = vld [vmem:[#allocation4 + $0x150] sm:$0xff]
    %v528 = vld [vmem:[#allocation4 + $0x158] sm:$0xff]
    %v529 = vld [vmem:[#allocation4 + $0x160] sm:$0xff]
    %v530 = vld [vmem:[#allocation4 + $0x168] sm:$0xff]
    %v531 = vld [vmem:[#allocation4 + $0x170] sm:$0xff]
    %v532 = vld [vmem:[#allocation4 + $0x178] sm:$0xff]
    %v533 = vld [vmem:[#allocation4 + $0x180] sm:$0xff]
    %v534 = vld [vmem:[#allocation4 + $0x188] sm:$0xff]
    %v535 = vld [vmem:[#allocation4 + $0x190] sm:$0xff]
    %v536 = vld [vmem:[#allocation4 + $0x198] sm:$0xff]
    %v537 = vld [vmem:[#allocation4 + $0x1a0] sm:$0xff]
    %v538 = vld [vmem:[#allocation4 + $0x1a8] sm:$0xff]
    %v539 = vld [vmem:[#allocation4 + $0x1b0] sm:$0xff]
    %v540 = vld [vmem:[#allocation4 + $0x1b8] sm:$0xff]
    %v541 = vld [vmem:[#allocation4 + $0x1c0] sm:$0xff]
    %v542 = vld [vmem:[#allocation4 + $0x1c8] sm:$0xff]
    %v543 = vld [vmem:[#allocation4 + $0x1d0] sm:$0xff]
    %v544 = vld [vmem:[#allocation4 + $0x1d8] sm:$0xff]
    %v545 = vld [vmem:[#allocation4 + $0x1e0] sm:$0xff]
    %v546 = vld [vmem:[#allocation4 + $0x1e8] sm:$0xff]
    %v547 = vld [vmem:[#allocation4 + $0x1f0] sm:$0xff]
    %v548 = vld [vmem:[#allocation4 + $0x1f8] sm:$0xff]
    %v549 = vld [vmem:[#allocation4 + $0x200] sm:$0xff]
    %v550 = vld [vmem:[#allocation4 + $0x208] sm:$0xff]
    %v551 = vld [vmem:[#allocation4 + $0x210] sm:$0xff]
    %v552 = vld [vmem:[#allocation4 + $0x218] sm:$0xff]
    %v553 = vld [vmem:[#allocation4 + $0x220] sm:$0xff]
    %v554 = vld [vmem:[#allocation4 + $0x228] sm:$0xff]
    %v555 = vld [vmem:[#allocation4 + $0x230] sm:$0xff]
    %v556 = vld [vmem:[#allocation4 + $0x238] sm:$0xff]
    %v557 = vld [vmem:[#allocation4 + $0x240] sm:$0xff]
    %v558 = vld [vmem:[#allocation4 + $0x248] sm:$0xff]
    %v559 = vld [vmem:[#allocation4 + $0x250] sm:$0xff]
    %v560 = vld [vmem:[#allocation4 + $0x258] sm:$0xff]
    %v561 = vld [vmem:[#allocation4 + $0x260] sm:$0xff]
    %v562 = vld [vmem:[#allocation4 + $0x268] sm:$0xff]
    %v563 = vld [vmem:[#allocation4 + $0x270] sm:$0xff]
    %v564 = vld [vmem:[#allocation4 + $0x278] sm:$0xff]
    %v565 = vld [vmem:[#allocation4 + $0x280] sm:$0xff]
    %v566 = vld [vmem:[#allocation4 + $0x288] sm:$0xff]
    %v567 = vld [vmem:[#allocation4 + $0x290] sm:$0xff]
    %v568 = vld [vmem:[#allocation4 + $0x298] sm:$0xff]
    %v569 = vld [vmem:[#allocation4 + $0x2a0] sm:$0xff]
    %v570 = vld [vmem:[#allocation4 + $0x2a8] sm:$0xff]
    %v571 = vld [vmem:[#allocation4 + $0x2b0] sm:$0xff]
    %v572 = vld [vmem:[#allocation4 + $0x2b8] sm:$0xff]
    %v573 = vld [vmem:[#allocation4 + $0x2c0] sm:$0xff]
    %v574 = vld [vmem:[#allocation4 + $0x2c8] sm:$0xff]
    %v575 = vld [vmem:[#allocation4 + $0x2d0] sm:$0xff]
    %v576 = vld [vmem:[#allocation4 + $0x2d8] sm:$0xff]
    %v577 = vld [vmem:[#allocation4 + $0x2e0] sm:$0xff]
    %v578 = vld [vmem:[#allocation4 + $0x2e8] sm:$0xff]
    %v579 = vld [vmem:[#allocation4 + $0x2f0] sm:$0xff]
    %v580 = vld [vmem:[#allocation4 + $0x2f8] sm:$0xff]
    %v581 = vld [vmem:[#allocation4 + $0x300] sm:$0xff]
    %v582 = vld [vmem:[#allocation4 + $0x308] sm:$0xff]
    %v583 = vld [vmem:[#allocation4 + $0x310] sm:$0xff]
    %v584 = vld [vmem:[#allocation4 + $0x318] sm:$0xff]
    %v585 = vld [vmem:[#allocation4 + $0x320] sm:$0xff]
    %v586 = vld [vmem:[#allocation4 + $0x328] sm:$0xff]
    %v587 = vld [vmem:[#allocation4 + $0x330] sm:$0xff]
    %v588 = vld [vmem:[#allocation4 + $0x338] sm:$0xff]
    %v589 = vld [vmem:[#allocation4 + $0x340] sm:$0xff]
    %v590 = vld [vmem:[#allocation4 + $0x348] sm:$0xff]
    %v591 = vld [vmem:[#allocation4 + $0x350] sm:$0xff]
    %v592 = vld [vmem:[#allocation4 + $0x358] sm:$0xff]
    %v593 = vld [vmem:[#allocation4 + $0x360] sm:$0xff]
    %v594 = vld [vmem:[#allocation4 + $0x368] sm:$0xff]
    %v595 = vld [vmem:[#allocation4 + $0x370] sm:$0xff]
    %v596 = vld [vmem:[#allocation4 + $0x378] sm:$0xff]
    %v597 = vld [vmem:[#allocation4 + $0x380] sm:$0xff]
    %v598 = vld [vmem:[#allocation4 + $0x388] sm:$0xff]
    %v599 = vld [vmem:[#allocation4 + $0x390] sm:$0xff]
    %v600 = vld [vmem:[#allocation4 + $0x398] sm:$0xff]
    %v601 = vld [vmem:[#allocation4 + $0x3a0] sm:$0xff]
    %v602 = vld [vmem:[#allocation4 + $0x3a8] sm:$0xff]
    %v603 = vld [vmem:[#allocation4 + $0x3b0] sm:$0xff]
    %v604 = vld [vmem:[#allocation4 + $0x3b8] sm:$0xff]
    %v605 = vld [vmem:[#allocation4 + $0x3c0] sm:$0xff]
    %v606 = vld [vmem:[#allocation4 + $0x3c8] sm:$0xff]
    %v607 = vld [vmem:[#allocation4 + $0x3d0] sm:$0xff]
    %v608 = vld [vmem:[#allocation4 + $0x3d8] sm:$0xff]
    %v609 = vld [vmem:[#allocation4 + $0x3e0] sm:$0xff]
    %v610 = vld [vmem:[#allocation4 + $0x3e8] sm:$0xff]
    %v611 = vld [vmem:[#allocation4 + $0x3f0] sm:$0xff]
    %v612 = vld [vmem:[#allocation4 + $0x3f8] sm:$0xff]
    %v613 = vld [vmem:[#allocation4 + $0x400] sm:$0xff]
    %v614 = vld [vmem:[#allocation4 + $0x408] sm:$0xff]
    %v615 = vld [vmem:[#allocation4 + $0x410] sm:$0xff]
    %v616 = vld [vmem:[#allocation4 + $0x418] sm:$0xff]
    %v617 = vld [vmem:[#allocation4 + $0x420] sm:$0xff]
    %v618 = vld [vmem:[#allocation4 + $0x428] sm:$0xff]
    %v619 = vld [vmem:[#allocation4 + $0x430] sm:$0xff]
    %v620 = vld [vmem:[#allocation4 + $0x438] sm:$0xff]
    %v621 = vld [vmem:[#allocation4 + $0x440] sm:$0xff]
    %v622 = vld [vmem:[#allocation4 + $0x448] sm:$0xff]
    %v623 = vld [vmem:[#allocation4 + $0x450] sm:$0xff]
    %v624 = vld [vmem:[#allocation4 + $0x458] sm:$0xff]
    %v625 = vld [vmem:[#allocation4 + $0x460] sm:$0xff]
    %v626 = vld [vmem:[#allocation4 + $0x468] sm:$0xff]
    %v627 = vld [vmem:[#allocation4 + $0x470] sm:$0xff]
    %v628 = vld [vmem:[#allocation4 + $0x478] sm:$0xff]
    %v629 = vld [vmem:[#allocation4 + $0x480] sm:$0xff]
    %v630 = vld [vmem:[#allocation4 + $0x488] sm:$0xff]
    %v631 = vld [vmem:[#allocation4 + $0x490] sm:$0xff]
    %v632 = vld [vmem:[#allocation4 + $0x498] sm:$0xff]
    %v633 = vld [vmem:[#allocation4 + $0x4a0] sm:$0xff]
    %v634 = vld [vmem:[#allocation4 + $0x4a8] sm:$0xff]
    %v635 = vld [vmem:[#allocation4 + $0x4b0] sm:$0xff]
    %v636 = vld [vmem:[#allocation4 + $0x4b8] sm:$0xff]
    %v637 = vld [vmem:[#allocation4 + $0x4c0] sm:$0xff]
    %v638 = vld [vmem:[#allocation4 + $0x4c8] sm:$0xff]
    %v639 = vld [vmem:[#allocation4 + $0x4d0] sm:$0xff]
    %v640 = vld [vmem:[#allocation4 + $0x4d8] sm:$0xff]
    %v641 = vld [vmem:[#allocation4 + $0x4e0] sm:$0xff]
    %v642 = vld [vmem:[#allocation4 + $0x4e8] sm:$0xff]
    %v643 = vld [vmem:[#allocation4 + $0x4f0] sm:$0xff]
    %v644 = vld [vmem:[#allocation4 + $0x4f8] sm:$0xff]
    %v645 = vld [vmem:[#allocation4 + $0x500] sm:$0xff]
    %v646 = vld [vmem:[#allocation4 + $0x508] sm:$0xff]
    %v647 = vld [vmem:[#allocation4 + $0x510] sm:$0xff]
    %v648 = vld [vmem:[#allocation4 + $0x518] sm:$0xff]
    %v649 = vld [vmem:[#allocation4 + $0x520] sm:$0xff]
    %v650 = vld [vmem:[#allocation4 + $0x528] sm:$0xff]
    %v651 = vld [vmem:[#allocation4 + $0x530] sm:$0xff]
    %v652 = vld [vmem:[#allocation4 + $0x538] sm:$0xff]
    %v653 = vld [vmem:[#allocation4 + $0x540] sm:$0xff]
    %v654 = vld [vmem:[#allocation4 + $0x548] sm:$0xff]
    %v655 = vld [vmem:[#allocation4 + $0x550] sm:$0xff]
    %v656 = vld [vmem:[#allocation4 + $0x558] sm:$0xff]
    %v657 = vld [vmem:[#allocation4 + $0x560] sm:$0xff]
    %v658 = vld [vmem:[#allocation4 + $0x568] sm:$0xff]
    %v659 = vld [vmem:[#allocation4 + $0x570] sm:$0xff]
    %v660 = vld [vmem:[#allocation4 + $0x578] sm:$0xff]
    %v661 = vld [vmem:[#allocation4 + $0x580] sm:$0xff]
    %v662 = vld [vmem:[#allocation4 + $0x588] sm:$0xff]
    %v663 = vld [vmem:[#allocation4 + $0x590] sm:$0xff]
    %v664 = vld [vmem:[#allocation4 + $0x598] sm:$0xff]
    %v665 = vld [vmem:[#allocation4 + $0x5a0] sm:$0xff]
    %v666 = vld [vmem:[#allocation4 + $0x5a8] sm:$0xff]
    %v667 = vld [vmem:[#allocation4 + $0x5b0] sm:$0xff]
    %v668 = vld [vmem:[#allocation4 + $0x5b8] sm:$0xff]
    %v669 = vld [vmem:[#allocation4 + $0x5c0] sm:$0xff]
    %v670 = vld [vmem:[#allocation4 + $0x5c8] sm:$0xff]
    %v671 = vld [vmem:[#allocation4 + $0x5d0] sm:$0xff]
    %v672 = vld [vmem:[#allocation4 + $0x5d8] sm:$0xff]
    %v673 = vld [vmem:[#allocation4 + $0x5e0] sm:$0xff]
    %v674 = vld [vmem:[#allocation4 + $0x5e8] sm:$0xff]
    %v675 = vld [vmem:[#allocation4 + $0x5f0] sm:$0xff]
    %v676 = vld [vmem:[#allocation4 + $0x5f8] sm:$0xff]
    %677 = vmatprep.subr.mxu0 %v486
    %678 = vmatpush1.msra.mxu0 %v485
    %679 = vmatprep.subr.mxu0 %v492
    %680 = vmatpush1.msra.mxu0 %v491
    %681 = vmatprep.subr.mxu0 %v498
    %682 = vmatpush1.msra.mxu0 %v497
    %683 = vmatprep.subr.mxu0 %v504
    %684 = vmatpush1.msra.mxu0 %v503
    %685 = vmatprep.subr.mxu0 %v510
    %686 = vmatpush1.msra.mxu0 %v509
    %687 = vmatprep.subr.mxu0 %v516
    %688 = vmatpush1.msra.mxu0 %v515
    %689 = vmatprep.subr.mxu0 %v522
    %690 = vmatpush1.msra.mxu0 %v521
    %691 = vmatprep.subr.mxu0 %v528
    %692 = vmatpush1.msra.mxu0 %v527
    %693 = vmatprep.subr.mxu0 %v534
    %694 = vmatpush1.msra.mxu0 %v533
    %695 = vmatprep.subr.mxu0 %v540
    %696 = vmatpush1.msra.mxu0 %v539
    %697 = vmatprep.subr.mxu0 %v546
    %698 = vmatpush1.msra.mxu0 %v545
    %699 = vmatprep.subr.mxu0 %v552
    %700 = vmatpush1.msra.mxu0 %v551
    %701 = vmatprep.subr.mxu0 %v558
    %702 = vmatpush1.msra.mxu0 %v557
    %703 = vmatprep.subr.mxu0 %v564
    %704 = vmatpush1.msra.mxu0 %v563
    %705 = vmatprep.subr.mxu0 %v570
    %706 = vmatpush1.msra.mxu0 %v569
    %707 = vmatprep.subr.mxu0 %v576
    %708 = vmatpush1.msra.mxu0 %v575
    %709 = vmatprep.subr.mxu0 %v582
    %710 = vmatpush1.msra.mxu0 %v581
    %711 = vmatprep.subr.mxu0 %v588
    %712 = vmatpush1.msra.mxu0 %v587
    %713 = vmatprep.subr.mxu0 %v594
    %714 = vmatpush1.msra.mxu0 %v593
    %715 = vmatprep.subr.mxu0 %v600
    %716 = vmatpush1.msra.mxu0 %v599
    %717 = vmatprep.subr.mxu0 %v606
    %718 = vmatpush1.msra.mxu0 %v605
    %719 = vmatprep.subr.mxu0 %v612
    %720 = vmatpush1.msra.mxu0 %v611
    %721 = vmatprep.subr.mxu0 %v618
    %722 = vmatpush1.msra.mxu0 %v617
    %723 = vmatprep.subr.mxu0 %v624
    %724 = vmatpush1.msra.mxu0 %v623
    %725 = vmatprep.subr.mxu0 %v630
    %726 = vmatpush1.msra.mxu0 %v629
    %727 = vmatprep.subr.mxu0 %v636
    %728 = vmatpush1.msra.mxu0 %v635
    %729 = vmatprep.subr.mxu0 %v642
    %730 = vmatpush1.msra.mxu0 %v641
    %731 = vmatprep.subr.mxu0 %v648
    %732 = vmatpush1.msra.mxu0 %v647
    %733 = vmatprep.subr.mxu0 %v654
    %734 = vmatpush1.msra.mxu0 %v653
    %735 = vmatprep.subr.mxu0 %v660
    %736 = vmatpush1.msra.mxu0 %v659
    %737 = vmatprep.subr.mxu0 %v666
    %738 = vmatpush1.msra.mxu0 %v665
    %739 = vmatprep.subr.mxu0 %v672
    %740 = vmatpush1.msra.mxu0 %v671
    %741 = vmatprep.mubr.f32.mxu0 %v211
    %742 = vmatmul.mubr.f32.gmra.mrb[0].mxu0 %v210
    %v743 = vpop.f32.mrb[0].mxu0
    %v744 = vadd.f32 0.0, %v743
    %v745 = vpop.f32.mrb[0].mxu0
    %v746 = vadd.f32 0.0, %v745
    %747 = vdwg.mxu0
    %748 = vmatprep.subr.mxu0 %v488
    %749 = vmatpush1.msra.mxu0 %v487
    %750 = vmatprep.subr.mxu0 %v494
    %751 = vmatpush1.msra.mxu0 %v493
    %752 = vmatprep.subr.mxu0 %v500
    %753 = vmatpush1.msra.mxu0 %v499
    %754 = vmatprep.subr.mxu0 %v506
    %755 = vmatpush1.msra.mxu0 %v505
    %756 = vmatprep.subr.mxu0 %v512
    %757 = vmatpush1.msra.mxu0 %v511
    %758 = vmatprep.subr.mxu0 %v518
    %759 = vmatpush1.msra.mxu0 %v517
    %760 = vmatprep.subr.mxu0 %v524
    %761 = vmatpush1.msra.mxu0 %v523
    %762 = vmatprep.subr.mxu0 %v530
    %763 = vmatpush1.msra.mxu0 %v529
    %764 = vmatprep.subr.mxu0 %v536
    %765 = vmatpush1.msra.mxu0 %v535
    %766 = vmatprep.subr.mxu0 %v542
    %767 = vmatpush1.msra.mxu0 %v541
    %768 = vmatprep.subr.mxu0 %v548
    %769 = vmatpush1.msra.mxu0 %v547
    %770 = vmatprep.subr.mxu0 %v554
    %771 = vmatpush1.msra.mxu0 %v553
    %772 = vmatprep.subr.mxu0 %v560
    %773 = vmatpush1.msra.mxu0 %v559
    %774 = vmatprep.subr.mxu0 %v566
    %775 = vmatpush1.msra.mxu0 %v565
    %776 = vmatprep.subr.mxu0 %v572
    %777 = vmatpush1.msra.mxu0 %v571
    %778 = vmatprep.subr.mxu0 %v578
    %779 = vmatpush1.msra.mxu0 %v577
    %780 = vmatprep.subr.mxu0 %v584
    %781 = vmatpush1.msra.mxu0 %v583
    %782 = vmatprep.subr.mxu0 %v590
    %783 = vmatpush1.msra.mxu0 %v589
    %784 = vmatprep.subr.mxu0 %v596
    %785 = vmatpush1.msra.mxu0 %v595
    %786 = vmatprep.subr.mxu0 %v602
    %787 = vmatpush1.msra.mxu0 %v601
    %788 = vmatprep.subr.mxu0 %v608
    %789 = vmatpush1.msra.mxu0 %v607
    %790 = vmatprep.subr.mxu0 %v614
    %791 = vmatpush1.msra.mxu0 %v613
    %792 = vmatprep.subr.mxu0 %v620
    %793 = vmatpush1.msra.mxu0 %v619
    %794 = vmatprep.subr.mxu0 %v626
    %795 = vmatpush1.msra.mxu0 %v625
    %796 = vmatprep.subr.mxu0 %v632
    %797 = vmatpush1.msra.mxu0 %v631
    %798 = vmatprep.subr.mxu0 %v638
    %799 = vmatpush1.msra.mxu0 %v637
    %800 = vmatprep.subr.mxu0 %v644
    %801 = vmatpush1.msra.mxu0 %v643
    %802 = vmatprep.subr.mxu0 %v650
    %803 = vmatpush1.msra.mxu0 %v649
    %804 = vmatprep.subr.mxu0 %v656
    %805 = vmatpush1.msra.mxu0 %v655
    %806 = vmatprep.subr.mxu0 %v662
    %807 = vmatpush1.msra.mxu0 %v661
    %808 = vmatprep.subr.mxu0 %v668
    %809 = vmatpush1.msra.mxu0 %v667
    %810 = vmatprep.subr.mxu0 %v674
    %811 = vmatpush1.msra.mxu0 %v673
    %812 = vmatprep.mubr.f32.mxu0 %v211
    %813 = vmatmul.mubr.f32.gmra.mrb[0].mxu0 %v210
    %v814 = vpop.f32.mrb[0].mxu0
    %v815 = vadd.f32 0.0, %v814
    %v816 = vpop.f32.mrb[0].mxu0
    %v817 = vadd.f32 0.0, %v816
    %818 = vdwg.mxu0
    %819 = vmatprep.subr.mxu0 %v490
    %820 = vmatpush1.msra.mxu0 %v489
    %821 = vmatprep.subr.mxu0 %v496
    %822 = vmatpush1.msra.mxu0 %v495
    %823 = vmatprep.subr.mxu0 %v502
    %824 = vmatpush1.msra.mxu0 %v501
    %825 = vmatprep.subr.mxu0 %v508
    %826 = vmatpush1.msra.mxu0 %v507
    %827 = vmatprep.subr.mxu0 %v514
    %828 = vmatpush1.msra.mxu0 %v513
    %829 = vmatprep.subr.mxu0 %v520
    %830 = vmatpush1.msra.mxu0 %v519
    %831 = vmatprep.subr.mxu0 %v526
    %832 = vmatpush1.msra.mxu0 %v525
    %833 = vmatprep.subr.mxu0 %v532
    %834 = vmatpush1.msra.mxu0 %v531
    %835 = vmatprep.subr.mxu0 %v538
    %836 = vmatpush1.msra.mxu0 %v537
    %837 = vmatprep.subr.mxu0 %v544
    %838 = vmatpush1.msra.mxu0 %v543
    %839 = vmatprep.subr.mxu0 %v550
    %840 = vmatpush1.msra.mxu0 %v549
    %841 = vmatprep.subr.mxu0 %v556
    %842 = vmatpush1.msra.mxu0 %v555
    %843 = vmatprep.subr.mxu0 %v562
    %844 = vmatpush1.msra.mxu0 %v561
    %845 = vmatprep.subr.mxu0 %v568
    %846 = vmatpush1.msra.mxu0 %v567
    %847 = vmatprep.subr.mxu0 %v574
    %848 = vmatpush1.msra.mxu0 %v573
    %849 = vmatprep.subr.mxu0 %v580
    %850 = vmatpush1.msra.mxu0 %v579
    %851 = vmatprep.subr.mxu0 %v586
    %852 = vmatpush1.msra.mxu0 %v585
    %853 = vmatprep.subr.mxu0 %v592
    %854 = vmatpush1.msra.mxu0 %v591
    %855 = vmatprep.subr.mxu0 %v598
    %856 = vmatpush1.msra.mxu0 %v597
    %857 = vmatprep.subr.mxu0 %v604
    %858 = vmatpush1.msra.mxu0 %v603
    %859 = vmatprep.subr.mxu0 %v610
    %860 = vmatpush1.msra.mxu0 %v609
    %861 = vmatprep.subr.mxu0 %v616
    %862 = vmatpush1.msra.mxu0 %v615
    %863 = vmatprep.subr.mxu0 %v622
    %864 = vmatpush1.msra.mxu0 %v621
    %865 = vmatprep.subr.mxu0 %v628
    %866 = vmatpush1.msra.mxu0 %v627
    %867 = vmatprep.subr.mxu0 %v634
    %868 = vmatpush1.msra.mxu0 %v633
    %869 = vmatprep.subr.mxu0 %v640
    %870 = vmatpush1.msra.mxu0 %v639
    %871 = vmatprep.subr.mxu0 %v646
    %872 = vmatpush1.msra.mxu0 %v645
    %873 = vmatprep.subr.mxu0 %v652
    %874 = vmatpush1.msra.mxu0 %v651
    %875 = vmatprep.subr.mxu0 %v658
    %876 = vmatpush1.msra.mxu0 %v657
    %877 = vmatprep.subr.mxu0 %v664
    %878 = vmatpush1.msra.mxu0 %v663
    %879 = vmatprep.subr.mxu0 %v670
    %880 = vmatpush1.msra.mxu0 %v669
    %881 = vmatprep.subr.mxu0 %v676
    %882 = vmatpush1.msra.mxu0 %v675
    %883 = vmatprep.mubr.f32.mxu0 %v211
    %884 = vmatmul.mubr.f32.gmra.mrb[0].mxu0 %v210
    %v885 = vpop.f32.mrb[0].mxu0
    %v886 = vadd.f32 0.0, %v885
    %v887 = vpop.f32.mrb[0].mxu0
    %v888 = vadd.f32 0.0, %v887
    %889 = vdwg.mxu0
    %v890 = vadd.f32 %v339, %v744
    %v891 = vadd.f32 %v341, %v746
    %v892 = vxor.u32 %v890, 2147483648
    %v893 = vxor.u32 %v891, 2147483648
    %v894 = vmul.f32 %v892, 1.442695
    %v895 = vpow.pop %v894
    %v896 = vmul.f32 %v893, 1.442695
    %v897 = vpow.pop %v896
    %v898 = vadd.f32 %v895, 1.0
    %v899 = vadd.f32 %v897, 1.0
    %v900 = vrcp.pop %v898
    %v901 = vmul.f32 1.0, %v900
    %v902 = vrcp.pop %v899
    %v903 = vmul.f32 1.0, %v902
    %v904 = vadd.f32 %v410, %v815
    %v905 = vadd.f32 %v412, %v817
    %v906 = vxor.u32 %v904, 2147483648
    %v907 = vxor.u32 %v905, 2147483648
    %v908 = vmul.f32 %v906, 1.442695
    %v909 = vpow.pop %v908
    %v910 = vmul.f32 %v907, 1.442695
    %v911 = vpow.pop %v910
    %v912 = vadd.f32 %v909, 1.0
    %v913 = vadd.f32 %v911, 1.0
    %v914 = vrcp.pop %v912
    %v915 = vmul.f32 1.0, %v914
    %v916 = vrcp.pop %v913
    %v917 = vmul.f32 1.0, %v916
    %v918 = vld [vmem:[%s5] sm:$0x3]
    %v920 = vlaneseq
    %v921 = vshrl.u32 %v920, 7
    %v922 = vsub.s32 0, %v921
    %v923 = vrot.slane %v918, %v922
    %v924 = vlaneseq
    %v925 = vshrl.u32 %v924, 7
    %v926 = vsub.s32 1, %v925
    %v927 = vrot.slane %v918, %v926
    %v930 = vadd.f32 %v886, %v923
    %v931 = vadd.f32 %v888, %v927
    %v932 = vmul.f32 %v901, %v930
    %v933 = vmul.f32 %v903, %v931
    %v934 = vadd.f32 %v481, %v932
    %v935 = vadd.f32 %v483, %v933
    %v936 = vtanh.pop %v934
    %v937 = vtanh.pop %v935
    %v938 = vsub.f32 1.0, %v915
    %v939 = vsub.f32 1.0, %v917
    %v940 = vmul.f32 %v938, %v936
    %v941 = vmul.f32 %v939, %v937
    %v942 = vmul.f32 %v915, %v210
    %v943 = vmul.f32 %v917, %v211
    %v944 = vadd.f32 %v940, %v942
    %v945 = vadd.f32 %v941, %v943
    %s946 = scalar_lea.vmem %s1, 16
    %v947 = vld [vmem:[%s946] sm:$0xff]
    %v948 = vld [vmem:[%s946 + $0x8] sm:$0xff]
    %v949 = vld [vmem:[#allocation6] sm:$0xff]
    %v950 = vld [vmem:[#allocation6 + $0x8] sm:$0xff]
    %v951 = vld [vmem:[#allocation6 + $0x10] sm:$0xff]
    %v952 = vld [vmem:[#allocation6 + $0x18] sm:$0xff]
    %v953 = vld [vmem:[#allocation6 + $0x20] sm:$0xff]
    %v954 = vld [vmem:[#allocation6 + $0x28] sm:$0xff]
    %v955 = vld [vmem:[#allocation6 + $0x30] sm:$0xff]
    %v956 = vld [vmem:[#allocation6 + $0x38] sm:$0xff]
    %v957 = vld [vmem:[#allocation6 + $0x40] sm:$0xff]
    %v958 = vld [vmem:[#allocation6 + $0x48] sm:$0xff]
    %v959 = vld [vmem:[#allocation6 + $0x50] sm:$0xff]
    %v960 = vld [vmem:[#allocation6 + $0x58] sm:$0xff]
    %v961 = vld [vmem:[#allocation6 + $0x60] sm:$0xff]
    %v962 = vld [vmem:[#allocation6 + $0x68] sm:$0xff]
    %v963 = vld [vmem:[#allocation6 + $0x70] sm:$0xff]
    %v964 = vld [vmem:[#allocation6 + $0x78] sm:$0xff]
    %v965 = vld [vmem:[#allocation6 + $0x80] sm:$0xff]
    %v966 = vld [vmem:[#allocation6 + $0x88] sm:$0xff]
    %v967 = vld [vmem:[#allocation6 + $0x90] sm:$0xff]
    %v968 = vld [vmem:[#allocation6 + $0x98] sm:$0xff]
    %v969 = vld [vmem:[#allocation6 + $0xa0] sm:$0xff]
    %v970 = vld [vmem:[#allocation6 + $0xa8] sm:$0xff]
    %v971 = vld [vmem:[#allocation6 + $0xb0] sm:$0xff]
    %v972 = vld [vmem:[#allocation6 + $0xb8] sm:$0xff]
    %v973 = vld [vmem:[#allocation6 + $0xc0] sm:$0xff]
    %v974 = vld [vmem:[#allocation6 + $0xc8] sm:$0xff]
    %v975 = vld [vmem:[#allocation6 + $0xd0] sm:$0xff]
    %v976 = vld [vmem:[#allocation6 + $0xd8] sm:$0xff]
    %v977 = vld [vmem:[#allocation6 + $0xe0] sm:$0xff]
    %v978 = vld [vmem:[#allocation6 + $0xe8] sm:$0xff]
    %v979 = vld [vmem:[#allocation6 + $0xf0] sm:$0xff]
    %v980 = vld [vmem:[#allocation6 + $0xf8] sm:$0xff]
    %v981 = vld [vmem:[#allocation6 + $0x100] sm:$0xff]
    %v982 = vld [vmem:[#allocation6 + $0x108] sm:$0xff]
    %v983 = vld [vmem:[#allocation6 + $0x110] sm:$0xff]
    %v984 = vld [vmem:[#allocation6 + $0x118] sm:$0xff]
    %v985 = vld [vmem:[#allocation6 + $0x120] sm:$0xff]
    %v986 = vld [vmem:[#allocation6 + $0x128] sm:$0xff]
    %v987 = vld [vmem:[#allocation6 + $0x130] sm:$0xff]
    %v988 = vld [vmem:[#allocation6 + $0x138] sm:$0xff]
    %v989 = vld [vmem:[#allocation6 + $0x140] sm:$0xff]
    %v990 = vld [vmem:[#allocation6 + $0x148] sm:$0xff]
    %v991 = vld [vmem:[#allocation6 + $0x150] sm:$0xff]
    %v992 = vld [vmem:[#allocation6 + $0x158] sm:$0xff]
    %v993 = vld [vmem:[#allocation6 + $0x160] sm:$0xff]
    %v994 = vld [vmem:[#allocation6 + $0x168] sm:$0xff]
    %v995 = vld [vmem:[#allocation6 + $0x170] sm:$0xff]
    %v996 = vld [vmem:[#allocation6 + $0x178] sm:$0xff]
    %v997 = vld [vmem:[#allocation6 + $0x180] sm:$0xff]
    %v998 = vld [vmem:[#allocation6 + $0x188] sm:$0xff]
    %v999 = vld [vmem:[#allocation6 + $0x190] sm:$0xff]
    %v1000 = vld [vmem:[#allocation6 + $0x198] sm:$0xff]
    %v1001 = vld [vmem:[#allocation6 + $0x1a0] sm:$0xff]
    %v1002 = vld [vmem:[#allocation6 + $0x1a8] sm:$0xff]
    %v1003 = vld [vmem:[#allocation6 + $0x1b0] sm:$0xff]
    %v1004 = vld [vmem:[#allocation6 + $0x1b8] sm:$0xff]
    %v1005 = vld [vmem:[#allocation6 + $0x1c0] sm:$0xff]
    %v1006 = vld [vmem:[#allocation6 + $0x1c8] sm:$0xff]
    %v1007 = vld [vmem:[#allocation6 + $0x1d0] sm:$0xff]
    %v1008 = vld [vmem:[#allocation6 + $0x1d8] sm:$0xff]
    %v1009 = vld [vmem:[#allocation6 + $0x1e0] sm:$0xff]
    %v1010 = vld [vmem:[#allocation6 + $0x1e8] sm:$0xff]
    %v1011 = vld [vmem:[#allocation6 + $0x1f0] sm:$0xff]
    %v1012 = vld [vmem:[#allocation6 + $0x1f8] sm:$0xff]
    %v1013 = vld [vmem:[#allocation6 + $0x200] sm:$0xff]
    %v1014 = vld [vmem:[#allocation6 + $0x208] sm:$0xff]
    %v1015 = vld [vmem:[#allocation6 + $0x210] sm:$0xff]
    %v1016 = vld [vmem:[#allocation6 + $0x218] sm:$0xff]
    %v1017 = vld [vmem:[#allocation6 + $0x220] sm:$0xff]
    %v1018 = vld [vmem:[#allocation6 + $0x228] sm:$0xff]
    %v1019 = vld [vmem:[#allocation6 + $0x230] sm:$0xff]
    %v1020 = vld [vmem:[#allocation6 + $0x238] sm:$0xff]
    %v1021 = vld [vmem:[#allocation6 + $0x240] sm:$0xff]
    %v1022 = vld [vmem:[#allocation6 + $0x248] sm:$0xff]
    %v1023 = vld [vmem:[#allocation6 + $0x250] sm:$0xff]
    %v1024 = vld [vmem:[#allocation6 + $0x258] sm:$0xff]
    %v1025 = vld [vmem:[#allocation6 + $0x260] sm:$0xff]
    %v1026 = vld [vmem:[#allocation6 + $0x268] sm:$0xff]
    %v1027 = vld [vmem:[#allocation6 + $0x270] sm:$0xff]
    %v1028 = vld [vmem:[#allocation6 + $0x278] sm:$0xff]
    %v1029 = vld [vmem:[#allocation6 + $0x280] sm:$0xff]
    %v1030 = vld [vmem:[#allocation6 + $0x288] sm:$0xff]
    %v1031 = vld [vmem:[#allocation6 + $0x290] sm:$0xff]
    %v1032 = vld [vmem:[#allocation6 + $0x298] sm:$0xff]
    %v1033 = vld [vmem:[#allocation6 + $0x2a0] sm:$0xff]
    %v1034 = vld [vmem:[#allocation6 + $0x2a8] sm:$0xff]
    %v1035 = vld [vmem:[#allocation6 + $0x2b0] sm:$0xff]
    %v1036 = vld [vmem:[#allocation6 + $0x2b8] sm:$0xff]
    %v1037 = vld [vmem:[#allocation6 + $0x2c0] sm:$0xff]
    %v1038 = vld [vmem:[#allocation6 + $0x2c8] sm:$0xff]
    %v1039 = vld [vmem:[#allocation6 + $0x2d0] sm:$0xff]
    %v1040 = vld [vmem:[#allocation6 + $0x2d8] sm:$0xff]
    %v1041 = vld [vmem:[#allocation6 + $0x2e0] sm:$0xff]
    %v1042 = vld [vmem:[#allocation6 + $0x2e8] sm:$0xff]
    %v1043 = vld [vmem:[#allocation6 + $0x2f0] sm:$0xff]
    %v1044 = vld [vmem:[#allocation6 + $0x2f8] sm:$0xff]
    %v1045 = vld [vmem:[#allocation6 + $0x300] sm:$0xff]
    %v1046 = vld [vmem:[#allocation6 + $0x308] sm:$0xff]
    %v1047 = vld [vmem:[#allocation6 + $0x310] sm:$0xff]
    %v1048 = vld [vmem:[#allocation6 + $0x318] sm:$0xff]
    %v1049 = vld [vmem:[#allocation6 + $0x320] sm:$0xff]
    %v1050 = vld [vmem:[#allocation6 + $0x328] sm:$0xff]
    %v1051 = vld [vmem:[#allocation6 + $0x330] sm:$0xff]
    %v1052 = vld [vmem:[#allocation6 + $0x338] sm:$0xff]
    %v1053 = vld [vmem:[#allocation6 + $0x340] sm:$0xff]
    %v1054 = vld [vmem:[#allocation6 + $0x348] sm:$0xff]
    %v1055 = vld [vmem:[#allocation6 + $0x350] sm:$0xff]
    %v1056 = vld [vmem:[#allocation6 + $0x358] sm:$0xff]
    %v1057 = vld [vmem:[#allocation6 + $0x360] sm:$0xff]
    %v1058 = vld [vmem:[#allocation6 + $0x368] sm:$0xff]
    %v1059 = vld [vmem:[#allocation6 + $0x370] sm:$0xff]
    %v1060 = vld [vmem:[#allocation6 + $0x378] sm:$0xff]
    %v1061 = vld [vmem:[#allocation6 + $0x380] sm:$0xff]
    %v1062 = vld [vmem:[#allocation6 + $0x388] sm:$0xff]
    %v1063 = vld [vmem:[#allocation6 + $0x390] sm:$0xff]
    %v1064 = vld [vmem:[#allocation6 + $0x398] sm:$0xff]
    %v1065 = vld [vmem:[#allocation6 + $0x3a0] sm:$0xff]
    %v1066 = vld [vmem:[#allocation6 + $0x3a8] sm:$0xff]
    %v1067 = vld [vmem:[#allocation6 + $0x3b0] sm:$0xff]
    %v1068 = vld [vmem:[#allocation6 + $0x3b8] sm:$0xff]
    %v1069 = vld [vmem:[#allocation6 + $0x3c0] sm:$0xff]
    %v1070 = vld [vmem:[#allocation6 + $0x3c8] sm:$0xff]
    %v1071 = vld [vmem:[#allocation6 + $0x3d0] sm:$0xff]
    %v1072 = vld [vmem:[#allocation6 + $0x3d8] sm:$0xff]
    %v1073 = vld [vmem:[#allocation6 + $0x3e0] sm:$0xff]
    %v1074 = vld [vmem:[#allocation6 + $0x3e8] sm:$0xff]
    %v1075 = vld [vmem:[#allocation6 + $0x3f0] sm:$0xff]
    %v1076 = vld [vmem:[#allocation6 + $0x3f8] sm:$0xff]
    %v1077 = vld [vmem:[#allocation6 + $0x400] sm:$0xff]
    %v1078 = vld [vmem:[#allocation6 + $0x408] sm:$0xff]
    %v1079 = vld [vmem:[#allocation6 + $0x410] sm:$0xff]
    %v1080 = vld [vmem:[#allocation6 + $0x418] sm:$0xff]
    %v1081 = vld [vmem:[#allocation6 + $0x420] sm:$0xff]
    %v1082 = vld [vmem:[#allocation6 + $0x428] sm:$0xff]
    %v1083 = vld [vmem:[#allocation6 + $0x430] sm:$0xff]
    %v1084 = vld [vmem:[#allocation6 + $0x438] sm:$0xff]
    %v1085 = vld [vmem:[#allocation6 + $0x440] sm:$0xff]
    %v1086 = vld [vmem:[#allocation6 + $0x448] sm:$0xff]
    %v1087 = vld [vmem:[#allocation6 + $0x450] sm:$0xff]
    %v1088 = vld [vmem:[#allocation6 + $0x458] sm:$0xff]
    %v1089 = vld [vmem:[#allocation6 + $0x460] sm:$0xff]
    %v1090 = vld [vmem:[#allocation6 + $0x468] sm:$0xff]
    %v1091 = vld [vmem:[#allocation6 + $0x470] sm:$0xff]
    %v1092 = vld [vmem:[#allocation6 + $0x478] sm:$0xff]
    %v1093 = vld [vmem:[#allocation6 + $0x480] sm:$0xff]
    %v1094 = vld [vmem:[#allocation6 + $0x488] sm:$0xff]
    %v1095 = vld [vmem:[#allocation6 + $0x490] sm:$0xff]
    %v1096 = vld [vmem:[#allocation6 + $0x498] sm:$0xff]
    %v1097 = vld [vmem:[#allocation6 + $0x4a0] sm:$0xff]
    %v1098 = vld [vmem:[#allocation6 + $0x4a8] sm:$0xff]
    %v1099 = vld [vmem:[#allocation6 + $0x4b0] sm:$0xff]
    %v1100 = vld [vmem:[#allocation6 + $0x4b8] sm:$0xff]
    %v1101 = vld [vmem:[#allocation6 + $0x4c0] sm:$0xff]
    %v1102 = vld [vmem:[#allocation6 + $0x4c8] sm:$0xff]
    %v1103 = vld [vmem:[#allocation6 + $0x4d0] sm:$0xff]
    %v1104 = vld [vmem:[#allocation6 + $0x4d8] sm:$0xff]
    %v1105 = vld [vmem:[#allocation6 + $0x4e0] sm:$0xff]
    %v1106 = vld [vmem:[#allocation6 + $0x4e8] sm:$0xff]
    %v1107 = vld [vmem:[#allocation6 + $0x4f0] sm:$0xff]
    %v1108 = vld [vmem:[#allocation6 + $0x4f8] sm:$0xff]
    %v1109 = vld [vmem:[#allocation6 + $0x500] sm:$0xff]
    %v1110 = vld [vmem:[#allocation6 + $0x508] sm:$0xff]
    %v1111 = vld [vmem:[#allocation6 + $0x510] sm:$0xff]
    %v1112 = vld [vmem:[#allocation6 + $0x518] sm:$0xff]
    %v1113 = vld [vmem:[#allocation6 + $0x520] sm:$0xff]
    %v1114 = vld [vmem:[#allocation6 + $0x528] sm:$0xff]
    %v1115 = vld [vmem:[#allocation6 + $0x530] sm:$0xff]
    %v1116 = vld [vmem:[#allocation6 + $0x538] sm:$0xff]
    %v1117 = vld [vmem:[#allocation6 + $0x540] sm:$0xff]
    %v1118 = vld [vmem:[#allocation6 + $0x548] sm:$0xff]
    %v1119 = vld [vmem:[#allocation6 + $0x550] sm:$0xff]
    %v1120 = vld [vmem:[#allocation6 + $0x558] sm:$0xff]
    %v1121 = vld [vmem:[#allocation6 + $0x560] sm:$0xff]
    %v1122 = vld [vmem:[#allocation6 + $0x568] sm:$0xff]
    %v1123 = vld [vmem:[#allocation6 + $0x570] sm:$0xff]
    %v1124 = vld [vmem:[#allocation6 + $0x578] sm:$0xff]
    %v1125 = vld [vmem:[#allocation6 + $0x580] sm:$0xff]
    %v1126 = vld [vmem:[#allocation6 + $0x588] sm:$0xff]
    %v1127 = vld [vmem:[#allocation6 + $0x590] sm:$0xff]
    %v1128 = vld [vmem:[#allocation6 + $0x598] sm:$0xff]
    %v1129 = vld [vmem:[#allocation6 + $0x5a0] sm:$0xff]
    %v1130 = vld [vmem:[#allocation6 + $0x5a8] sm:$0xff]
    %v1131 = vld [vmem:[#allocation6 + $0x5b0] sm:$0xff]
    %v1132 = vld [vmem:[#allocation6 + $0x5b8] sm:$0xff]
    %v1133 = vld [vmem:[#allocation6 + $0x5c0] sm:$0xff]
    %v1134 = vld [vmem:[#allocation6 + $0x5c8] sm:$0xff]
    %v1135 = vld [vmem:[#allocation6 + $0x5d0] sm:$0xff]
    %v1136 = vld [vmem:[#allocation6 + $0x5d8] sm:$0xff]
    %v1137 = vld [vmem:[#allocation6 + $0x5e0] sm:$0xff]
    %v1138 = vld [vmem:[#allocation6 + $0x5e8] sm:$0xff]
    %v1139 = vld [vmem:[#allocation6 + $0x5f0] sm:$0xff]
    %v1140 = vld [vmem:[#allocation6 + $0x5f8] sm:$0xff]
    %v1141 = vld [vmem:[%s8] sm:$0x3f]
    %v1143 = vlaneseq
    %v1144 = vshrl.u32 %v1143, 7
    %v1145 = vsub.s32 0, %v1144
    %v1146 = vrot.slane %v1141, %v1145
    %v1147 = vlaneseq
    %v1148 = vshrl.u32 %v1147, 7
    %v1149 = vsub.s32 1, %v1148
    %v1150 = vrot.slane %v1141, %v1149
    %v1151 = vlaneseq
    %v1152 = vshrl.u32 %v1151, 7
    %v1153 = vsub.s32 2, %v1152
    %v1154 = vrot.slane %v1141, %v1153
    %v1155 = vlaneseq
    %v1156 = vshrl.u32 %v1155, 7
    %v1157 = vsub.s32 3, %v1156
    %v1158 = vrot.slane %v1141, %v1157
    %v1159 = vlaneseq
    %v1160 = vshrl.u32 %v1159, 7
    %v1161 = vsub.s32 4, %v1160
    %v1162 = vrot.slane %v1141, %v1161
    %v1163 = vlaneseq
    %v1164 = vshrl.u32 %v1163, 7
    %v1165 = vsub.s32 5, %v1164
    %v1166 = vrot.slane %v1141, %v1165
    %1173 = vmatprep.subr.mxu0 %v950
    %1174 = vmatpush1.msra.mxu0 %v949
    %1175 = vmatprep.subr.mxu0 %v956
    %1176 = vmatpush1.msra.mxu0 %v955
    %1177 = vmatprep.subr.mxu0 %v962
    %1178 = vmatpush1.msra.mxu0 %v961
    %1179 = vmatprep.subr.mxu0 %v968
    %1180 = vmatpush1.msra.mxu0 %v967
    %1181 = vmatprep.subr.mxu0 %v974
    %1182 = vmatpush1.msra.mxu0 %v973
    %1183 = vmatprep.subr.mxu0 %v980
    %1184 = vmatpush1.msra.mxu0 %v979
    %1185 = vmatprep.subr.mxu0 %v986
    %1186 = vmatpush1.msra.mxu0 %v985
    %1187 = vmatprep.subr.mxu0 %v992
    %1188 = vmatpush1.msra.mxu0 %v991
    %1189 = vmatprep.subr.mxu0 %v998
    %1190 = vmatpush1.msra.mxu0 %v997
    %1191 = vmatprep.subr.mxu0 %v1004
    %1192 = vmatpush1.msra.mxu0 %v1003
    %1193 = vmatprep.subr.mxu0 %v1010
    %1194 = vmatpush1.msra.mxu0 %v1009
    %1195 = vmatprep.subr.mxu0 %v1016
    %1196 = vmatpush1.msra.mxu0 %v1015
    %1197 = vmatprep.subr.mxu0 %v1022
    %1198 = vmatpush1.msra.mxu0 %v1021
    %1199 = vmatprep.subr.mxu0 %v1028
    %1200 = vmatpush1.msra.mxu0 %v1027
    %1201 = vmatprep.subr.mxu0 %v1034
    %1202 = vmatpush1.msra.mxu0 %v1033
    %1203 = vmatprep.subr.mxu0 %v1040
    %1204 = vmatpush1.msra.mxu0 %v1039
    %1205 = vmatprep.subr.mxu0 %v1046
    %1206 = vmatpush1.msra.mxu0 %v1045
    %1207 = vmatprep.subr.mxu0 %v1052
    %1208 = vmatpush1.msra.mxu0 %v1051
    %1209 = vmatprep.subr.mxu0 %v1058
    %1210 = vmatpush1.msra.mxu0 %v1057
    %1211 = vmatprep.subr.mxu0 %v1064
    %1212 = vmatpush1.msra.mxu0 %v1063
    %1213 = vmatprep.subr.mxu0 %v1070
    %1214 = vmatpush1.msra.mxu0 %v1069
    %1215 = vmatprep.subr.mxu0 %v1076
    %1216 = vmatpush1.msra.mxu0 %v1075
    %1217 = vmatprep.subr.mxu0 %v1082
    %1218 = vmatpush1.msra.mxu0 %v1081
    %1219 = vmatprep.subr.mxu0 %v1088
    %1220 = vmatpush1.msra.mxu0 %v1087
    %1221 = vmatprep.subr.mxu0 %v1094
    %1222 = vmatpush1.msra.mxu0 %v1093
    %1223 = vmatprep.subr.mxu0 %v1100
    %1224 = vmatpush1.msra.mxu0 %v1099
    %1225 = vmatprep.subr.mxu0 %v1106
    %1226 = vmatpush1.msra.mxu0 %v1105
    %1227 = vmatprep.subr.mxu0 %v1112
    %1228 = vmatpush1.msra.mxu0 %v1111
    %1229 = vmatprep.subr.mxu0 %v1118
    %1230 = vmatpush1.msra.mxu0 %v1117
    %1231 = vmatprep.subr.mxu0 %v1124
    %1232 = vmatpush1.msra.mxu0 %v1123
    %1233 = vmatprep.subr.mxu0 %v1130
    %1234 = vmatpush1.msra.mxu0 %v1129
    %1235 = vmatprep.subr.mxu0 %v1136
    %1236 = vmatpush1.msra.mxu0 %v1135
    %1237 = vmatprep.mubr.f32.mxu0 %v945
    %1238 = vmatmul.mubr.f32.gmra.mrb[0].mxu0 %v944
    %v1239 = vpop.f32.mrb[0].mxu0
    %v1240 = vadd.f32 %v1146, %v1239
    %v1241 = vpop.f32.mrb[0].mxu0
    %v1242 = vadd.f32 %v1150, %v1241
    %1243 = vdwg.mxu0
    %1244 = vmatprep.subr.mxu0 %v952
    %1245 = vmatpush1.msra.mxu0 %v951
    %1246 = vmatprep.subr.mxu0 %v958
    %1247 = vmatpush1.msra.mxu0 %v957
    %1248 = vmatprep.subr.mxu0 %v964
    %1249 = vmatpush1.msra.mxu0 %v963
    %1250 = vmatprep.subr.mxu0 %v970
    %1251 = vmatpush1.msra.mxu0 %v969
    %1252 = vmatprep.subr.mxu0 %v976
    %1253 = vmatpush1.msra.mxu0 %v975
    %1254 = vmatprep.subr.mxu0 %v982
    %1255 = vmatpush1.msra.mxu0 %v981
    %1256 = vmatprep.subr.mxu0 %v988
    %1257 = vmatpush1.msra.mxu0 %v987
    %1258 = vmatprep.subr.mxu0 %v994
    %1259 = vmatpush1.msra.mxu0 %v993
    %1260 = vmatprep.subr.mxu0 %v1000
    %1261 = vmatpush1.msra.mxu0 %v999
    %1262 = vmatprep.subr.mxu0 %v1006
    %1263 = vmatpush1.msra.mxu0 %v1005
    %1264 = vmatprep.subr.mxu0 %v1012
    %1265 = vmatpush1.msra.mxu0 %v1011
    %1266 = vmatprep.subr.mxu0 %v1018
    %1267 = vmatpush1.msra.mxu0 %v1017
    %1268 = vmatprep.subr.mxu0 %v1024
    %1269 = vmatpush1.msra.mxu0 %v1023
    %1270 = vmatprep.subr.mxu0 %v1030
    %1271 = vmatpush1.msra.mxu0 %v1029
    %1272 = vmatprep.subr.mxu0 %v1036
    %1273 = vmatpush1.msra.mxu0 %v1035
    %1274 = vmatprep.subr.mxu0 %v1042
    %1275 = vmatpush1.msra.mxu0 %v1041
    %1276 = vmatprep.subr.mxu0 %v1048
    %1277 = vmatpush1.msra.mxu0 %v1047
    %1278 = vmatprep.subr.mxu0 %v1054
    %1279 = vmatpush1.msra.mxu0 %v1053
    %1280 = vmatprep.subr.mxu0 %v1060
    %1281 = vmatpush1.msra.mxu0 %v1059
    %1282 = vmatprep.subr.mxu0 %v1066
    %1283 = vmatpush1.msra.mxu0 %v1065
    %1284 = vmatprep.subr.mxu0 %v1072
    %1285 = vmatpush1.msra.mxu0 %v1071
    %1286 = vmatprep.subr.mxu0 %v1078
    %1287 = vmatpush1.msra.mxu0 %v1077
    %1288 = vmatprep.subr.mxu0 %v1084
    %1289 = vmatpush1.msra.mxu0 %v1083
    %1290 = vmatprep.subr.mxu0 %v1090
    %1291 = vmatpush1.msra.mxu0 %v1089
    %1292 = vmatprep.subr.mxu0 %v1096
    %1293 = vmatpush1.msra.mxu0 %v1095
    %1294 = vmatprep.subr.mxu0 %v1102
    %1295 = vmatpush1.msra.mxu0 %v1101
    %1296 = vmatprep.subr.mxu0 %v1108
    %1297 = vmatpush1.msra.mxu0 %v1107
    %1298 = vmatprep.subr.mxu0 %v1114
    %1299 = vmatpush1.msra.mxu0 %v1113
    %1300 = vmatprep.subr.mxu0 %v1120
    %1301 = vmatpush1.msra.mxu0 %v1119
    %1302 = vmatprep.subr.mxu0 %v1126
    %1303 = vmatpush1.msra.mxu0 %v1125
    %1304 = vmatprep.subr.mxu0 %v1132
    %1305 = vmatpush1.msra.mxu0 %v1131
    %1306 = vmatprep.subr.mxu0 %v1138
    %1307 = vmatpush1.msra.mxu0 %v1137
    %1308 = vmatprep.mubr.f32.mxu0 %v945
    %1309 = vmatmul.mubr.f32.gmra.mrb[0].mxu0 %v944
    %v1310 = vpop.f32.mrb[0].mxu0
    %v1311 = vadd.f32 %v1154, %v1310
    %v1312 = vpop.f32.mrb[0].mxu0
    %v1313 = vadd.f32 %v1158, %v1312
    %1314 = vdwg.mxu0
    %1315 = vmatprep.subr.mxu0 %v954
    %1316 = vmatpush1.msra.mxu0 %v953
    %1317 = vmatprep.subr.mxu0 %v960
    %1318 = vmatpush1.msra.mxu0 %v959
    %1319 = vmatprep.subr.mxu0 %v966
    %1320 = vmatpush1.msra.mxu0 %v965
    %1321 = vmatprep.subr.mxu0 %v972
    %1322 = vmatpush1.msra.mxu0 %v971
    %1323 = vmatprep.subr.mxu0 %v978
    %1324 = vmatpush1.msra.mxu0 %v977
    %1325 = vmatprep.subr.mxu0 %v984
    %1326 = vmatpush1.msra.mxu0 %v983
    %1327 = vmatprep.subr.mxu0 %v990
    %1328 = vmatpush1.msra.mxu0 %v989
    %1329 = vmatprep.subr.mxu0 %v996
    %1330 = vmatpush1.msra.mxu0 %v995
    %1331 = vmatprep.subr.mxu0 %v1002
    %1332 = vmatpush1.msra.mxu0 %v1001
    %1333 = vmatprep.subr.mxu0 %v1008
    %1334 = vmatpush1.msra.mxu0 %v1007
    %1335 = vmatprep.subr.mxu0 %v1014
    %1336 = vmatpush1.msra.mxu0 %v1013
    %1337 = vmatprep.subr.mxu0 %v1020
    %1338 = vmatpush1.msra.mxu0 %v1019
    %1339 = vmatprep.subr.mxu0 %v1026
    %1340 = vmatpush1.msra.mxu0 %v1025
    %1341 = vmatprep.subr.mxu0 %v1032
    %1342 = vmatpush1.msra.mxu0 %v1031
    %1343 = vmatprep.subr.mxu0 %v1038
    %1344 = vmatpush1.msra.mxu0 %v1037
    %1345 = vmatprep.subr.mxu0 %v1044
    %1346 = vmatpush1.msra.mxu0 %v1043
    %1347 = vmatprep.subr.mxu0 %v1050
    %1348 = vmatpush1.msra.mxu0 %v1049
    %1349 = vmatprep.subr.mxu0 %v1056
    %1350 = vmatpush1.msra.mxu0 %v1055
    %1351 = vmatprep.subr.mxu0 %v1062
    %1352 = vmatpush1.msra.mxu0 %v1061
    %1353 = vmatprep.subr.mxu0 %v1068
    %1354 = vmatpush1.msra.mxu0 %v1067
    %1355 = vmatprep.subr.mxu0 %v1074
    %1356 = vmatpush1.msra.mxu0 %v1073
    %1357 = vmatprep.subr.mxu0 %v1080
    %1358 = vmatpush1.msra.mxu0 %v1079
    %1359 = vmatprep.subr.mxu0 %v1086
    %1360 = vmatpush1.msra.mxu0 %v1085
    %1361 = vmatprep.subr.mxu0 %v1092
    %1362 = vmatpush1.msra.mxu0 %v1091
    %1363 = vmatprep.subr.mxu0 %v1098
    %1364 = vmatpush1.msra.mxu0 %v1097
    %1365 = vmatprep.subr.mxu0 %v1104
    %1366 = vmatpush1.msra.mxu0 %v1103
    %1367 = vmatprep.subr.mxu0 %v1110
    %1368 = vmatpush1.msra.mxu0 %v1109
    %1369 = vmatprep.subr.mxu0 %v1116
    %1370 = vmatpush1.msra.mxu0 %v1115
    %1371 = vmatprep.subr.mxu0 %v1122
    %1372 = vmatpush1.msra.mxu0 %v1121
    %1373 = vmatprep.subr.mxu0 %v1128
    %1374 = vmatpush1.msra.mxu0 %v1127
    %1375 = vmatprep.subr.mxu0 %v1134
    %1376 = vmatpush1.msra.mxu0 %v1133
    %1377 = vmatprep.subr.mxu0 %v1140
    %1378 = vmatpush1.msra.mxu0 %v1139
    %1379 = vmatprep.mubr.f32.mxu0 %v945
    %1380 = vmatmul.mubr.f32.gmra.mrb[0].mxu0 %v944
    %v1381 = vpop.f32.mrb[0].mxu0
    %v1382 = vadd.f32 %v1162, %v1381
    %v1383 = vpop.f32.mrb[0].mxu0
    %v1384 = vadd.f32 %v1166, %v1383
    %1385 = vdwg.mxu0
    %v1386 = vld [vmem:[#allocation7] sm:$0xff]
    %v1387 = vld [vmem:[#allocation7 + $0x8] sm:$0xff]
    %v1388 = vld [vmem:[#allocation7 + $0x10] sm:$0xff]
    %v1389 = vld [vmem:[#allocation7 + $0x18] sm:$0xff]
    %v1390 = vld [vmem:[#allocation7 + $0x20] sm:$0xff]
    %v1391 = vld [vmem:[#allocation7 + $0x28] sm:$0xff]
    %v1392 = vld [vmem:[#allocation7 + $0x30] sm:$0xff]
    %v1393 = vld [vmem:[#allocation7 + $0x38] sm:$0xff]
    %v1394 = vld [vmem:[#allocation7 + $0x40] sm:$0xff]
    %v1395 = vld [vmem:[#allocation7 + $0x48] sm:$0xff]
    %v1396 = vld [vmem:[#allocation7 + $0x50] sm:$0xff]
    %v1397 = vld [vmem:[#allocation7 + $0x58] sm:$0xff]
    %v1398 = vld [vmem:[#allocation7 + $0x60] sm:$0xff]
    %v1399 = vld [vmem:[#allocation7 + $0x68] sm:$0xff]
    %v1400 = vld [vmem:[#allocation7 + $0x70] sm:$0xff]
    %v1401 = vld [vmem:[#allocation7 + $0x78] sm:$0xff]
    %v1402 = vld [vmem:[#allocation7 + $0x80] sm:$0xff]
    %v1403 = vld [vmem:[#allocation7 + $0x88] sm:$0xff]
    %v1404 = vld [vmem:[#allocation7 + $0x90] sm:$0xff]
    %v1405 = vld [vmem:[#allocation7 + $0x98] sm:$0xff]
    %v1406 = vld [vmem:[#allocation7 + $0xa0] sm:$0xff]
    %v1407 = vld [vmem:[#allocation7 + $0xa8] sm:$0xff]
    %v1408 = vld [vmem:[#allocation7 + $0xb0] sm:$0xff]
    %v1409 = vld [vmem:[#allocation7 + $0xb8] sm:$0xff]
    %v1410 = vld [vmem:[#allocation7 + $0xc0] sm:$0xff]
    %v1411 = vld [vmem:[#allocation7 + $0xc8] sm:$0xff]
    %v1412 = vld [vmem:[#allocation7 + $0xd0] sm:$0xff]
    %v1413 = vld [vmem:[#allocation7 + $0xd8] sm:$0xff]
    %v1414 = vld [vmem:[#allocation7 + $0xe0] sm:$0xff]
    %v1415 = vld [vmem:[#allocation7 + $0xe8] sm:$0xff]
    %v1416 = vld [vmem:[#allocation7 + $0xf0] sm:$0xff]
    %v1417 = vld [vmem:[#allocation7 + $0xf8] sm:$0xff]
    %v1418 = vld [vmem:[#allocation7 + $0x100] sm:$0xff]
    %v1419 = vld [vmem:[#allocation7 + $0x108] sm:$0xff]
    %v1420 = vld [vmem:[#allocation7 + $0x110] sm:$0xff]
    %v1421 = vld [vmem:[#allocation7 + $0x118] sm:$0xff]
    %v1422 = vld [vmem:[#allocation7 + $0x120] sm:$0xff]
    %v1423 = vld [vmem:[#allocation7 + $0x128] sm:$0xff]
    %v1424 = vld [vmem:[#allocation7 + $0x130] sm:$0xff]
    %v1425 = vld [vmem:[#allocation7 + $0x138] sm:$0xff]
    %v1426 = vld [vmem:[#allocation7 + $0x140] sm:$0xff]
    %v1427 = vld [vmem:[#allocation7 + $0x148] sm:$0xff]
    %v1428 = vld [vmem:[#allocation7 + $0x150] sm:$0xff]
    %v1429 = vld [vmem:[#allocation7 + $0x158] sm:$0xff]
    %v1430 = vld [vmem:[#allocation7 + $0x160] sm:$0xff]
    %v1431 = vld [vmem:[#allocation7 + $0x168] sm:$0xff]
    %v1432 = vld [vmem:[#allocation7 + $0x170] sm:$0xff]
    %v1433 = vld [vmem:[#allocation7 + $0x178] sm:$0xff]
    %v1434 = vld [vmem:[#allocation7 + $0x180] sm:$0xff]
    %v1435 = vld [vmem:[#allocation7 + $0x188] sm:$0xff]
    %v1436 = vld [vmem:[#allocation7 + $0x190] sm:$0xff]
    %v1437 = vld [vmem:[#allocation7 + $0x198] sm:$0xff]
    %v1438 = vld [vmem:[#allocation7 + $0x1a0] sm:$0xff]
    %v1439 = vld [vmem:[#allocation7 + $0x1a8] sm:$0xff]
    %v1440 = vld [vmem:[#allocation7 + $0x1b0] sm:$0xff]
    %v1441 = vld [vmem:[#allocation7 + $0x1b8] sm:$0xff]
    %v1442 = vld [vmem:[#allocation7 + $0x1c0] sm:$0xff]
    %v1443 = vld [vmem:[#allocation7 + $0x1c8] sm:$0xff]
    %v1444 = vld [vmem:[#allocation7 + $0x1d0] sm:$0xff]
    %v1445 = vld [vmem:[#allocation7 + $0x1d8] sm:$0xff]
    %v1446 = vld [vmem:[#allocation7 + $0x1e0] sm:$0xff]
    %v1447 = vld [vmem:[#allocation7 + $0x1e8] sm:$0xff]
    %v1448 = vld [vmem:[#allocation7 + $0x1f0] sm:$0xff]
    %v1449 = vld [vmem:[#allocation7 + $0x1f8] sm:$0xff]
    %v1450 = vld [vmem:[#allocation7 + $0x200] sm:$0xff]
    %v1451 = vld [vmem:[#allocation7 + $0x208] sm:$0xff]
    %v1452 = vld [vmem:[#allocation7 + $0x210] sm:$0xff]
    %v1453 = vld [vmem:[#allocation7 + $0x218] sm:$0xff]
    %v1454 = vld [vmem:[#allocation7 + $0x220] sm:$0xff]
    %v1455 = vld [vmem:[#allocation7 + $0x228] sm:$0xff]
    %v1456 = vld [vmem:[#allocation7 + $0x230] sm:$0xff]
    %v1457 = vld [vmem:[#allocation7 + $0x238] sm:$0xff]
    %v1458 = vld [vmem:[#allocation7 + $0x240] sm:$0xff]
    %v1459 = vld [vmem:[#allocation7 + $0x248] sm:$0xff]
    %v1460 = vld [vmem:[#allocation7 + $0x250] sm:$0xff]
    %v1461 = vld [vmem:[#allocation7 + $0x258] sm:$0xff]
    %v1462 = vld [vmem:[#allocation7 + $0x260] sm:$0xff]
    %v1463 = vld [vmem:[#allocation7 + $0x268] sm:$0xff]
    %v1464 = vld [vmem:[#allocation7 + $0x270] sm:$0xff]
    %v1465 = vld [vmem:[#allocation7 + $0x278] sm:$0xff]
    %v1466 = vld [vmem:[#allocation7 + $0x280] sm:$0xff]
    %v1467 = vld [vmem:[#allocation7 + $0x288] sm:$0xff]
    %v1468 = vld [vmem:[#allocation7 + $0x290] sm:$0xff]
    %v1469 = vld [vmem:[#allocation7 + $0x298] sm:$0xff]
    %v1470 = vld [vmem:[#allocation7 + $0x2a0] sm:$0xff]
    %v1471 = vld [vmem:[#allocation7 + $0x2a8] sm:$0xff]
    %v1472 = vld [vmem:[#allocation7 + $0x2b0] sm:$0xff]
    %v1473 = vld [vmem:[#allocation7 + $0x2b8] sm:$0xff]
    %v1474 = vld [vmem:[#allocation7 + $0x2c0] sm:$0xff]
    %v1475 = vld [vmem:[#allocation7 + $0x2c8] sm:$0xff]
    %v1476 = vld [vmem:[#allocation7 + $0x2d0] sm:$0xff]
    %v1477 = vld [vmem:[#allocation7 + $0x2d8] sm:$0xff]
    %v1478 = vld [vmem:[#allocation7 + $0x2e0] sm:$0xff]
    %v1479 = vld [vmem:[#allocation7 + $0x2e8] sm:$0xff]
    %v1480 = vld [vmem:[#allocation7 + $0x2f0] sm:$0xff]
    %v1481 = vld [vmem:[#allocation7 + $0x2f8] sm:$0xff]
    %v1482 = vld [vmem:[#allocation7 + $0x300] sm:$0xff]
    %v1483 = vld [vmem:[#allocation7 + $0x308] sm:$0xff]
    %v1484 = vld [vmem:[#allocation7 + $0x310] sm:$0xff]
    %v1485 = vld [vmem:[#allocation7 + $0x318] sm:$0xff]
    %v1486 = vld [vmem:[#allocation7 + $0x320] sm:$0xff]
    %v1487 = vld [vmem:[#allocation7 + $0x328] sm:$0xff]
    %v1488 = vld [vmem:[#allocation7 + $0x330] sm:$0xff]
    %v1489 = vld [vmem:[#allocation7 + $0x338] sm:$0xff]
    %v1490 = vld [vmem:[#allocation7 + $0x340] sm:$0xff]
    %v1491 = vld [vmem:[#allocation7 + $0x348] sm:$0xff]
    %v1492 = vld [vmem:[#allocation7 + $0x350] sm:$0xff]
    %v1493 = vld [vmem:[#allocation7 + $0x358] sm:$0xff]
    %v1494 = vld [vmem:[#allocation7 + $0x360] sm:$0xff]
    %v1495 = vld [vmem:[#allocation7 + $0x368] sm:$0xff]
    %v1496 = vld [vmem:[#allocation7 + $0x370] sm:$0xff]
    %v1497 = vld [vmem:[#allocation7 + $0x378] sm:$0xff]
    %v1498 = vld [vmem:[#allocation7 + $0x380] sm:$0xff]
    %v1499 = vld [vmem:[#allocation7 + $0x388] sm:$0xff]
    %v1500 = vld [vmem:[#allocation7 + $0x390] sm:$0xff]
    %v1501 = vld [vmem:[#allocation7 + $0x398] sm:$0xff]
    %v1502 = vld [vmem:[#allocation7 + $0x3a0] sm:$0xff]
    %v1503 = vld [vmem:[#allocation7 + $0x3a8] sm:$0xff]
    %v1504 = vld [vmem:[#allocation7 + $0x3b0] sm:$0xff]
    %v1505 = vld [vmem:[#allocation7 + $0x3b8] sm:$0xff]
    %v1506 = vld [vmem:[#allocation7 + $0x3c0] sm:$0xff]
    %v1507 = vld [vmem:[#allocation7 + $0x3c8] sm:$0xff]
    %v1508 = vld [vmem:[#allocation7 + $0x3d0] sm:$0xff]
    %v1509 = vld [vmem:[#allocation7 + $0x3d8] sm:$0xff]
    %v1510 = vld [vmem:[#allocation7 + $0x3e0] sm:$0xff]
    %v1511 = vld [vmem:[#allocation7 + $0x3e8] sm:$0xff]
    %v1512 = vld [vmem:[#allocation7 + $0x3f0] sm:$0xff]
    %v1513 = vld [vmem:[#allocation7 + $0x3f8] sm:$0xff]
    %v1514 = vld [vmem:[#allocation7 + $0x400] sm:$0xff]
    %v1515 = vld [vmem:[#allocation7 + $0x408] sm:$0xff]
    %v1516 = vld [vmem:[#allocation7 + $0x410] sm:$0xff]
    %v1517 = vld [vmem:[#allocation7 + $0x418] sm:$0xff]
    %v1518 = vld [vmem:[#allocation7 + $0x420] sm:$0xff]
    %v1519 = vld [vmem:[#allocation7 + $0x428] sm:$0xff]
    %v1520 = vld [vmem:[#allocation7 + $0x430] sm:$0xff]
    %v1521 = vld [vmem:[#allocation7 + $0x438] sm:$0xff]
    %v1522 = vld [vmem:[#allocation7 + $0x440] sm:$0xff]
    %v1523 = vld [vmem:[#allocation7 + $0x448] sm:$0xff]
    %v1524 = vld [vmem:[#allocation7 + $0x450] sm:$0xff]
    %v1525 = vld [vmem:[#allocation7 + $0x458] sm:$0xff]
    %v1526 = vld [vmem:[#allocation7 + $0x460] sm:$0xff]
    %v1527 = vld [vmem:[#allocation7 + $0x468] sm:$0xff]
    %v1528 = vld [vmem:[#allocation7 + $0x470] sm:$0xff]
    %v1529 = vld [vmem:[#allocation7 + $0x478] sm:$0xff]
    %v1530 = vld [vmem:[#allocation7 + $0x480] sm:$0xff]
    %v1531 = vld [vmem:[#allocation7 + $0x488] sm:$0xff]
    %v1532 = vld [vmem:[#allocation7 + $0x490] sm:$0xff]
    %v1533 = vld [vmem:[#allocation7 + $0x498] sm:$0xff]
    %v1534 = vld [vmem:[#allocation7 + $0x4a0] sm:$0xff]
    %v1535 = vld [vmem:[#allocation7 + $0x4a8] sm:$0xff]
    %v1536 = vld [vmem:[#allocation7 + $0x4b0] sm:$0xff]
    %v1537 = vld [vmem:[#allocation7 + $0x4b8] sm:$0xff]
    %v1538 = vld [vmem:[#allocation7 + $0x4c0] sm:$0xff]
    %v1539 = vld [vmem:[#allocation7 + $0x4c8] sm:$0xff]
    %v1540 = vld [vmem:[#allocation7 + $0x4d0] sm:$0xff]
    %v1541 = vld [vmem:[#allocation7 + $0x4d8] sm:$0xff]
    %v1542 = vld [vmem:[#allocation7 + $0x4e0] sm:$0xff]
    %v1543 = vld [vmem:[#allocation7 + $0x4e8] sm:$0xff]
    %v1544 = vld [vmem:[#allocation7 + $0x4f0] sm:$0xff]
    %v1545 = vld [vmem:[#allocation7 + $0x4f8] sm:$0xff]
    %v1546 = vld [vmem:[#allocation7 + $0x500] sm:$0xff]
    %v1547 = vld [vmem:[#allocation7 + $0x508] sm:$0xff]
    %v1548 = vld [vmem:[#allocation7 + $0x510] sm:$0xff]
    %v1549 = vld [vmem:[#allocation7 + $0x518] sm:$0xff]
    %v1550 = vld [vmem:[#allocation7 + $0x520] sm:$0xff]
    %v1551 = vld [vmem:[#allocation7 + $0x528] sm:$0xff]
    %v1552 = vld [vmem:[#allocation7 + $0x530] sm:$0xff]
    %v1553 = vld [vmem:[#allocation7 + $0x538] sm:$0xff]
    %v1554 = vld [vmem:[#allocation7 + $0x540] sm:$0xff]
    %v1555 = vld [vmem:[#allocation7 + $0x548] sm:$0xff]
    %v1556 = vld [vmem:[#allocation7 + $0x550] sm:$0xff]
    %v1557 = vld [vmem:[#allocation7 + $0x558] sm:$0xff]
    %v1558 = vld [vmem:[#allocation7 + $0x560] sm:$0xff]
    %v1559 = vld [vmem:[#allocation7 + $0x568] sm:$0xff]
    %v1560 = vld [vmem:[#allocation7 + $0x570] sm:$0xff]
    %v1561 = vld [vmem:[#allocation7 + $0x578] sm:$0xff]
    %v1562 = vld [vmem:[#allocation7 + $0x580] sm:$0xff]
    %v1563 = vld [vmem:[#allocation7 + $0x588] sm:$0xff]
    %v1564 = vld [vmem:[#allocation7 + $0x590] sm:$0xff]
    %v1565 = vld [vmem:[#allocation7 + $0x598] sm:$0xff]
    %v1566 = vld [vmem:[#allocation7 + $0x5a0] sm:$0xff]
    %v1567 = vld [vmem:[#allocation7 + $0x5a8] sm:$0xff]
    %v1568 = vld [vmem:[#allocation7 + $0x5b0] sm:$0xff]
    %v1569 = vld [vmem:[#allocation7 + $0x5b8] sm:$0xff]
    %v1570 = vld [vmem:[#allocation7 + $0x5c0] sm:$0xff]
    %v1571 = vld [vmem:[#allocation7 + $0x5c8] sm:$0xff]
    %v1572 = vld [vmem:[#allocation7 + $0x5d0] sm:$0xff]
    %v1573 = vld [vmem:[#allocation7 + $0x5d8] sm:$0xff]
    %v1574 = vld [vmem:[#allocation7 + $0x5e0] sm:$0xff]
    %v1575 = vld [vmem:[#allocation7 + $0x5e8] sm:$0xff]
    %v1576 = vld [vmem:[#allocation7 + $0x5f0] sm:$0xff]
    %v1577 = vld [vmem:[#allocation7 + $0x5f8] sm:$0xff]
    %1578 = vmatprep.subr.mxu0 %v1387
    %1579 = vmatpush1.msra.mxu0 %v1386
    %1580 = vmatprep.subr.mxu0 %v1393
    %1581 = vmatpush1.msra.mxu0 %v1392
    %1582 = vmatprep.subr.mxu0 %v1399
    %1583 = vmatpush1.msra.mxu0 %v1398
    %1584 = vmatprep.subr.mxu0 %v1405
    %1585 = vmatpush1.msra.mxu0 %v1404
    %1586 = vmatprep.subr.mxu0 %v1411
    %1587 = vmatpush1.msra.mxu0 %v1410
    %1588 = vmatprep.subr.mxu0 %v1417
    %1589 = vmatpush1.msra.mxu0 %v1416
    %1590 = vmatprep.subr.mxu0 %v1423
    %1591 = vmatpush1.msra.mxu0 %v1422
    %1592 = vmatprep.subr.mxu0 %v1429
    %1593 = vmatpush1.msra.mxu0 %v1428
    %1594 = vmatprep.subr.mxu0 %v1435
    %1595 = vmatpush1.msra.mxu0 %v1434
    %1596 = vmatprep.subr.mxu0 %v1441
    %1597 = vmatpush1.msra.mxu0 %v1440
    %1598 = vmatprep.subr.mxu0 %v1447
    %1599 = vmatpush1.msra.mxu0 %v1446
    %1600 = vmatprep.subr.mxu0 %v1453
    %1601 = vmatpush1.msra.mxu0 %v1452
    %1602 = vmatprep.subr.mxu0 %v1459
    %1603 = vmatpush1.msra.mxu0 %v1458
    %1604 = vmatprep.subr.mxu0 %v1465
    %1605 = vmatpush1.msra.mxu0 %v1464
    %1606 = vmatprep.subr.mxu0 %v1471
    %1607 = vmatpush1.msra.mxu0 %v1470
    %1608 = vmatprep.subr.mxu0 %v1477
    %1609 = vmatpush1.msra.mxu0 %v1476
    %1610 = vmatprep.subr.mxu0 %v1483
    %1611 = vmatpush1.msra.mxu0 %v1482
    %1612 = vmatprep.subr.mxu0 %v1489
    %1613 = vmatpush1.msra.mxu0 %v1488
    %1614 = vmatprep.subr.mxu0 %v1495
    %1615 = vmatpush1.msra.mxu0 %v1494
    %1616 = vmatprep.subr.mxu0 %v1501
    %1617 = vmatpush1.msra.mxu0 %v1500
    %1618 = vmatprep.subr.mxu0 %v1507
    %1619 = vmatpush1.msra.mxu0 %v1506
    %1620 = vmatprep.subr.mxu0 %v1513
    %1621 = vmatpush1.msra.mxu0 %v1512
    %1622 = vmatprep.subr.mxu0 %v1519
    %1623 = vmatpush1.msra.mxu0 %v1518
    %1624 = vmatprep.subr.mxu0 %v1525
    %1625 = vmatpush1.msra.mxu0 %v1524
    %1626 = vmatprep.subr.mxu0 %v1531
    %1627 = vmatpush1.msra.mxu0 %v1530
    %1628 = vmatprep.subr.mxu0 %v1537
    %1629 = vmatpush1.msra.mxu0 %v1536
    %1630 = vmatprep.subr.mxu0 %v1543
    %1631 = vmatpush1.msra.mxu0 %v1542
    %1632 = vmatprep.subr.mxu0 %v1549
    %1633 = vmatpush1.msra.mxu0 %v1548
    %1634 = vmatprep.subr.mxu0 %v1555
    %1635 = vmatpush1.msra.mxu0 %v1554
    %1636 = vmatprep.subr.mxu0 %v1561
    %1637 = vmatpush1.msra.mxu0 %v1560
    %1638 = vmatprep.subr.mxu0 %v1567
    %1639 = vmatpush1.msra.mxu0 %v1566
    %1640 = vmatprep.subr.mxu0 %v1573
    %1641 = vmatpush1.msra.mxu0 %v1572
    %1642 = vmatprep.mubr.f32.mxu0 %v948
    %1643 = vmatmul.mubr.f32.gmra.mrb[0].mxu0 %v947
    %v1644 = vpop.f32.mrb[0].mxu0
    %v1645 = vadd.f32 0.0, %v1644
    %v1646 = vpop.f32.mrb[0].mxu0
    %v1647 = vadd.f32 0.0, %v1646
    %1648 = vdwg.mxu0
    %1649 = vmatprep.subr.mxu0 %v1389
    %1650 = vmatpush1.msra.mxu0 %v1388
    %1651 = vmatprep.subr.mxu0 %v1395
    %1652 = vmatpush1.msra.mxu0 %v1394
    %1653 = vmatprep.subr.mxu0 %v1401
    %1654 = vmatpush1.msra.mxu0 %v1400
    %1655 = vmatprep.subr.mxu0 %v1407
    %1656 = vmatpush1.msra.mxu0 %v1406
    %1657 = vmatprep.subr.mxu0 %v1413
    %1658 = vmatpush1.msra.mxu0 %v1412
    %1659 = vmatprep.subr.mxu0 %v1419
    %1660 = vmatpush1.msra.mxu0 %v1418
    %1661 = vmatprep.subr.mxu0 %v1425
    %1662 = vmatpush1.msra.mxu0 %v1424
    %1663 = vmatprep.subr.mxu0 %v1431
    %1664 = vmatpush1.msra.mxu0 %v1430
    %1665 = vmatprep.subr.mxu0 %v1437
    %1666 = vmatpush1.msra.mxu0 %v1436
    %1667 = vmatprep.subr.mxu0 %v1443
    %1668 = vmatpush1.msra.mxu0 %v1442
    %1669 = vmatprep.subr.mxu0 %v1449
    %1670 = vmatpush1.msra.mxu0 %v1448
    %1671 = vmatprep.subr.mxu0 %v1455
    %1672 = vmatpush1.msra.mxu0 %v1454
    %1673 = vmatprep.subr.mxu0 %v1461
    %1674 = vmatpush1.msra.mxu0 %v1460
    %1675 = vmatprep.subr.mxu0 %v1467
    %1676 = vmatpush1.msra.mxu0 %v1466
    %1677 = vmatprep.subr.mxu0 %v1473
    %1678 = vmatpush1.msra.mxu0 %v1472
    %1679 = vmatprep.subr.mxu0 %v1479
    %1680 = vmatpush1.msra.mxu0 %v1478
    %1681 = vmatprep.subr.mxu0 %v1485
    %1682 = vmatpush1.msra.mxu0 %v1484
    %1683 = vmatprep.subr.mxu0 %v1491
    %1684 = vmatpush1.msra.mxu0 %v1490
    %1685 = vmatprep.subr.mxu0 %v1497
    %1686 = vmatpush1.msra.mxu0 %v1496
    %1687 = vmatprep.subr.mxu0 %v1503
    %1688 = vmatpush1.msra.mxu0 %v1502
    %1689 = vmatprep.subr.mxu0 %v1509
    %1690 = vmatpush1.msra.mxu0 %v1508
    %1691 = vmatprep.subr.mxu0 %v1515
    %1692 = vmatpush1.msra.mxu0 %v1514
    %1693 = vmatprep.subr.mxu0 %v1521
    %1694 = vmatpush1.msra.mxu0 %v1520
    %1695 = vmatprep.subr.mxu0 %v1527
    %1696 = vmatpush1.msra.mxu0 %v1526
    %1697 = vmatprep.subr.mxu0 %v1533
    %1698 = vmatpush1.msra.mxu0 %v1532
    %1699 = vmatprep.subr.mxu0 %v1539
    %1700 = vmatpush1.msra.mxu0 %v1538
    %1701 = vmatprep.subr.mxu0 %v1545
    %1702 = vmatpush1.msra.mxu0 %v1544
    %1703 = vmatprep.subr.mxu0 %v1551
    %1704 = vmatpush1.msra.mxu0 %v1550
    %1705 = vmatprep.subr.mxu0 %v1557
    %1706 = vmatpush1.msra.mxu0 %v1556
    %1707 = vmatprep.subr.mxu0 %v1563
    %1708 = vmatpush1.msra.mxu0 %v1562
    %1709 = vmatprep.subr.mxu0 %v1569
    %1710 = vmatpush1.msra.mxu0 %v1568
    %1711 = vmatprep.subr.mxu0 %v1575
    %1712 = vmatpush1.msra.mxu0 %v1574
    %1713 = vmatprep.mubr.f32.mxu0 %v948
    %1714 = vmatmul.mubr.f32.gmra.mrb[0].mxu0 %v947
    %v1715 = vpop.f32.mrb[0].mxu0
    %v1716 = vadd.f32 0.0, %v1715
    %v1717 = vpop.f32.mrb[0].mxu0
    %v1718 = vadd.f32 0.0, %v1717
    %1719 = vdwg.mxu0
    %1720 = vmatprep.subr.mxu0 %v1391
    %1721 = vmatpush1.msra.mxu0 %v1390
    %1722 = vmatprep.subr.mxu0 %v1397
    %1723 = vmatpush1.msra.mxu0 %v1396
    %1724 = vmatprep.subr.mxu0 %v1403
    %1725 = vmatpush1.msra.mxu0 %v1402
    %1726 = vmatprep.subr.mxu0 %v1409
    %1727 = vmatpush1.msra.mxu0 %v1408
    %1728 = vmatprep.subr.mxu0 %v1415
    %1729 = vmatpush1.msra.mxu0 %v1414
    %1730 = vmatprep.subr.mxu0 %v1421
    %1731 = vmatpush1.msra.mxu0 %v1420
    %1732 = vmatprep.subr.mxu0 %v1427
    %1733 = vmatpush1.msra.mxu0 %v1426
    %1734 = vmatprep.subr.mxu0 %v1433
    %1735 = vmatpush1.msra.mxu0 %v1432
    %1736 = vmatprep.subr.mxu0 %v1439
    %1737 = vmatpush1.msra.mxu0 %v1438
    %1738 = vmatprep.subr.mxu0 %v1445
    %1739 = vmatpush1.msra.mxu0 %v1444
    %1740 = vmatprep.subr.mxu0 %v1451
    %1741 = vmatpush1.msra.mxu0 %v1450
    %1742 = vmatprep.subr.mxu0 %v1457
    %1743 = vmatpush1.msra.mxu0 %v1456
    %1744 = vmatprep.subr.mxu0 %v1463
    %1745 = vmatpush1.msra.mxu0 %v1462
    %1746 = vmatprep.subr.mxu0 %v1469
    %1747 = vmatpush1.msra.mxu0 %v1468
    %1748 = vmatprep.subr.mxu0 %v1475
    %1749 = vmatpush1.msra.mxu0 %v1474
    %1750 = vmatprep.subr.mxu0 %v1481
    %1751 = vmatpush1.msra.mxu0 %v1480
    %1752 = vmatprep.subr.mxu0 %v1487
    %1753 = vmatpush1.msra.mxu0 %v1486
    %1754 = vmatprep.subr.mxu0 %v1493
    %1755 = vmatpush1.msra.mxu0 %v1492
    %1756 = vmatprep.subr.mxu0 %v1499
    %1757 = vmatpush1.msra.mxu0 %v1498
    %1758 = vmatprep.subr.mxu0 %v1505
    %1759 = vmatpush1.msra.mxu0 %v1504
    %1760 = vmatprep.subr.mxu0 %v1511
    %1761 = vmatpush1.msra.mxu0 %v1510
    %1762 = vmatprep.subr.mxu0 %v1517
    %1763 = vmatpush1.msra.mxu0 %v1516
    %1764 = vmatprep.subr.mxu0 %v1523
    %1765 = vmatpush1.msra.mxu0 %v1522
    %1766 = vmatprep.subr.mxu0 %v1529
    %1767 = vmatpush1.msra.mxu0 %v1528
    %1768 = vmatprep.subr.mxu0 %v1535
    %1769 = vmatpush1.msra.mxu0 %v1534
    %1770 = vmatprep.subr.mxu0 %v1541
    %1771 = vmatpush1.msra.mxu0 %v1540
    %1772 = vmatprep.subr.mxu0 %v1547
    %1773 = vmatpush1.msra.mxu0 %v1546
    %1774 = vmatprep.subr.mxu0 %v1553
    %1775 = vmatpush1.msra.mxu0 %v1552
    %1776 = vmatprep.subr.mxu0 %v1559
    %1777 = vmatpush1.msra.mxu0 %v1558
    %1778 = vmatprep.subr.mxu0 %v1565
    %1779 = vmatpush1.msra.mxu0 %v1564
    %1780 = vmatprep.subr.mxu0 %v1571
    %1781 = vmatpush1.msra.mxu0 %v1570
    %1782 = vmatprep.subr.mxu0 %v1577
    %1783 = vmatpush1.msra.mxu0 %v1576
    %1784 = vmatprep.mubr.f32.mxu0 %v948
    %1785 = vmatmul.mubr.f32.gmra.mrb[0].mxu0 %v947
    %v1786 = vpop.f32.mrb[0].mxu0
    %v1787 = vadd.f32 0.0, %v1786
    %v1788 = vpop.f32.mrb[0].mxu0
    %v1789 = vadd.f32 0.0, %v1788
    %1790 = vdwg.mxu0
    %v1791 = vadd.f32 %v1240, %v1645
    %v1792 = vadd.f32 %v1242, %v1647
    %v1793 = vxor.u32 %v1791, 2147483648
    %v1794 = vxor.u32 %v1792, 2147483648
    %v1795 = vmul.f32 %v1793, 1.442695
    %v1796 = vpow.pop %v1795
    %v1797 = vmul.f32 %v1794, 1.442695
    %v1798 = vpow.pop %v1797
    %v1799 = vadd.f32 %v1796, 1.0
    %v1800 = vadd.f32 %v1798, 1.0
    %v1801 = vrcp.pop %v1799
    %v1802 = vmul.f32 1.0, %v1801
    %v1803 = vrcp.pop %v1800
    %v1804 = vmul.f32 1.0, %v1803
    %v1805 = vadd.f32 %v1311, %v1716
    %v1806 = vadd.f32 %v1313, %v1718
    %v1807 = vxor.u32 %v1805, 2147483648
    %v1808 = vxor.u32 %v1806, 2147483648
    %v1809 = vmul.f32 %v1807, 1.442695
    %v1810 = vpow.pop %v1809
    %v1811 = vmul.f32 %v1808, 1.442695
    %v1812 = vpow.pop %v1811
    %v1813 = vadd.f32 %v1810, 1.0
    %v1814 = vadd.f32 %v1812, 1.0
    %v1815 = vrcp.pop %v1813
    %v1816 = vmul.f32 1.0, %v1815
    %v1817 = vrcp.pop %v1814
    %v1818 = vmul.f32 1.0, %v1817
    %v1819 = vld [vmem:[%s9] sm:$0x3]
    %v1821 = vlaneseq
    %v1822 = vshrl.u32 %v1821, 7
    %v1823 = vsub.s32 0, %v1822
    %v1824 = vrot.slane %v1819, %v1823
    %v1825 = vlaneseq
    %v1826 = vshrl.u32 %v1825, 7
    %v1827 = vsub.s32 1, %v1826
    %v1828 = vrot.slane %v1819, %v1827
    %v1831 = vadd.f32 %v1787, %v1824
    %v1832 = vadd.f32 %v1789, %v1828
    %v1833 = vmul.f32 %v1802, %v1831
    %v1834 = vmul.f32 %v1804, %v1832
    %v1835 = vadd.f32 %v1382, %v1833
    %v1836 = vadd.f32 %v1384, %v1834
    %v1837 = vtanh.pop %v1835
    %v1838 = vtanh.pop %v1836
    %v1839 = vsub.f32 1.0, %v1816
    %v1840 = vsub.f32 1.0, %v1818
    %v1841 = vmul.f32 %v1839, %v1837
    %v1842 = vmul.f32 %v1840, %v1838
    %v1843 = vmul.f32 %v1816, %v947
    %v1844 = vmul.f32 %v1818, %v948
    %v1845 = vadd.f32 %v1841, %v1843
    %v1846 = vadd.f32 %v1842, %v1844
    %1847 = vst [vmem:[%s21] sm:$0xff] %v944
    %1848 = vst [vmem:[%s21 + $0x8] sm:$0xff] %v945
    %s1849 = scalar_lea.vmem %s21, 16
    %1850 = vst [vmem:[%s1849] sm:$0xff] %v1845
    %1851 = vst [vmem:[%s1849 + $0x8] sm:$0xff] %v1846
    %v1852 = vld [vmem:[#allocation9] sm:$0xff]
    %v1853 = vld [vmem:[#allocation9 + $0x8] sm:$0xff]
    %v1854 = vld [vmem:[#allocation9 + $0x10] sm:$0xff]
    %v1855 = vld [vmem:[#allocation9 + $0x18] sm:$0xff]
    %v1856 = vld [vmem:[#allocation9 + $0x20] sm:$0xff]
    %v1857 = vld [vmem:[#allocation9 + $0x28] sm:$0xff]
    %v1858 = vld [vmem:[#allocation9 + $0x30] sm:$0xff]
    %v1859 = vld [vmem:[#allocation9 + $0x38] sm:$0xff]
    %v1860 = vld [vmem:[#allocation9 + $0x40] sm:$0xff]
    %v1861 = vld [vmem:[#allocation9 + $0x48] sm:$0xff]
    %v1862 = vld [vmem:[#allocation9 + $0x50] sm:$0xff]
    %v1863 = vld [vmem:[#allocation9 + $0x58] sm:$0xff]
    %v1864 = vld [vmem:[#allocation9 + $0x60] sm:$0xff]
    %v1865 = vld [vmem:[#allocation9 + $0x68] sm:$0xff]
    %v1866 = vld [vmem:[#allocation9 + $0x70] sm:$0xff]
    %v1867 = vld [vmem:[#allocation9 + $0x78] sm:$0xff]
    %v1868 = vld [vmem:[#allocation9 + $0x80] sm:$0xff]
    %v1869 = vld [vmem:[#allocation9 + $0x88] sm:$0xff]
    %v1870 = vld [vmem:[#allocation9 + $0x90] sm:$0xff]
    %v1871 = vld [vmem:[#allocation9 + $0x98] sm:$0xff]
    %v1872 = vld [vmem:[#allocation9 + $0xa0] sm:$0xff]
    %v1873 = vld [vmem:[#allocation9 + $0xa8] sm:$0xff]
    %v1874 = vld [vmem:[#allocation9 + $0xb0] sm:$0xff]
    %v1875 = vld [vmem:[#allocation9 + $0xb8] sm:$0xff]
    %v1876 = vld [vmem:[#allocation9 + $0xc0] sm:$0xff]
    %v1877 = vld [vmem:[#allocation9 + $0xc8] sm:$0xff]
    %v1878 = vld [vmem:[#allocation9 + $0xd0] sm:$0xff]
    %v1879 = vld [vmem:[#allocation9 + $0xd8] sm:$0xff]
    %v1880 = vld [vmem:[#allocation9 + $0xe0] sm:$0xff]
    %v1881 = vld [vmem:[#allocation9 + $0xe8] sm:$0xff]
    %v1882 = vld [vmem:[#allocation9 + $0xf0] sm:$0xff]
    %v1883 = vld [vmem:[#allocation9 + $0xf8] sm:$0xff]
    %v1884 = vld [vmem:[%s11] sm:$0x1]
    %v1886 = vlaneseq
    %v1887 = vshrl.u32 %v1886, 7
    %v1888 = vsub.s32 0, %v1887
    %v1889 = vrot.slane %v1884, %v1888
    %1891 = vmatprep.subr.mxu0 0.0
    %1892 = vmatpush1.msra.mxu0 %v1852
    %1893 = vmatprep.subr.mxu0 0.0
    %1894 = vmatpush1.msra.mxu0 %v1853
    %1895 = vmatprep.subr.mxu0 0.0
    %1896 = vmatpush1.msra.mxu0 %v1854
    %1897 = vmatprep.subr.mxu0 0.0
    %1898 = vmatpush1.msra.mxu0 %v1855
    %1899 = vmatprep.subr.mxu0 0.0
    %1900 = vmatpush1.msra.mxu0 %v1856
    %1901 = vmatprep.subr.mxu0 0.0
    %1902 = vmatpush1.msra.mxu0 %v1857
    %1903 = vmatprep.subr.mxu0 0.0
    %1904 = vmatpush1.msra.mxu0 %v1858
    %1905 = vmatprep.subr.mxu0 0.0
    %1906 = vmatpush1.msra.mxu0 %v1859
    %1907 = vmatprep.subr.mxu0 0.0
    %1908 = vmatpush1.msra.mxu0 %v1860
    %1909 = vmatprep.subr.mxu0 0.0
    %1910 = vmatpush1.msra.mxu0 %v1861
    %1911 = vmatprep.subr.mxu0 0.0
    %1912 = vmatpush1.msra.mxu0 %v1862
    %1913 = vmatprep.subr.mxu0 0.0
    %1914 = vmatpush1.msra.mxu0 %v1863
    %1915 = vmatprep.subr.mxu0 0.0
    %1916 = vmatpush1.msra.mxu0 %v1864
    %1917 = vmatprep.subr.mxu0 0.0
    %1918 = vmatpush1.msra.mxu0 %v1865
    %1919 = vmatprep.subr.mxu0 0.0
    %1920 = vmatpush1.msra.mxu0 %v1866
    %1921 = vmatprep.subr.mxu0 0.0
    %1922 = vmatpush1.msra.mxu0 %v1867
    %1923 = vmatprep.subr.mxu0 0.0
    %1924 = vmatpush1.msra.mxu0 %v1868
    %1925 = vmatprep.subr.mxu0 0.0
    %1926 = vmatpush1.msra.mxu0 %v1869
    %1927 = vmatprep.subr.mxu0 0.0
    %1928 = vmatpush1.msra.mxu0 %v1870
    %1929 = vmatprep.subr.mxu0 0.0
    %1930 = vmatpush1.msra.mxu0 %v1871
    %1931 = vmatprep.subr.mxu0 0.0
    %1932 = vmatpush1.msra.mxu0 %v1872
    %1933 = vmatprep.subr.mxu0 0.0
    %1934 = vmatpush1.msra.mxu0 %v1873
    %1935 = vmatprep.subr.mxu0 0.0
    %1936 = vmatpush1.msra.mxu0 %v1874
    %1937 = vmatprep.subr.mxu0 0.0
    %1938 = vmatpush1.msra.mxu0 %v1875
    %1939 = vmatprep.subr.mxu0 0.0
    %1940 = vmatpush1.msra.mxu0 %v1876
    %1941 = vmatprep.subr.mxu0 0.0
    %1942 = vmatpush1.msra.mxu0 %v1877
    %1943 = vmatprep.subr.mxu0 0.0
    %1944 = vmatpush1.msra.mxu0 %v1878
    %1945 = vmatprep.subr.mxu0 0.0
    %1946 = vmatpush1.msra.mxu0 %v1879
    %1947 = vmatprep.subr.mxu0 0.0
    %1948 = vmatpush1.msra.mxu0 %v1880
    %1949 = vmatprep.subr.mxu0 0.0
    %1950 = vmatpush1.msra.mxu0 %v1881
    %1951 = vmatprep.subr.mxu0 0.0
    %1952 = vmatpush1.msra.mxu0 %v1882
    %1953 = vmatprep.subr.mxu0 0.0
    %1954 = vmatpush1.msra.mxu0 %v1883
    %1955 = vmatprep.mubr.f32.mxu0 %v1846
    %1956 = vmatmul.mubr.f32.gmra.mrb[0].mxu0 %v1845
    %v1957 = vpop.f32.mrb[0].mxu0
    %v1958 = vadd.f32 %v1889, %v1957
    %v1959 = vpop.f32.mrb[0].mxu0
    %1960 = vdwg.mxu0
    %1961 = vst [vmem:[%s22] sm:$0xff] %v1958
    %v1962 = vld [vmem:[#allocation10] sm:$0xff]
    %v1963 = vld [vmem:[#allocation10 + $0x8] sm:$0xff]
    %v1964 = vld [vmem:[#allocation10 + $0x10] sm:$0xff]
    %v1965 = vld [vmem:[#allocation10 + $0x18] sm:$0xff]
    %v1966 = vld [vmem:[#allocation10 + $0x20] sm:$0xff]
    %v1967 = vld [vmem:[#allocation10 + $0x28] sm:$0xff]
    %v1968 = vld [vmem:[#allocation10 + $0x30] sm:$0xff]
    %v1969 = vld [vmem:[#allocation10 + $0x38] sm:$0xff]
    %v1970 = vld [vmem:[#allocation10 + $0x40] sm:$0xff]
    %v1971 = vld [vmem:[#allocation10 + $0x48] sm:$0xff]
    %v1972 = vld [vmem:[#allocation10 + $0x50] sm:$0xff]
    %v1973 = vld [vmem:[#allocation10 + $0x58] sm:$0xff]
    %v1974 = vld [vmem:[#allocation10 + $0x60] sm:$0xff]
    %v1975 = vld [vmem:[#allocation10 + $0x68] sm:$0xff]
    %v1976 = vld [vmem:[#allocation10 + $0x70] sm:$0xff]
    %v1977 = vld [vmem:[#allocation10 + $0x78] sm:$0xff]
    %v1978 = vld [vmem:[#allocation10 + $0x80] sm:$0xff]
    %v1979 = vld [vmem:[#allocation10 + $0x88] sm:$0xff]
    %v1980 = vld [vmem:[#allocation10 + $0x90] sm:$0xff]
    %v1981 = vld [vmem:[#allocation10 + $0x98] sm:$0xff]
    %v1982 = vld [vmem:[#allocation10 + $0xa0] sm:$0xff]
    %v1983 = vld [vmem:[#allocation10 + $0xa8] sm:$0xff]
    %v1984 = vld [vmem:[#allocation10 + $0xb0] sm:$0xff]
    %v1985 = vld [vmem:[#allocation10 + $0xb8] sm:$0xff]
    %v1986 = vld [vmem:[#allocation10 + $0xc0] sm:$0xff]
    %v1987 = vld [vmem:[#allocation10 + $0xc8] sm:$0xff]
    %v1988 = vld [vmem:[#allocation10 + $0xd0] sm:$0xff]
    %v1989 = vld [vmem:[#allocation10 + $0xd8] sm:$0xff]
    %v1990 = vld [vmem:[#allocation10 + $0xe0] sm:$0xff]
    %v1991 = vld [vmem:[#allocation10 + $0xe8] sm:$0xff]
    %v1992 = vld [vmem:[#allocation10 + $0xf0] sm:$0xff]
    %v1993 = vld [vmem:[#allocation10 + $0xf8] sm:$0xff]
    %v1994 = vld [vmem:[%s13] sm:$0x1]
    %v1996 = vlaneseq
    %v1997 = vshrl.u32 %v1996, 7
    %v1998 = vsub.s32 0, %v1997
    %v1999 = vrot.slane %v1994, %v1998
    %2001 = vmatprep.subr.mxu0 0.0
    %2002 = vmatpush1.msra.mxu0 %v1962
    %2003 = vmatprep.subr.mxu0 0.0
    %2004 = vmatpush1.msra.mxu0 %v1963
    %2005 = vmatprep.subr.mxu0 0.0
    %2006 = vmatpush1.msra.mxu0 %v1964
    %2007 = vmatprep.subr.mxu0 0.0
    %2008 = vmatpush1.msra.mxu0 %v1965
    %2009 = vmatprep.subr.mxu0 0.0
    %2010 = vmatpush1.msra.mxu0 %v1966
    %2011 = vmatprep.subr.mxu0 0.0
    %2012 = vmatpush1.msra.mxu0 %v1967
    %2013 = vmatprep.subr.mxu0 0.0
    %2014 = vmatpush1.msra.mxu0 %v1968
    %2015 = vmatprep.subr.mxu0 0.0
    %2016 = vmatpush1.msra.mxu0 %v1969
    %2017 = vmatprep.subr.mxu0 0.0
    %2018 = vmatpush1.msra.mxu0 %v1970
    %2019 = vmatprep.subr.mxu0 0.0
    %2020 = vmatpush1.msra.mxu0 %v1971
    %2021 = vmatprep.subr.mxu0 0.0
    %2022 = vmatpush1.msra.mxu0 %v1972
    %2023 = vmatprep.subr.mxu0 0.0
    %2024 = vmatpush1.msra.mxu0 %v1973
    %2025 = vmatprep.subr.mxu0 0.0
    %2026 = vmatpush1.msra.mxu0 %v1974
    %2027 = vmatprep.subr.mxu0 0.0
    %2028 = vmatpush1.msra.mxu0 %v1975
    %2029 = vmatprep.subr.mxu0 0.0
    %2030 = vmatpush1.msra.mxu0 %v1976
    %2031 = vmatprep.subr.mxu0 0.0
    %2032 = vmatpush1.msra.mxu0 %v1977
    %2033 = vmatprep.subr.mxu0 0.0
    %2034 = vmatpush1.msra.mxu0 %v1978
    %2035 = vmatprep.subr.mxu0 0.0
    %2036 = vmatpush1.msra.mxu0 %v1979
    %2037 = vmatprep.subr.mxu0 0.0
    %2038 = vmatpush1.msra.mxu0 %v1980
    %2039 = vmatprep.subr.mxu0 0.0
    %2040 = vmatpush1.msra.mxu0 %v1981
    %2041 = vmatprep.subr.mxu0 0.0
    %2042 = vmatpush1.msra.mxu0 %v1982
    %2043 = vmatprep.subr.mxu0 0.0
    %2044 = vmatpush1.msra.mxu0 %v1983
    %2045 = vmatprep.subr.mxu0 0.0
    %2046 = vmatpush1.msra.mxu0 %v1984
    %2047 = vmatprep.subr.mxu0 0.0
    %2048 = vmatpush1.msra.mxu0 %v1985
    %2049 = vmatprep.subr.mxu0 0.0
    %2050 = vmatpush1.msra.mxu0 %v1986
    %2051 = vmatprep.subr.mxu0 0.0
    %2052 = vmatpush1.msra.mxu0 %v1987
    %2053 = vmatprep.subr.mxu0 0.0
    %2054 = vmatpush1.msra.mxu0 %v1988
    %2055 = vmatprep.subr.mxu0 0.0
    %2056 = vmatpush1.msra.mxu0 %v1989
    %2057 = vmatprep.subr.mxu0 0.0
    %2058 = vmatpush1.msra.mxu0 %v1990
    %2059 = vmatprep.subr.mxu0 0.0
    %2060 = vmatpush1.msra.mxu0 %v1991
    %2061 = vmatprep.subr.mxu0 0.0
    %2062 = vmatpush1.msra.mxu0 %v1992
    %2063 = vmatprep.subr.mxu0 0.0
    %2064 = vmatpush1.msra.mxu0 %v1993
    %2065 = vmatprep.mubr.f32.mxu0 %v1846
    %2066 = vmatmul.mubr.f32.gmra.mrb[0].mxu0 %v1845
    %v2067 = vpop.f32.mrb[0].mxu0
    %v2068 = vadd.f32 %v1999, %v2067
    %v2069 = vpop.f32.mrb[0].mxu0
    %2070 = vdwg.mxu0
    %v2071 = vmax.f32 %v2068, 0.0
    %2072 = vst [vmem:[%s24] sm:$0xff] %v2071
    %v2073 = vld [vmem:[#allocation12] sm:$0xff]
    %v2074 = vld [vmem:[#allocation12 + $0x8] sm:$0xff]
    %v2075 = vld [vmem:[#allocation12 + $0x10] sm:$0xff]
    %v2076 = vld [vmem:[#allocation12 + $0x18] sm:$0xff]
    %v2077 = vld [vmem:[#allocation12 + $0x20] sm:$0xff]
    %v2078 = vld [vmem:[#allocation12 + $0x28] sm:$0xff]
    %v2079 = vld [vmem:[#allocation12 + $0x30] sm:$0xff]
    %v2080 = vld [vmem:[#allocation12 + $0x38] sm:$0xff]
    %v2081 = vld [vmem:[#allocation12 + $0x40] sm:$0xff]
    %v2082 = vld [vmem:[#allocation12 + $0x48] sm:$0xff]
    %v2083 = vld [vmem:[#allocation12 + $0x50] sm:$0xff]
    %v2084 = vld [vmem:[#allocation12 + $0x58] sm:$0xff]
    %v2085 = vld [vmem:[#allocation12 + $0x60] sm:$0xff]
    %v2086 = vld [vmem:[#allocation12 + $0x68] sm:$0xff]
    %v2087 = vld [vmem:[#allocation12 + $0x70] sm:$0xff]
    %v2088 = vld [vmem:[#allocation12 + $0x78] sm:$0xff]
    %v2089 = vld [vmem:[#allocation12 + $0x80] sm:$0xff]
    %v2090 = vld [vmem:[#allocation12 + $0x88] sm:$0xff]
    %v2091 = vld [vmem:[#allocation12 + $0x90] sm:$0xff]
    %v2092 = vld [vmem:[#allocation12 + $0x98] sm:$0xff]
    %v2093 = vld [vmem:[#allocation12 + $0xa0] sm:$0xff]
    %v2094 = vld [vmem:[#allocation12 + $0xa8] sm:$0xff]
    %v2095 = vld [vmem:[#allocation12 + $0xb0] sm:$0xff]
    %v2096 = vld [vmem:[#allocation12 + $0xb8] sm:$0xff]
    %v2097 = vld [vmem:[#allocation12 + $0xc0] sm:$0xff]
    %v2098 = vld [vmem:[#allocation12 + $0xc8] sm:$0xff]
    %v2099 = vld [vmem:[#allocation12 + $0xd0] sm:$0xff]
    %v2100 = vld [vmem:[#allocation12 + $0xd8] sm:$0xff]
    %v2101 = vld [vmem:[#allocation12 + $0xe0] sm:$0xff]
    %v2102 = vld [vmem:[#allocation12 + $0xe8] sm:$0xff]
    %v2103 = vld [vmem:[#allocation12 + $0xf0] sm:$0xff]
    %v2104 = vld [vmem:[#allocation12 + $0xf8] sm:$0xff]
    %v2105 = vld [vmem:[%s15] sm:$0x1]
    %v2107 = vlaneseq
    %v2108 = vshrl.u32 %v2107, 7
    %v2109 = vsub.s32 0, %v2108
    %v2110 = vrot.slane %v2105, %v2109
    %2112 = vmatprep.subr.mxu0 0.0
    %2113 = vmatpush1.msra.mxu0 %v2073
    %2114 = vmatprep.subr.mxu0 0.0
    %2115 = vmatpush1.msra.mxu0 %v2074
    %2116 = vmatprep.subr.mxu0 0.0
    %2117 = vmatpush1.msra.mxu0 %v2075
    %2118 = vmatprep.subr.mxu0 0.0
    %2119 = vmatpush1.msra.mxu0 %v2076
    %2120 = vmatprep.subr.mxu0 0.0
    %2121 = vmatpush1.msra.mxu0 %v2077
    %2122 = vmatprep.subr.mxu0 0.0
    %2123 = vmatpush1.msra.mxu0 %v2078
    %2124 = vmatprep.subr.mxu0 0.0
    %2125 = vmatpush1.msra.mxu0 %v2079
    %2126 = vmatprep.subr.mxu0 0.0
    %2127 = vmatpush1.msra.mxu0 %v2080
    %2128 = vmatprep.subr.mxu0 0.0
    %2129 = vmatpush1.msra.mxu0 %v2081
    %2130 = vmatprep.subr.mxu0 0.0
    %2131 = vmatpush1.msra.mxu0 %v2082
    %2132 = vmatprep.subr.mxu0 0.0
    %2133 = vmatpush1.msra.mxu0 %v2083
    %2134 = vmatprep.subr.mxu0 0.0
    %2135 = vmatpush1.msra.mxu0 %v2084
    %2136 = vmatprep.subr.mxu0 0.0
    %2137 = vmatpush1.msra.mxu0 %v2085
    %2138 = vmatprep.subr.mxu0 0.0
    %2139 = vmatpush1.msra.mxu0 %v2086
    %2140 = vmatprep.subr.mxu0 0.0
    %2141 = vmatpush1.msra.mxu0 %v2087
    %2142 = vmatprep.subr.mxu0 0.0
    %2143 = vmatpush1.msra.mxu0 %v2088
    %2144 = vmatprep.subr.mxu0 0.0
    %2145 = vmatpush1.msra.mxu0 %v2089
    %2146 = vmatprep.subr.mxu0 0.0
    %2147 = vmatpush1.msra.mxu0 %v2090
    %2148 = vmatprep.subr.mxu0 0.0
    %2149 = vmatpush1.msra.mxu0 %v2091
    %2150 = vmatprep.subr.mxu0 0.0
    %2151 = vmatpush1.msra.mxu0 %v2092
    %2152 = vmatprep.subr.mxu0 0.0
    %2153 = vmatpush1.msra.mxu0 %v2093
    %2154 = vmatprep.subr.mxu0 0.0
    %2155 = vmatpush1.msra.mxu0 %v2094
    %2156 = vmatprep.subr.mxu0 0.0
    %2157 = vmatpush1.msra.mxu0 %v2095
    %2158 = vmatprep.subr.mxu0 0.0
    %2159 = vmatpush1.msra.mxu0 %v2096
    %2160 = vmatprep.subr.mxu0 0.0
    %2161 = vmatpush1.msra.mxu0 %v2097
    %2162 = vmatprep.subr.mxu0 0.0
    %2163 = vmatpush1.msra.mxu0 %v2098
    %2164 = vmatprep.subr.mxu0 0.0
    %2165 = vmatpush1.msra.mxu0 %v2099
    %2166 = vmatprep.subr.mxu0 0.0
    %2167 = vmatpush1.msra.mxu0 %v2100
    %2168 = vmatprep.subr.mxu0 0.0
    %2169 = vmatpush1.msra.mxu0 %v2101
    %2170 = vmatprep.subr.mxu0 0.0
    %2171 = vmatpush1.msra.mxu0 %v2102
    %2172 = vmatprep.subr.mxu0 0.0
    %2173 = vmatpush1.msra.mxu0 %v2103
    %2174 = vmatprep.subr.mxu0 0.0
    %2175 = vmatpush1.msra.mxu0 %v2104
    %2176 = vmatprep.mubr.f32.mxu0 %v1846
    %2177 = vmatmul.mubr.f32.gmra.mrb[0].mxu0 %v1845
    %v2178 = vpop.f32.mrb[0].mxu0
    %v2179 = vadd.f32 %v2110, %v2178
    %v2180 = vpop.f32.mrb[0].mxu0
    %2181 = vdwg.mxu0
    %v2182 = vmax.f32 %v2179, 0.0
    %2183 = vst [vmem:[%s25] sm:$0xff] %v2182
    %v2184 = vld [vmem:[#allocation13] sm:$0xff]
    %v2185 = vld [vmem:[#allocation13 + $0x8] sm:$0xff]
    %v2186 = vld [vmem:[#allocation13 + $0x10] sm:$0xff]
    %v2187 = vld [vmem:[#allocation13 + $0x18] sm:$0xff]
    %v2188 = vld [vmem:[#allocation13 + $0x20] sm:$0xff]
    %v2189 = vld [vmem:[#allocation13 + $0x28] sm:$0xff]
    %v2190 = vld [vmem:[#allocation13 + $0x30] sm:$0xff]
    %v2191 = vld [vmem:[#allocation13 + $0x38] sm:$0xff]
    %v2192 = vld [vmem:[#allocation13 + $0x40] sm:$0xff]
    %v2193 = vld [vmem:[#allocation13 + $0x48] sm:$0xff]
    %v2194 = vld [vmem:[#allocation13 + $0x50] sm:$0xff]
    %v2195 = vld [vmem:[#allocation13 + $0x58] sm:$0xff]
    %v2196 = vld [vmem:[#allocation13 + $0x60] sm:$0xff]
    %v2197 = vld [vmem:[#allocation13 + $0x68] sm:$0xff]
    %v2198 = vld [vmem:[#allocation13 + $0x70] sm:$0xff]
    %v2199 = vld [vmem:[#allocation13 + $0x78] sm:$0xff]
    %v2200 = vld [vmem:[#allocation13 + $0x80] sm:$0xff]
    %v2201 = vld [vmem:[#allocation13 + $0x88] sm:$0xff]
    %v2202 = vld [vmem:[#allocation13 + $0x90] sm:$0xff]
    %v2203 = vld [vmem:[#allocation13 + $0x98] sm:$0xff]
    %v2204 = vld [vmem:[#allocation13 + $0xa0] sm:$0xff]
    %v2205 = vld [vmem:[#allocation13 + $0xa8] sm:$0xff]
    %v2206 = vld [vmem:[#allocation13 + $0xb0] sm:$0xff]
    %v2207 = vld [vmem:[#allocation13 + $0xb8] sm:$0xff]
    %v2208 = vld [vmem:[#allocation13 + $0xc0] sm:$0xff]
    %v2209 = vld [vmem:[#allocation13 + $0xc8] sm:$0xff]
    %v2210 = vld [vmem:[#allocation13 + $0xd0] sm:$0xff]
    %v2211 = vld [vmem:[#allocation13 + $0xd8] sm:$0xff]
    %v2212 = vld [vmem:[#allocation13 + $0xe0] sm:$0xff]
    %v2213 = vld [vmem:[#allocation13 + $0xe8] sm:$0xff]
    %v2214 = vld [vmem:[#allocation13 + $0xf0] sm:$0xff]
    %v2215 = vld [vmem:[#allocation13 + $0xf8] sm:$0xff]
    %v2216 = vld [vmem:[%s17] sm:$0x1]
    %v2218 = vlaneseq
    %v2219 = vshrl.u32 %v2218, 7
    %v2220 = vsub.s32 0, %v2219
    %v2221 = vrot.slane %v2216, %v2220
    %2223 = vmatprep.subr.mxu0 0.0
    %2224 = vmatpush1.msra.mxu0 %v2184
    %2225 = vmatprep.subr.mxu0 0.0
    %2226 = vmatpush1.msra.mxu0 %v2185
    %2227 = vmatprep.subr.mxu0 0.0
    %2228 = vmatpush1.msra.mxu0 %v2186
    %2229 = vmatprep.subr.mxu0 0.0
    %2230 = vmatpush1.msra.mxu0 %v2187
    %2231 = vmatprep.subr.mxu0 0.0
    %2232 = vmatpush1.msra.mxu0 %v2188
    %2233 = vmatprep.subr.mxu0 0.0
    %2234 = vmatpush1.msra.mxu0 %v2189
    %2235 = vmatprep.subr.mxu0 0.0
    %2236 = vmatpush1.msra.mxu0 %v2190
    %2237 = vmatprep.subr.mxu0 0.0
    %2238 = vmatpush1.msra.mxu0 %v2191
    %2239 = vmatprep.subr.mxu0 0.0
    %2240 = vmatpush1.msra.mxu0 %v2192
    %2241 = vmatprep.subr.mxu0 0.0
    %2242 = vmatpush1.msra.mxu0 %v2193
    %2243 = vmatprep.subr.mxu0 0.0
    %2244 = vmatpush1.msra.mxu0 %v2194
    %2245 = vmatprep.subr.mxu0 0.0
    %2246 = vmatpush1.msra.mxu0 %v2195
    %2247 = vmatprep.subr.mxu0 0.0
    %2248 = vmatpush1.msra.mxu0 %v2196
    %2249 = vmatprep.subr.mxu0 0.0
    %2250 = vmatpush1.msra.mxu0 %v2197
    %2251 = vmatprep.subr.mxu0 0.0
    %2252 = vmatpush1.msra.mxu0 %v2198
    %2253 = vmatprep.subr.mxu0 0.0
    %2254 = vmatpush1.msra.mxu0 %v2199
    %2255 = vmatprep.subr.mxu0 0.0
    %2256 = vmatpush1.msra.mxu0 %v2200
    %2257 = vmatprep.subr.mxu0 0.0
    %2258 = vmatpush1.msra.mxu0 %v2201
    %2259 = vmatprep.subr.mxu0 0.0
    %2260 = vmatpush1.msra.mxu0 %v2202
    %2261 = vmatprep.subr.mxu0 0.0
    %2262 = vmatpush1.msra.mxu0 %v2203
    %2263 = vmatprep.subr.mxu0 0.0
    %2264 = vmatpush1.msra.mxu0 %v2204
    %2265 = vmatprep.subr.mxu0 0.0
    %2266 = vmatpush1.msra.mxu0 %v2205
    %2267 = vmatprep.subr.mxu0 0.0
    %2268 = vmatpush1.msra.mxu0 %v2206
    %2269 = vmatprep.subr.mxu0 0.0
    %2270 = vmatpush1.msra.mxu0 %v2207
    %2271 = vmatprep.subr.mxu0 0.0
    %2272 = vmatpush1.msra.mxu0 %v2208
    %2273 = vmatprep.subr.mxu0 0.0
    %2274 = vmatpush1.msra.mxu0 %v2209
    %2275 = vmatprep.subr.mxu0 0.0
    %2276 = vmatpush1.msra.mxu0 %v2210
    %2277 = vmatprep.subr.mxu0 0.0
    %2278 = vmatpush1.msra.mxu0 %v2211
    %2279 = vmatprep.subr.mxu0 0.0
    %2280 = vmatpush1.msra.mxu0 %v2212
    %2281 = vmatprep.subr.mxu0 0.0
    %2282 = vmatpush1.msra.mxu0 %v2213
    %2283 = vmatprep.subr.mxu0 0.0
    %2284 = vmatpush1.msra.mxu0 %v2214
    %2285 = vmatprep.subr.mxu0 0.0
    %2286 = vmatpush1.msra.mxu0 %v2215
    %2287 = vmatprep.mubr.f32.mxu0 %v1846
    %2288 = vmatmul.mubr.f32.gmra.mrb[0].mxu0 %v1845
    %v2289 = vpop.f32.mrb[0].mxu0
    %v2290 = vadd.f32 %v2221, %v2289
    %v2291 = vpop.f32.mrb[0].mxu0
    %2292 = vdwg.mxu0
    %v2293 = vmax.f32 %v2290, 0.0
    %v2294 = vld [vmem:[#allocation15] sm:$0xff]
    %v2295 = vld [vmem:[#allocation15 + $0x8] sm:$0xff]
    %v2296 = vld [vmem:[#allocation15 + $0x10] sm:$0xff]
    %v2297 = vld [vmem:[#allocation15 + $0x18] sm:$0xff]
    %v2298 = vld [vmem:[#allocation15 + $0x20] sm:$0xff]
    %v2299 = vld [vmem:[#allocation15 + $0x28] sm:$0xff]
    %v2300 = vld [vmem:[#allocation15 + $0x30] sm:$0xff]
    %v2301 = vld [vmem:[#allocation15 + $0x38] sm:$0xff]
    %v2302 = vld [vmem:[#allocation15 + $0x40] sm:$0xff]
    %v2303 = vld [vmem:[#allocation15 + $0x48] sm:$0xff]
    %v2304 = vld [vmem:[#allocation15 + $0x50] sm:$0xff]
    %v2305 = vld [vmem:[#allocation15 + $0x58] sm:$0xff]
    %v2306 = vld [vmem:[#allocation15 + $0x60] sm:$0xff]
    %v2307 = vld [vmem:[#allocation15 + $0x68] sm:$0xff]
    %v2308 = vld [vmem:[#allocation15 + $0x70] sm:$0xff]
    %v2309 = vld [vmem:[#allocation15 + $0x78] sm:$0xff]
    %v2310 = vld [vmem:[%s19] sm:$0x1]
    %v2312 = vlaneseq
    %v2313 = vshrl.u32 %v2312, 7
    %v2314 = vsub.s32 0, %v2313
    %v2315 = vrot.slane %v2310, %v2314
    %2317 = vmatprep.subr.mxu0 0.0
    %2318 = vmatpush1.msra.mxu0 %v2294
    %2319 = vmatprep.subr.mxu0 0.0
    %2320 = vmatpush1.msra.mxu0 %v2295
    %2321 = vmatprep.subr.mxu0 0.0
    %2322 = vmatpush1.msra.mxu0 %v2296
    %2323 = vmatprep.subr.mxu0 0.0
    %2324 = vmatpush1.msra.mxu0 %v2297
    %2325 = vmatprep.subr.mxu0 0.0
    %2326 = vmatpush1.msra.mxu0 %v2298
    %2327 = vmatprep.subr.mxu0 0.0
    %2328 = vmatpush1.msra.mxu0 %v2299
    %2329 = vmatprep.subr.mxu0 0.0
    %2330 = vmatpush1.msra.mxu0 %v2300
    %2331 = vmatprep.subr.mxu0 0.0
    %2332 = vmatpush1.msra.mxu0 %v2301
    %2333 = vmatprep.subr.mxu0 0.0
    %2334 = vmatpush1.msra.mxu0 %v2302
    %2335 = vmatprep.subr.mxu0 0.0
    %2336 = vmatpush1.msra.mxu0 %v2303
    %2337 = vmatprep.subr.mxu0 0.0
    %2338 = vmatpush1.msra.mxu0 %v2304
    %2339 = vmatprep.subr.mxu0 0.0
    %2340 = vmatpush1.msra.mxu0 %v2305
    %2341 = vmatprep.subr.mxu0 0.0
    %2342 = vmatpush1.msra.mxu0 %v2306
    %2343 = vmatprep.subr.mxu0 0.0
    %2344 = vmatpush1.msra.mxu0 %v2307
    %2345 = vmatprep.subr.mxu0 0.0
    %2346 = vmatpush1.msra.mxu0 %v2308
    %2347 = vmatprep.subr.mxu0 0.0
    %2348 = vmatpush1.msra.mxu0 %v2309
    %2349 = vmatprep.subr.mxu0 0.0
    %2350 = vmatpush1.msra.mxu0 0.0
    %2351 = vmatprep.subr.mxu0 0.0
    %2352 = vmatpush1.msra.mxu0 0.0
    %2353 = vmatprep.subr.mxu0 0.0
    %2354 = vmatpush1.msra.mxu0 0.0
    %2355 = vmatprep.subr.mxu0 0.0
    %2356 = vmatpush1.msra.mxu0 0.0
    %2357 = vmatprep.subr.mxu0 0.0
    %2358 = vmatpush1.msra.mxu0 0.0
    %2359 = vmatprep.subr.mxu0 0.0
    %2360 = vmatpush1.msra.mxu0 0.0
    %2361 = vmatprep.subr.mxu0 0.0
    %2362 = vmatpush1.msra.mxu0 0.0
    %2363 = vmatprep.subr.mxu0 0.0
    %2364 = vmatpush1.msra.mxu0 0.0
    %2365 = vmatprep.subr.mxu0 0.0
    %2366 = vmatpush1.msra.mxu0 0.0
    %2367 = vmatprep.subr.mxu0 0.0
    %2368 = vmatpush1.msra.mxu0 0.0
    %2369 = vmatprep.subr.mxu0 0.0
    %2370 = vmatpush1.msra.mxu0 0.0
    %2371 = vmatprep.subr.mxu0 0.0
    %2372 = vmatpush1.msra.mxu0 0.0
    %2373 = vmatprep.subr.mxu0 0.0
    %2374 = vmatpush1.msra.mxu0 0.0
    %2375 = vmatprep.subr.mxu0 0.0
    %2376 = vmatpush1.msra.mxu0 0.0
    %2377 = vmatprep.subr.mxu0 0.0
    %2378 = vmatpush1.msra.mxu0 0.0
    %2379 = vmatprep.subr.mxu0 0.0
    %2380 = vmatpush1.msra.mxu0 0.0
    %2381 = vmatprep.mubr.f32.mxu0 0.0
    %2382 = vmatmul.mubr.f32.gmra.mrb[0].mxu0 %v2293
    %v2383 = vpop.f32.mrb[0].mxu0
    %v2384 = vadd.f32 %v2315, %v2383
    %v2385 = vpop.f32.mrb[0].mxu0
    %2386 = vdwg.mxu0
    %v2387 = vld [vmem:[#allocation16] sm:$0xff]
    %v2388 = vld [vmem:[#allocation16 + $0x8] sm:$0xff]
    %v2389 = vld [vmem:[#allocation16 + $0x10] sm:$0xff]
    %v2390 = vld [vmem:[#allocation16 + $0x18] sm:$0xff]
    %v2391 = vld [vmem:[#allocation16 + $0x20] sm:$0xff]
    %v2392 = vld [vmem:[#allocation16 + $0x28] sm:$0xff]
    %v2393 = vld [vmem:[#allocation16 + $0x30] sm:$0xff]
    %v2394 = vld [vmem:[#allocation16 + $0x38] sm:$0xff]
    %v2395 = vld [vmem:[#allocation16 + $0x40] sm:$0xff]
    %v2396 = vld [vmem:[#allocation16 + $0x48] sm:$0xff]
    %v2397 = vld [vmem:[#allocation16 + $0x50] sm:$0xff]
    %v2398 = vld [vmem:[#allocation16 + $0x58] sm:$0xff]
    %v2399 = vld [vmem:[#allocation16 + $0x60] sm:$0xff]
    %v2400 = vld [vmem:[#allocation16 + $0x68] sm:$0xff]
    %v2401 = vld [vmem:[#allocation16 + $0x70] sm:$0xff]
    %v2402 = vld [vmem:[#allocation16 + $0x78] sm:$0xff]
    %2403 = vmatprep.subr.mxu0 0.0
    %2404 = vmatpush1.msra.mxu0 %v2387
    %2405 = vmatprep.subr.mxu0 0.0
    %2406 = vmatpush1.msra.mxu0 %v2388
    %2407 = vmatprep.subr.mxu0 0.0
    %2408 = vmatpush1.msra.mxu0 %v2389
    %2409 = vmatprep.subr.mxu0 0.0
    %2410 = vmatpush1.msra.mxu0 %v2390
    %2411 = vmatprep.subr.mxu0 0.0
    %2412 = vmatpush1.msra.mxu0 %v2391
    %2413 = vmatprep.subr.mxu0 0.0
    %2414 = vmatpush1.msra.mxu0 %v2392
    %2415 = vmatprep.subr.mxu0 0.0
    %2416 = vmatpush1.msra.mxu0 %v2393
    %2417 = vmatprep.subr.mxu0 0.0
    %2418 = vmatpush1.msra.mxu0 %v2394
    %2419 = vmatprep.subr.mxu0 0.0
    %2420 = vmatpush1.msra.mxu0 %v2395
    %2421 = vmatprep.subr.mxu0 0.0
    %2422 = vmatpush1.msra.mxu0 %v2396
    %2423 = vmatprep.subr.mxu0 0.0
    %2424 = vmatpush1.msra.mxu0 %v2397
    %2425 = vmatprep.subr.mxu0 0.0
    %2426 = vmatpush1.msra.mxu0 %v2398
    %2427 = vmatprep.subr.mxu0 0.0
    %2428 = vmatpush1.msra.mxu0 %v2399
    %2429 = vmatprep.subr.mxu0 0.0
    %2430 = vmatpush1.msra.mxu0 %v2400
    %2431 = vmatprep.subr.mxu0 0.0
    %2432 = vmatpush1.msra.mxu0 %v2401
    %2433 = vmatprep.subr.mxu0 0.0
    %2434 = vmatpush1.msra.mxu0 %v2402
    %2435 = vmatprep.subr.mxu0 0.0
    %2436 = vmatpush1.msra.mxu0 0.0
    %2437 = vmatprep.subr.mxu0 0.0
    %2438 = vmatpush1.msra.mxu0 0.0
    %2439 = vmatprep.subr.mxu0 0.0
    %2440 = vmatpush1.msra.mxu0 0.0
    %2441 = vmatprep.subr.mxu0 0.0
    %2442 = vmatpush1.msra.mxu0 0.0
    %2443 = vmatprep.subr.mxu0 0.0
    %2444 = vmatpush1.msra.mxu0 0.0
    %2445 = vmatprep.subr.mxu0 0.0
    %2446 = vmatpush1.msra.mxu0 0.0
    %2447 = vmatprep.subr.mxu0 0.0
    %2448 = vmatpush1.msra.mxu0 0.0
    %2449 = vmatprep.subr.mxu0 0.0
    %2450 = vmatpush1.msra.mxu0 0.0
    %2451 = vmatprep.subr.mxu0 0.0
    %2452 = vmatpush1.msra.mxu0 0.0
    %2453 = vmatprep.subr.mxu0 0.0
    %2454 = vmatpush1.msra.mxu0 0.0
    %2455 = vmatprep.subr.mxu0 0.0
    %2456 = vmatpush1.msra.mxu0 0.0
    %2457 = vmatprep.subr.mxu0 0.0
    %2458 = vmatpush1.msra.mxu0 0.0
    %2459 = vmatprep.subr.mxu0 0.0
    %2460 = vmatpush1.msra.mxu0 0.0
    %2461 = vmatprep.subr.mxu0 0.0
    %2462 = vmatpush1.msra.mxu0 0.0
    %2463 = vmatprep.subr.mxu0 0.0
    %2464 = vmatpush1.msra.mxu0 0.0
    %2465 = vmatprep.subr.mxu0 0.0
    %2466 = vmatpush1.msra.mxu0 0.0
    %2467 = vmatprep.mubr.f32.mxu0 0.0
    %2468 = vmatmul.mubr.f32.gmra.mrb[0].mxu0 %v2384
    %v2469 = vpop.f32.mrb[0].mxu0
    %v2470 = vadd.f32 0.0, %v2469
    %v2471 = vpop.f32.mrb[0].mxu0
    %2472 = vdwg.mxu0
    %2473 = vst [vmem:[%s23] sm:$0xff] %v2470
    // Predicated region
    $region126: #{npi_forward.1} parent=1 // pred_check
      _
    $region127: #{npi_forward.1} parent=1 // pred_check_branch
      %2475 = sbr.rel (0) target = $region129
    $region128: #{npi_forward.1} parent=1 // pred_region
      _
    $region129: #{npi_forward.1} parent=1 // pred_fallthru
      _
    // Predicated region
    $region130: #{npi_forward.1} parent=1 // pred_check
      _
    $region131: #{npi_forward.1} parent=1 // pred_check_branch
      %2477 = sbr.rel (0) target = $region133
    $region132: #{npi_forward.1} parent=1 // pred_region
      _
    $region133: #{npi_forward.1} parent=1 // pred_fallthru
      _
    // Predicated region
    $region134: #{npi_forward.1} parent=1 // pred_check
      _
    $region135: #{npi_forward.1} parent=1 // pred_check_branch
      %2479 = sbr.rel (0) target = $region137
    $region136: #{npi_forward.1} parent=1 // pred_region
      _
    $region137: #{npi_forward.1} parent=1 // pred_fallthru
      _
    // Predicated region
    $region138: #{npi_forward.1} parent=1 // pred_check
      _
    $region139: #{npi_forward.1} parent=1 // pred_check_branch
      %2481 = sbr.rel (0) target = $region141
    $region140: #{npi_forward.1} parent=1 // pred_region
      _
    $region141: #{npi_forward.1} parent=1 // pred_fallthru
      _
    // Predicated region
    $region142: #{npi_forward.1} parent=1 // pred_check
      _
    $region143: #{npi_forward.1} parent=1 // pred_check_branch
      %2483 = sbr.rel (0) target = $region145
    $region144: #{npi_forward.1} parent=1 // pred_region
      _
    $region145: #{npi_forward.1} parent=1 // pred_fallthru
      _
    // Predicated region
    $region146: #{npi_forward.1} parent=1 // pred_check
      _
    $region147: #{npi_forward.1} parent=1 // pred_check_branch
      %2485 = sbr.rel (0) target = $region149
    $region148: #{npi_forward.1} parent=1 // pred_region
      _
    $region149: #{npi_forward.1} parent=1 // pred_fallthru
      _
    // Predicated region
    $region150: #{npi_forward.1} parent=1 // pred_check
      _
    $region151: #{npi_forward.1} parent=1 // pred_check_branch
      %2487 = sbr.rel (0) target = $region153
    $region152: #{npi_forward.1} parent=1 // pred_region
      _
    $region153: #{npi_forward.1} parent=1 // pred_fallthru
      _
    // Predicated region
    $region154: #{npi_forward.1} parent=1 // pred_check
      _
    $region155: #{npi_forward.1} parent=1 // pred_check_branch
      %2489 = sbr.rel (0) target = $region157
    $region156: #{npi_forward.1} parent=1 // pred_region
      _
    $region157: #{npi_forward.1} parent=1 // pred_fallthru
      _
    // Predicated region
    $region158: #{npi_forward.1} parent=1 // pred_check
      _
    $region159: #{npi_forward.1} parent=1 // pred_check_branch
      %2491 = sbr.rel (0) target = $region161
    $region160: #{npi_forward.1} parent=1 // pred_region
      _
    $region161: #{npi_forward.1} parent=1 // pred_fallthru
      _
    // Predicated region
    $region162: #{npi_forward.1} parent=1 // pred_check
      _
    $region163: #{npi_forward.1} parent=1 // pred_check_branch
      %2493 = sbr.rel (0) target = $region165
    $region164: #{npi_forward.1} parent=1 // pred_region
      _
    $region165: #{npi_forward.1} parent=1 // pred_fallthru
      _
    %2494 = vsyncpa [#allocation3], 1
    %2495 = vsyncpa [#allocation5], 1
    %2496 = vsyncpa [#allocation8], 1
    %2497 = vsyncpa [#allocation11], 1
    %2498 = vsyncpa [#allocation14], 1
    %2499 = vsyncpa [#allocation17], 1

</llo_original>
